<compile_context>
chip_gen: v7x
topology: tpu7x:2x2x1
jax: 0.10.0
libtpu: 0.0.40
codegen_flags: <defaults>
</compile_context>

<pallas_src>
import jax
import jax.numpy as jnp
from jax.experimental import pallas as pl
from jax.experimental.pallas import tpu as pltpu


def _round_up(x, m):
    return ((x + m - 1) // m) * m


def _vanilla_classifier_kernel(uid_ref, iid_ref,              # scalar prefetch (SMEM)
                               user_tab_hbm, item_tab_hbm,    # HBM (pl.ANY)
                               wu_ref, wi_ref, wc_u_ref, wc_i_ref,
                               bu_ref, bi_ref, bc_ref,         # resident VMEM
                               out_ref,                        # (TILE_B, C_pad)
                               u_buf, i_buf, sems):            # scratch (double-buffered)
    tile_b = u_buf.shape[1]
    step = pl.program_id(0)
    n_steps = pl.num_programs(0)
    slot = step % 2

    # --- DMA row gather: HBM table rows -> VMEM slot buffer ---------------
    def start_fetch(s, sl):
        base = s * tile_b
        for r in range(tile_b):
            uidx = uid_ref[base + r]
            iidx = iid_ref[base + r]
            pltpu.make_async_copy(user_tab_hbm.at[pl.ds(uidx, 1)],
                                  u_buf.at[sl, pl.ds(r, 1)],
                                  sems.at[0, sl, r]).start()
            pltpu.make_async_copy(item_tab_hbm.at[pl.ds(iidx, 1)],
                                  i_buf.at[sl, pl.ds(r, 1)],
                                  sems.at[1, sl, r]).start()

    # Prime the pipeline on the first step only.
    @pl.when(step == 0)
    def _():
        start_fetch(0, 0)

    # Prefetch next tile's rows into the other slot while we compute this one.
    @pl.when(step + 1 < n_steps)
    def _():
        start_fetch(step + 1, 1 - slot)

    # Wait for the current slot's gathers.
    for r in range(tile_b):
        pltpu.make_async_copy(user_tab_hbm.at[pl.ds(0, 1)],
                              u_buf.at[slot, pl.ds(r, 1)],
                              sems.at[0, slot, r]).wait()
        pltpu.make_async_copy(item_tab_hbm.at[pl.ds(0, 1)],
                              i_buf.at[slot, pl.ds(r, 1)],
                              sems.at[1, slot, r]).wait()

    # --- transform_u / transform_i : Linear(D, K)  (bf16 MXU, f32 accum) ---
    user_rows = u_buf[slot].astype(jnp.bfloat16)                 # (TILE_B, D)
    item_rows = i_buf[slot].astype(jnp.bfloat16)                 # (TILE_B, D)
    u = jnp.dot(user_rows, wu_ref[...],
                preferred_element_type=jnp.float32) + bu_ref[...]   # (TILE_B, K_pad)
    it = jnp.dot(item_rows, wi_ref[...],
                 preferred_element_type=jnp.float32) + bi_ref[...]  # (TILE_B, K_pad)

    # --- classifier(concat([u, it], 1)) == u @ Wc[:,:K].T + it @ Wc[:,K:].T ---
    out = (jnp.dot(u.astype(jnp.bfloat16), wc_u_ref[...],
                   preferred_element_type=jnp.float32)
           + jnp.dot(it.astype(jnp.bfloat16), wc_i_ref[...],
                     preferred_element_type=jnp.float32)
           + bc_ref[...])                                           # (TILE_B, C_pad)
    out_ref[...] = out


def prepare_params(wu, bu, wi, bi, wc, bc):
    """One-time parameter prep (transpose, split, bf16 cast, 128-lane pad)."""
    K, D = wu.shape
    C = wc.shape[0]
    K_pad = _round_up(K, 128)
    C_pad = _round_up(C, 128)
    wu_t = jnp.zeros((D, K_pad), jnp.bfloat16).at[:, :K].set(wu.T.astype(jnp.bfloat16))
    wi_t = jnp.zeros((D, K_pad), jnp.bfloat16).at[:, :K].set(wi.T.astype(jnp.bfloat16))
    wc_u = jnp.zeros((K_pad, C_pad), jnp.bfloat16).at[:K, :C].set(
        wc[:, :K].T.astype(jnp.bfloat16))
    wc_i = jnp.zeros((K_pad, C_pad), jnp.bfloat16).at[:K, :C].set(
        wc[:, K:].T.astype(jnp.bfloat16))
    bu_p = jnp.zeros((1, K_pad), jnp.float32).at[0, :K].set(bu.astype(jnp.float32))
    bi_p = jnp.zeros((1, K_pad), jnp.float32).at[0, :K].set(bi.astype(jnp.float32))
    bc_p = jnp.zeros((1, C_pad), jnp.float32).at[0, :C].set(bc.astype(jnp.float32))
    return dict(wu_t=wu_t, wi_t=wi_t, wc_u=wc_u, wc_i=wc_i,
                bu=bu_p, bi=bi_p, bc=bc_p, k=K, num_classes=C)


def vanilla_classifier_forward(user_ids, item_ids, user_table, item_table,
                               params, *, tile_b=None):
    """user_ids/item_ids: (B,) int; tables: (n, 768) f32 (HBM resident);
    params: output of prepare_params."""
    B = int(user_ids.shape[0])
    D = int(user_table.shape[1])
    K_pad = int(params["wu_t"].shape[1])
    C_pad = int(params["wc_u"].shape[1])
    C = int(params["num_classes"])

    if tile_b is None:
        tile_b = min(32, _round_up(B, 8))   # 8-row aligned; caps unrolled DMA count
    b_pad = _round_up(B, tile_b)
    num_tiles = b_pad // tile_b

    # ids -> SMEM scalar-prefetch operands (pad with id 0, sliced off at the end)
    uid = jnp.zeros((b_pad,), jnp.int32).at[:B].set(user_ids.astype(jnp.int32))
    iid = jnp.zeros((b_pad,), jnp.int32).at[:B].set(item_ids.astype(jnp.int32))

    grid_spec = pltpu.PrefetchScalarGridSpec(
        num_scalar_prefetch=2,
        grid=(num_tiles,),
        in_specs=[
            pl.BlockSpec(memory_space=pl.ANY),                          # user table (HBM)
            pl.BlockSpec(memory_space=pl.ANY),                          # item table (HBM)
            pl.BlockSpec((D, K_pad), lambda b, uid, iid: (0, 0)),       # Wu^T (resident)
            pl.BlockSpec((D, K_pad), lambda b, uid, iid: (0, 0)),       # Wi^T
            pl.BlockSpec((K_pad, C_pad), lambda b, uid, iid: (0, 0)),   # Wc[:, :K]^T
            pl.BlockSpec((K_pad, C_pad), lambda b, uid, iid: (0, 0)),   # Wc[:, K:]^T
            pl.BlockSpec((1, K_pad), lambda b, uid, iid: (0, 0)),       # bu
            pl.BlockSpec((1, K_pad), lambda b, uid, iid: (0, 0)),       # bi
            pl.BlockSpec((1, C_pad), lambda b, uid, iid: (0, 0)),       # bc
        ],
        out_specs=pl.BlockSpec((tile_b, C_pad), lambda b, uid, iid: (b, 0)),
        scratch_shapes=[
            pltpu.VMEM((2, tile_b, D), jnp.float32),     # user rows (double-buffered)
            pltpu.VMEM((2, tile_b, D), jnp.float32),     # item rows (double-buffered)
            pltpu.SemaphoreType.DMA((2, 2, tile_b)),     # [user/item, slot, row]
        ],
    )

    flops = 4 * b_pad * D * K_pad + 4 * b_pad * K_pad * C_pad
    bytes_accessed = (2 * b_pad * D * 4                      # gathered table rows
                      + 2 * D * K_pad * 2 + 2 * K_pad * C_pad * 2   # bf16 weights
                      + 2 * K_pad * 4 + C_pad * 4            # biases
                      + b_pad * C_pad * 4)                   # output

    out = pl.pallas_call(
        _vanilla_classifier_kernel,
        grid_spec=grid_spec,
        out_shape=jax.ShapeDtypeStruct((b_pad, C_pad), jnp.float32),
        compiler_params=pltpu.CompilerParams(
            # "arbitrary": the cross-step DMA double-buffer carry requires
            # sequential grid iteration.
            dimension_semantics=("arbitrary",),
            vmem_limit_bytes=32 * 1024 * 1024,
        ),
        cost_estimate=pl.CostEstimate(flops=flops, transcendentals=0,
                                      bytes_accessed=bytes_accessed),
    )(uid, iid, user_table, item_table,
      params["wu_t"], params["wi_t"], params["wc_u"], params["wc_i"],
      params["bu"], params["bi"], params["bc"])
    return out[:B, :C]


def _reference_forward(user_ids, item_ids, user_table, item_table,
                       wu, bu, wi, bi, wc, bc):
    user_rep = user_table[user_ids]
    item_rep = item_table[item_ids]
    u = user_rep @ wu.T + bu
    it = item_rep @ wi.T + bi
    cat = jnp.concatenate([u, it], axis=1)
    return cat @ wc.T + bc


if __name__ == "__main__":
    # Small deterministic setup consistent with the module.
    B = 8            # batch
    D = 768          # bert_embedding_dim (hardcoded in the module)
    K = 64           # config['k']
    C = 4            # num_classes
    n_users = 16
    n_items = 16

    key = jax.random.PRNGKey(0)
    keys = jax.random.split(key, 10)

    user_table = jax.random.normal(keys[0], (n_users, D), jnp.float32)
    item_table = jax.random.normal(keys[1], (n_items, D), jnp.float32)
    wu = jax.random.normal(keys[2], (K, D), jnp.float32) * 0.02
    bu = jax.random.normal(keys[3], (K,), jnp.float32) * 0.02
    wi = jax.random.normal(keys[4], (K, D), jnp.float32) * 0.02
    bi = jax.random.normal(keys[5], (K,), jnp.float32) * 0.02
    wc = jax.random.normal(keys[6], (C, 2 * K), jnp.float32) * 0.02
    bc = jax.random.normal(keys[7], (C,), jnp.float32) * 0.02

    user_ids = jax.random.randint(keys[8], (B,), 0, n_users, jnp.int32)
    item_ids = jax.random.randint(keys[9], (B,), 0, n_items, jnp.int32)

    params = prepare_params(wu, bu, wi, bi, wc, bc)   # one-time prep

    out = vanilla_classifier_forward(user_ids, item_ids, user_table, item_table,
                                     params)
    out = jax.block_until_ready(out)

    ref = _reference_forward(user_ids, item_ids, user_table, item_table,
                             wu, bu, wi, bi, wc, bc)
    assert out.shape == (B, C)
    # bf16 MXU operands with f32 accumulation vs f32 reference.
    assert jnp.allclose(out, ref, atol=2e-2, rtol=2e-2), "mismatch vs reference"

    # TODO(synk): dot_product / MLP similarity branches and the .pkl loading of
    # precalculated representations are config branches not exercised here.
    print("KERNEL_OK")
</pallas_src>

<mosaic_0001>
module attributes {stable_mosaic.version = 11 : i64} {
  func.func @_vanilla_classifier_kernel(%arg0: i32, %arg1: memref<8xi32, #tpu.memory_space<smem>>, %arg2: memref<8xi32, #tpu.memory_space<smem>>, %arg3: memref<16x768xf32, #tpu.memory_space<any>>, %arg4: memref<16x768xf32, #tpu.memory_space<any>>, %arg5: memref<768x128xbf16, #tpu.memory_space<vmem>>, %arg6: memref<768x128xbf16, #tpu.memory_space<vmem>>, %arg7: memref<128x128xbf16, #tpu.memory_space<vmem>>, %arg8: memref<128x128xbf16, #tpu.memory_space<vmem>>, %arg9: memref<1x128xf32, #tpu.memory_space<vmem>>, %arg10: memref<1x128xf32, #tpu.memory_space<vmem>>, %arg11: memref<1x128xf32, #tpu.memory_space<vmem>>, %arg12: memref<8x128xf32, #tpu.memory_space<vmem>>, %arg13: memref<2x8x768xf32, #tpu.memory_space<vmem>>, %arg14: memref<2x8x768xf32, #tpu.memory_space<vmem>>, %arg15: memref<2x2x8x!tpu.dma_semaphore, #tpu.memory_space<semaphore_mem>>) attributes {dimension_semantics = [#tpu.dimension_semantics<arbitrary>], iteration_bounds = array<i64: 1>, scalar_prefetch = 2 : i64, scratch_operands = 3 : i64, tpu.core_type = #tpu.core_type<tc>, window_params = [{}, {}, {pipeline_mode = #tpu.pipeline_mode<synchronous>, transform_indices = @transform_2, window_bounds = array<i64: 768, 128>}, {pipeline_mode = #tpu.pipeline_mode<synchronous>, transform_indices = @transform_3, window_bounds = array<i64: 768, 128>}, {pipeline_mode = #tpu.pipeline_mode<synchronous>, transform_indices = @transform_4, window_bounds = array<i64: 128, 128>}, {pipeline_mode = #tpu.pipeline_mode<synchronous>, transform_indices = @transform_5, window_bounds = array<i64: 128, 128>}, {pipeline_mode = #tpu.pipeline_mode<synchronous>, transform_indices = @transform_6, window_bounds = array<i64: 1, 128>}, {pipeline_mode = #tpu.pipeline_mode<synchronous>, transform_indices = @transform_7, window_bounds = array<i64: 1, 128>}, {pipeline_mode = #tpu.pipeline_mode<synchronous>, transform_indices = @transform_8, window_bounds = array<i64: 1, 128>}, {transform_indices = @transform_9, window_bounds = array<i64: 8, 128>}]} {
    %c2_i32 = arith.constant 2 : i32
    %c0_i32 = arith.constant 0 : i32
    %0 = arith.cmpi eq, %c2_i32, %c0_i32 : i32
    %c1_i32 = arith.constant 1 : i32
    %1 = arith.select %0, %c1_i32, %c2_i32 : i32
    %2 = arith.remsi %arg0, %1 : i32
    %c0_i32_0 = arith.constant 0 : i32
    %3 = arith.cmpi ne, %2, %c0_i32_0 : i32
    %c0_i32_1 = arith.constant 0 : i32
    %4 = arith.cmpi slt, %2, %c0_i32_1 : i32
    %c0_i32_2 = arith.constant 0 : i32
    %5 = arith.cmpi slt, %1, %c0_i32_2 : i32
    %6 = arith.xori %4, %5 : i1
    %7 = arith.andi %6, %3 : i1
    %8 = arith.addi %2, %1 : i32
    %9 = arith.select %7, %8, %2 : i32
    %c0_i32_3 = arith.constant 0 : i32
    %10 = arith.cmpi eq, %arg0, %c0_i32_3 : i32
    %11 = arith.extui %10 : i1 to i32
    %c0_i32_4 = arith.constant 0 : i32
    %12 = arith.cmpi ne, %11, %c0_i32_4 : i32
    scf.if %12 {
      %c0_121 = arith.constant 0 : index
      %126 = memref.load %arg1[%c0_121] : memref<8xi32, #tpu.memory_space<smem>>
      %c0_122 = arith.constant 0 : index
      %127 = memref.load %arg2[%c0_122] : memref<8xi32, #tpu.memory_space<smem>>
      %c0_i32_123 = arith.constant 0 : i32
      %c0_i32_124 = arith.constant 0 : i32
      %c0_i32_125 = arith.constant 0 : i32
      %c0_i32_126 = arith.constant 0 : i32
      %c0_i32_127 = arith.constant 0 : i32
      %128 = tpu.memref_slice %arg3[%126, %c0_i32_127] : memref<16x768xf32, #tpu.memory_space<any>> -> memref<1x768xf32, #tpu.memory_space<any>>
      %c0_i32_128 = arith.constant 0 : i32
      %c0_i32_129 = arith.constant 0 : i32
      %129 = tpu.memref_slice %arg13[%c0_i32_123, %c0_i32_128, %c0_i32_129] : memref<2x8x768xf32, #tpu.memory_space<vmem>> -> memref<1x1x768xf32, #tpu.memory_space<vmem>>
      %130 = tpu.memref_squeeze %129 : memref<1x1x768xf32, #tpu.memory_space<vmem>> -> memref<1x768xf32, #tpu.memory_space<vmem>>
      %131 = tpu.memref_slice %arg15[%c0_i32_124, %c0_i32_125, %c0_i32_126] : memref<2x2x8x!tpu.dma_semaphore, #tpu.memory_space<semaphore_mem>> -> memref<1x1x1x!tpu.dma_semaphore, #tpu.memory_space<semaphore_mem>>
      %132 = tpu.memref_squeeze %131 : memref<1x1x1x!tpu.dma_semaphore, #tpu.memory_space<semaphore_mem>> -> memref<!tpu.dma_semaphore, #tpu.memory_space<semaphore_mem>>
      tpu.enqueue_dma source(%128 : memref<1x768xf32, #tpu.memory_space<any>>) target(%130 : memref<1x768xf32, #tpu.memory_space<vmem>>) target_semaphore(%132 : memref<!tpu.dma_semaphore, #tpu.memory_space<semaphore_mem>>)
      %c0_i32_130 = arith.constant 0 : i32
      %c1_i32_131 = arith.constant 1 : i32
      %c0_i32_132 = arith.constant 0 : i32
      %c0_i32_133 = arith.constant 0 : i32
      %c0_i32_134 = arith.constant 0 : i32
      %133 = tpu.memref_slice %arg4[%127, %c0_i32_134] : memref<16x768xf32, #tpu.memory_space<any>> -> memref<1x768xf32, #tpu.memory_space<any>>
      %c0_i32_135 = arith.constant 0 : i32
      %c0_i32_136 = arith.constant 0 : i32
      %134 = tpu.memref_slice %arg14[%c0_i32_130, %c0_i32_135, %c0_i32_136] : memref<2x8x768xf32, #tpu.memory_space<vmem>> -> memref<1x1x768xf32, #tpu.memory_space<vmem>>
      %135 = tpu.memref_squeeze %134 : memref<1x1x768xf32, #tpu.memory_space<vmem>> -> memref<1x768xf32, #tpu.memory_space<vmem>>
      %136 = tpu.memref_slice %arg15[%c1_i32_131, %c0_i32_132, %c0_i32_133] : memref<2x2x8x!tpu.dma_semaphore, #tpu.memory_space<semaphore_mem>> -> memref<1x1x1x!tpu.dma_semaphore, #tpu.memory_space<semaphore_mem>>
      %137 = tpu.memref_squeeze %136 : memref<1x1x1x!tpu.dma_semaphore, #tpu.memory_space<semaphore_mem>> -> memref<!tpu.dma_semaphore, #tpu.memory_space<semaphore_mem>>
      tpu.enqueue_dma source(%133 : memref<1x768xf32, #tpu.memory_space<any>>) target(%135 : memref<1x768xf32, #tpu.memory_space<vmem>>) target_semaphore(%137 : memref<!tpu.dma_semaphore, #tpu.memory_space<semaphore_mem>>)
      %c1 = arith.constant 1 : index
      %138 = memref.load %arg1[%c1] : memref<8xi32, #tpu.memory_space<smem>>
      %c1_137 = arith.constant 1 : index
      %139 = memref.load %arg2[%c1_137] : memref<8xi32, #tpu.memory_space<smem>>
      %c0_i32_138 = arith.constant 0 : i32
      %c0_i32_139 = arith.constant 0 : i32
      %c0_i32_140 = arith.constant 0 : i32
      %c1_i32_141 = arith.constant 1 : i32
      %c0_i32_142 = arith.constant 0 : i32
      %140 = tpu.memref_slice %arg3[%138, %c0_i32_142] : memref<16x768xf32, #tpu.memory_space<any>> -> memref<1x768xf32, #tpu.memory_space<any>>
      %c1_i32_143 = arith.constant 1 : i32
      %c0_i32_144 = arith.constant 0 : i32
      %141 = tpu.memref_slice %arg13[%c0_i32_138, %c1_i32_143, %c0_i32_144] : memref<2x8x768xf32, #tpu.memory_space<vmem>> -> memref<1x1x768xf32, #tpu.memory_space<vmem>>
      %142 = tpu.memref_squeeze %141 : memref<1x1x768xf32, #tpu.memory_space<vmem>> -> memref<1x768xf32, #tpu.memory_space<vmem>>
      %143 = tpu.memref_slice %arg15[%c0_i32_139, %c0_i32_140, %c1_i32_141] : memref<2x2x8x!tpu.dma_semaphore, #tpu.memory_space<semaphore_mem>> -> memref<1x1x1x!tpu.dma_semaphore, #tpu.memory_space<semaphore_mem>>
      %144 = tpu.memref_squeeze %143 : memref<1x1x1x!tpu.dma_semaphore, #tpu.memory_space<semaphore_mem>> -> memref<!tpu.dma_semaphore, #tpu.memory_space<semaphore_mem>>
      tpu.enqueue_dma source(%140 : memref<1x768xf32, #tpu.memory_space<any>>) target(%142 : memref<1x768xf32, #tpu.memory_space<vmem>>) target_semaphore(%144 : memref<!tpu.dma_semaphore, #tpu.memory_space<semaphore_mem>>)
      %c0_i32_145 = arith.constant 0 : i32
      %c1_i32_146 = arith.constant 1 : i32
      %c0_i32_147 = arith.constant 0 : i32
      %c1_i32_148 = arith.constant 1 : i32
      %c0_i32_149 = arith.constant 0 : i32
      %145 = tpu.memref_slice %arg4[%139, %c0_i32_149] : memref<16x768xf32, #tpu.memory_space<any>> -> memref<1x768xf32, #tpu.memory_space<any>>
      %c1_i32_150 = arith.constant 1 : i32
      %c0_i32_151 = arith.constant 0 : i32
      %146 = tpu.memref_slice %arg14[%c0_i32_145, %c1_i32_150, %c0_i32_151] : memref<2x8x768xf32, #tpu.memory_space<vmem>> -> memref<1x1x768xf32, #tpu.memory_space<vmem>>
      %147 = tpu.memref_squeeze %146 : memref<1x1x768xf32, #tpu.memory_space<vmem>> -> memref<1x768xf32, #tpu.memory_space<vmem>>
      %148 = tpu.memref_slice %arg15[%c1_i32_146, %c0_i32_147, %c1_i32_148] : memref<2x2x8x!tpu.dma_semaphore, #tpu.memory_space<semaphore_mem>> -> memref<1x1x1x!tpu.dma_semaphore, #tpu.memory_space<semaphore_mem>>
      %149 = tpu.memref_squeeze %148 : memref<1x1x1x!tpu.dma_semaphore, #tpu.memory_space<semaphore_mem>> -> memref<!tpu.dma_semaphore, #tpu.memory_space<semaphore_mem>>
      tpu.enqueue_dma source(%145 : memref<1x768xf32, #tpu.memory_space<any>>) target(%147 : memref<1x768xf32, #tpu.memory_space<vmem>>) target_semaphore(%149 : memref<!tpu.dma_semaphore, #tpu.memory_space<semaphore_mem>>)
      %c2 = arith.constant 2 : index
      %150 = memref.load %arg1[%c2] : memref<8xi32, #tpu.memory_space<smem>>
      %c2_152 = arith.constant 2 : index
      %151 = memref.load %arg2[%c2_152] : memref<8xi32, #tpu.memory_space<smem>>
      %c0_i32_153 = arith.constant 0 : i32
      %c0_i32_154 = arith.constant 0 : i32
      %c0_i32_155 = arith.constant 0 : i32
      %c2_i32_156 = arith.constant 2 : i32
      %c0_i32_157 = arith.constant 0 : i32
      %152 = tpu.memref_slice %arg3[%150, %c0_i32_157] : memref<16x768xf32, #tpu.memory_space<any>> -> memref<1x768xf32, #tpu.memory_space<any>>
      %c2_i32_158 = arith.constant 2 : i32
      %c0_i32_159 = arith.constant 0 : i32
      %153 = tpu.memref_slice %arg13[%c0_i32_153, %c2_i32_158, %c0_i32_159] : memref<2x8x768xf32, #tpu.memory_space<vmem>> -> memref<1x1x768xf32, #tpu.memory_space<vmem>>
      %154 = tpu.memref_squeeze %153 : memref<1x1x768xf32, #tpu.memory_space<vmem>> -> memref<1x768xf32, #tpu.memory_space<vmem>>
      %155 = tpu.memref_slice %arg15[%c0_i32_154, %c0_i32_155, %c2_i32_156] : memref<2x2x8x!tpu.dma_semaphore, #tpu.memory_space<semaphore_mem>> -> memref<1x1x1x!tpu.dma_semaphore, #tpu.memory_space<semaphore_mem>>
      %156 = tpu.memref_squeeze %155 : memref<1x1x1x!tpu.dma_semaphore, #tpu.memory_space<semaphore_mem>> -> memref<!tpu.dma_semaphore, #tpu.memory_space<semaphore_mem>>
      tpu.enqueue_dma source(%152 : memref<1x768xf32, #tpu.memory_space<any>>) target(%154 : memref<1x768xf32, #tpu.memory_space<vmem>>) target_semaphore(%156 : memref<!tpu.dma_semaphore, #tpu.memory_space<semaphore_mem>>)
      %c0_i32_160 = arith.constant 0 : i32
      %c1_i32_161 = arith.constant 1 : i32
      %c0_i32_162 = arith.constant 0 : i32
      %c2_i32_163 = arith.constant 2 : i32
      %c0_i32_164 = arith.constant 0 : i32
      %157 = tpu.memref_slice %arg4[%151, %c0_i32_164] : memref<16x768xf32, #tpu.memory_space<any>> -> memref<1x768xf32, #tpu.memory_space<any>>
      %c2_i32_165 = arith.constant 2 : i32
      %c0_i32_166 = arith.constant 0 : i32
      %158 = tpu.memref_slice %arg14[%c0_i32_160, %c2_i32_165, %c0_i32_166] : memref<2x8x768xf32, #tpu.memory_space<vmem>> -> memref<1x1x768xf32, #tpu.memory_space<vmem>>
      %159 = tpu.memref_squeeze %158 : memref<1x1x768xf32, #tpu.memory_space<vmem>> -> memref<1x768xf32, #tpu.memory_space<vmem>>
      %160 = tpu.memref_slice %arg15[%c1_i32_161, %c0_i32_162, %c2_i32_163] : memref<2x2x8x!tpu.dma_semaphore, #tpu.memory_space<semaphore_mem>> -> memref<1x1x1x!tpu.dma_semaphore, #tpu.memory_space<semaphore_mem>>
      %161 = tpu.memref_squeeze %160 : memref<1x1x1x!tpu.dma_semaphore, #tpu.memory_space<semaphore_mem>> -> memref<!tpu.dma_semaphore, #tpu.memory_space<semaphore_mem>>
      tpu.enqueue_dma source(%157 : memref<1x768xf32, #tpu.memory_space<any>>) target(%159 : memref<1x768xf32, #tpu.memory_space<vmem>>) target_semaphore(%161 : memref<!tpu.dma_semaphore, #tpu.memory_space<semaphore_mem>>)
      %c3 = arith.constant 3 : index
      %162 = memref.load %arg1[%c3] : memref<8xi32, #tpu.memory_space<smem>>
      %c3_167 = arith.constant 3 : index
      %163 = memref.load %arg2[%c3_167] : memref<8xi32, #tpu.memory_space<smem>>
      %c0_i32_168 = arith.constant 0 : i32
      %c0_i32_169 = arith.constant 0 : i32
      %c0_i32_170 = arith.constant 0 : i32
      %c3_i32_171 = arith.constant 3 : i32
      %c0_i32_172 = arith.constant 0 : i32
      %164 = tpu.memref_slice %arg3[%162, %c0_i32_172] : memref<16x768xf32, #tpu.memory_space<any>> -> memref<1x768xf32, #tpu.memory_space<any>>
      %c3_i32_173 = arith.constant 3 : i32
      %c0_i32_174 = arith.constant 0 : i32
      %165 = tpu.memref_slice %arg13[%c0_i32_168, %c3_i32_173, %c0_i32_174] : memref<2x8x768xf32, #tpu.memory_space<vmem>> -> memref<1x1x768xf32, #tpu.memory_space<vmem>>
      %166 = tpu.memref_squeeze %165 : memref<1x1x768xf32, #tpu.memory_space<vmem>> -> memref<1x768xf32, #tpu.memory_space<vmem>>
      %167 = tpu.memref_slice %arg15[%c0_i32_169, %c0_i32_170, %c3_i32_171] : memref<2x2x8x!tpu.dma_semaphore, #tpu.memory_space<semaphore_mem>> -> memref<1x1x1x!tpu.dma_semaphore, #tpu.memory_space<semaphore_mem>>
      %168 = tpu.memref_squeeze %167 : memref<1x1x1x!tpu.dma_semaphore, #tpu.memory_space<semaphore_mem>> -> memref<!tpu.dma_semaphore, #tpu.memory_space<semaphore_mem>>
      tpu.enqueue_dma source(%164 : memref<1x768xf32, #tpu.memory_space<any>>) target(%166 : memref<1x768xf32, #tpu.memory_space<vmem>>) target_semaphore(%168 : memref<!tpu.dma_semaphore, #tpu.memory_space<semaphore_mem>>)
      %c0_i32_175 = arith.constant 0 : i32
      %c1_i32_176 = arith.constant 1 : i32
      %c0_i32_177 = arith.constant 0 : i32
      %c3_i32_178 = arith.constant 3 : i32
      %c0_i32_179 = arith.constant 0 : i32
      %169 = tpu.memref_slice %arg4[%163, %c0_i32_179] : memref<16x768xf32, #tpu.memory_space<any>> -> memref<1x768xf32, #tpu.memory_space<any>>
      %c3_i32_180 = arith.constant 3 : i32
      %c0_i32_181 = arith.constant 0 : i32
      %170 = tpu.memref_slice %arg14[%c0_i32_175, %c3_i32_180, %c0_i32_181] : memref<2x8x768xf32, #tpu.memory_space<vmem>> -> memref<1x1x768xf32, #tpu.memory_space<vmem>>
      %171 = tpu.memref_squeeze %170 : memref<1x1x768xf32, #tpu.memory_space<vmem>> -> memref<1x768xf32, #tpu.memory_space<vmem>>
      %172 = tpu.memref_slice %arg15[%c1_i32_176, %c0_i32_177, %c3_i32_178] : memref<2x2x8x!tpu.dma_semaphore, #tpu.memory_space<semaphore_mem>> -> memref<1x1x1x!tpu.dma_semaphore, #tpu.memory_space<semaphore_mem>>
      %173 = tpu.memref_squeeze %172 : memref<1x1x1x!tpu.dma_semaphore, #tpu.memory_space<semaphore_mem>> -> memref<!tpu.dma_semaphore, #tpu.memory_space<semaphore_mem>>
      tpu.enqueue_dma source(%169 : memref<1x768xf32, #tpu.memory_space<any>>) target(%171 : memref<1x768xf32, #tpu.memory_space<vmem>>) target_semaphore(%173 : memref<!tpu.dma_semaphore, #tpu.memory_space<semaphore_mem>>)
      %c4 = arith.constant 4 : index
      %174 = memref.load %arg1[%c4] : memref<8xi32, #tpu.memory_space<smem>>
      %c4_182 = arith.constant 4 : index
      %175 = memref.load %arg2[%c4_182] : memref<8xi32, #tpu.memory_space<smem>>
      %c0_i32_183 = arith.constant 0 : i32
      %c0_i32_184 = arith.constant 0 : i32
      %c0_i32_185 = arith.constant 0 : i32
      %c4_i32_186 = arith.constant 4 : i32
      %c0_i32_187 = arith.constant 0 : i32
      %176 = tpu.memref_slice %arg3[%174, %c0_i32_187] : memref<16x768xf32, #tpu.memory_space<any>> -> memref<1x768xf32, #tpu.memory_space<any>>
      %c4_i32_188 = arith.constant 4 : i32
      %c0_i32_189 = arith.constant 0 : i32
      %177 = tpu.memref_slice %arg13[%c0_i32_183, %c4_i32_188, %c0_i32_189] : memref<2x8x768xf32, #tpu.memory_space<vmem>> -> memref<1x1x768xf32, #tpu.memory_space<vmem>>
      %178 = tpu.memref_squeeze %177 : memref<1x1x768xf32, #tpu.memory_space<vmem>> -> memref<1x768xf32, #tpu.memory_space<vmem>>
      %179 = tpu.memref_slice %arg15[%c0_i32_184, %c0_i32_185, %c4_i32_186] : memref<2x2x8x!tpu.dma_semaphore, #tpu.memory_space<semaphore_mem>> -> memref<1x1x1x!tpu.dma_semaphore, #tpu.memory_space<semaphore_mem>>
      %180 = tpu.memref_squeeze %179 : memref<1x1x1x!tpu.dma_semaphore, #tpu.memory_space<semaphore_mem>> -> memref<!tpu.dma_semaphore, #tpu.memory_space<semaphore_mem>>
      tpu.enqueue_dma source(%176 : memref<1x768xf32, #tpu.memory_space<any>>) target(%178 : memref<1x768xf32, #tpu.memory_space<vmem>>) target_semaphore(%180 : memref<!tpu.dma_semaphore, #tpu.memory_space<semaphore_mem>>)
      %c0_i32_190 = arith.constant 0 : i32
      %c1_i32_191 = arith.constant 1 : i32
      %c0_i32_192 = arith.constant 0 : i32
      %c4_i32_193 = arith.constant 4 : i32
      %c0_i32_194 = arith.constant 0 : i32
      %181 = tpu.memref_slice %arg4[%175, %c0_i32_194] : memref<16x768xf32, #tpu.memory_space<any>> -> memref<1x768xf32, #tpu.memory_space<any>>
      %c4_i32_195 = arith.constant 4 : i32
      %c0_i32_196 = arith.constant 0 : i32
      %182 = tpu.memref_slice %arg14[%c0_i32_190, %c4_i32_195, %c0_i32_196] : memref<2x8x768xf32, #tpu.memory_space<vmem>> -> memref<1x1x768xf32, #tpu.memory_space<vmem>>
      %183 = tpu.memref_squeeze %182 : memref<1x1x768xf32, #tpu.memory_space<vmem>> -> memref<1x768xf32, #tpu.memory_space<vmem>>
      %184 = tpu.memref_slice %arg15[%c1_i32_191, %c0_i32_192, %c4_i32_193] : memref<2x2x8x!tpu.dma_semaphore, #tpu.memory_space<semaphore_mem>> -> memref<1x1x1x!tpu.dma_semaphore, #tpu.memory_space<semaphore_mem>>
      %185 = tpu.memref_squeeze %184 : memref<1x1x1x!tpu.dma_semaphore, #tpu.memory_space<semaphore_mem>> -> memref<!tpu.dma_semaphore, #tpu.memory_space<semaphore_mem>>
      tpu.enqueue_dma source(%181 : memref<1x768xf32, #tpu.memory_space<any>>) target(%183 : memref<1x768xf32, #tpu.memory_space<vmem>>) target_semaphore(%185 : memref<!tpu.dma_semaphore, #tpu.memory_space<semaphore_mem>>)
      %c5 = arith.constant 5 : index
      %186 = memref.load %arg1[%c5] : memref<8xi32, #tpu.memory_space<smem>>
      %c5_197 = arith.constant 5 : index
      %187 = memref.load %arg2[%c5_197] : memref<8xi32, #tpu.memory_space<smem>>
      %c0_i32_198 = arith.constant 0 : i32
      %c0_i32_199 = arith.constant 0 : i32
      %c0_i32_200 = arith.constant 0 : i32
      %c5_i32_201 = arith.constant 5 : i32
      %c0_i32_202 = arith.constant 0 : i32
      %188 = tpu.memref_slice %arg3[%186, %c0_i32_202] : memref<16x768xf32, #tpu.memory_space<any>> -> memref<1x768xf32, #tpu.memory_space<any>>
      %c5_i32_203 = arith.constant 5 : i32
      %c0_i32_204 = arith.constant 0 : i32
      %189 = tpu.memref_slice %arg13[%c0_i32_198, %c5_i32_203, %c0_i32_204] : memref<2x8x768xf32, #tpu.memory_space<vmem>> -> memref<1x1x768xf32, #tpu.memory_space<vmem>>
      %190 = tpu.memref_squeeze %189 : memref<1x1x768xf32, #tpu.memory_space<vmem>> -> memref<1x768xf32, #tpu.memory_space<vmem>>
      %191 = tpu.memref_slice %arg15[%c0_i32_199, %c0_i32_200, %c5_i32_201] : memref<2x2x8x!tpu.dma_semaphore, #tpu.memory_space<semaphore_mem>> -> memref<1x1x1x!tpu.dma_semaphore, #tpu.memory_space<semaphore_mem>>
      %192 = tpu.memref_squeeze %191 : memref<1x1x1x!tpu.dma_semaphore, #tpu.memory_space<semaphore_mem>> -> memref<!tpu.dma_semaphore, #tpu.memory_space<semaphore_mem>>
      tpu.enqueue_dma source(%188 : memref<1x768xf32, #tpu.memory_space<any>>) target(%190 : memref<1x768xf32, #tpu.memory_space<vmem>>) target_semaphore(%192 : memref<!tpu.dma_semaphore, #tpu.memory_space<semaphore_mem>>)
      %c0_i32_205 = arith.constant 0 : i32
      %c1_i32_206 = arith.constant 1 : i32
      %c0_i32_207 = arith.constant 0 : i32
      %c5_i32_208 = arith.constant 5 : i32
      %c0_i32_209 = arith.constant 0 : i32
      %193 = tpu.memref_slice %arg4[%187, %c0_i32_209] : memref<16x768xf32, #tpu.memory_space<any>> -> memref<1x768xf32, #tpu.memory_space<any>>
      %c5_i32_210 = arith.constant 5 : i32
      %c0_i32_211 = arith.constant 0 : i32
      %194 = tpu.memref_slice %arg14[%c0_i32_205, %c5_i32_210, %c0_i32_211] : memref<2x8x768xf32, #tpu.memory_space<vmem>> -> memref<1x1x768xf32, #tpu.memory_space<vmem>>
      %195 = tpu.memref_squeeze %194 : memref<1x1x768xf32, #tpu.memory_space<vmem>> -> memref<1x768xf32, #tpu.memory_space<vmem>>
      %196 = tpu.memref_slice %arg15[%c1_i32_206, %c0_i32_207, %c5_i32_208] : memref<2x2x8x!tpu.dma_semaphore, #tpu.memory_space<semaphore_mem>> -> memref<1x1x1x!tpu.dma_semaphore, #tpu.memory_space<semaphore_mem>>
      %197 = tpu.memref_squeeze %196 : memref<1x1x1x!tpu.dma_semaphore, #tpu.memory_space<semaphore_mem>> -> memref<!tpu.dma_semaphore, #tpu.memory_space<semaphore_mem>>
      tpu.enqueue_dma source(%193 : memref<1x768xf32, #tpu.memory_space<any>>) target(%195 : memref<1x768xf32, #tpu.memory_space<vmem>>) target_semaphore(%197 : memref<!tpu.dma_semaphore, #tpu.memory_space<semaphore_mem>>)
      %c6 = arith.constant 6 : index
      %198 = memref.load %arg1[%c6] : memref<8xi32, #tpu.memory_space<smem>>
      %c6_212 = arith.constant 6 : index
      %199 = memref.load %arg2[%c6_212] : memref<8xi32, #tpu.memory_space<smem>>
      %c0_i32_213 = arith.constant 0 : i32
      %c0_i32_214 = arith.constant 0 : i32
      %c0_i32_215 = arith.constant 0 : i32
      %c6_i32_216 = arith.constant 6 : i32
      %c0_i32_217 = arith.constant 0 : i32
      %200 = tpu.memref_slice %arg3[%198, %c0_i32_217] : memref<16x768xf32, #tpu.memory_space<any>> -> memref<1x768xf32, #tpu.memory_space<any>>
      %c6_i32_218 = arith.constant 6 : i32
      %c0_i32_219 = arith.constant 0 : i32
      %201 = tpu.memref_slice %arg13[%c0_i32_213, %c6_i32_218, %c0_i32_219] : memref<2x8x768xf32, #tpu.memory_space<vmem>> -> memref<1x1x768xf32, #tpu.memory_space<vmem>>
      %202 = tpu.memref_squeeze %201 : memref<1x1x768xf32, #tpu.memory_space<vmem>> -> memref<1x768xf32, #tpu.memory_space<vmem>>
      %203 = tpu.memref_slice %arg15[%c0_i32_214, %c0_i32_215, %c6_i32_216] : memref<2x2x8x!tpu.dma_semaphore, #tpu.memory_space<semaphore_mem>> -> memref<1x1x1x!tpu.dma_semaphore, #tpu.memory_space<semaphore_mem>>
      %204 = tpu.memref_squeeze %203 : memref<1x1x1x!tpu.dma_semaphore, #tpu.memory_space<semaphore_mem>> -> memref<!tpu.dma_semaphore, #tpu.memory_space<semaphore_mem>>
      tpu.enqueue_dma source(%200 : memref<1x768xf32, #tpu.memory_space<any>>) target(%202 : memref<1x768xf32, #tpu.memory_space<vmem>>) target_semaphore(%204 : memref<!tpu.dma_semaphore, #tpu.memory_space<semaphore_mem>>)
      %c0_i32_220 = arith.constant 0 : i32
      %c1_i32_221 = arith.constant 1 : i32
      %c0_i32_222 = arith.constant 0 : i32
      %c6_i32_223 = arith.constant 6 : i32
      %c0_i32_224 = arith.constant 0 : i32
      %205 = tpu.memref_slice %arg4[%199, %c0_i32_224] : memref<16x768xf32, #tpu.memory_space<any>> -> memref<1x768xf32, #tpu.memory_space<any>>
      %c6_i32_225 = arith.constant 6 : i32
      %c0_i32_226 = arith.constant 0 : i32
      %206 = tpu.memref_slice %arg14[%c0_i32_220, %c6_i32_225, %c0_i32_226] : memref<2x8x768xf32, #tpu.memory_space<vmem>> -> memref<1x1x768xf32, #tpu.memory_space<vmem>>
      %207 = tpu.memref_squeeze %206 : memref<1x1x768xf32, #tpu.memory_space<vmem>> -> memref<1x768xf32, #tpu.memory_space<vmem>>
      %208 = tpu.memref_slice %arg15[%c1_i32_221, %c0_i32_222, %c6_i32_223] : memref<2x2x8x!tpu.dma_semaphore, #tpu.memory_space<semaphore_mem>> -> memref<1x1x1x!tpu.dma_semaphore, #tpu.memory_space<semaphore_mem>>
      %209 = tpu.memref_squeeze %208 : memref<1x1x1x!tpu.dma_semaphore, #tpu.memory_space<semaphore_mem>> -> memref<!tpu.dma_semaphore, #tpu.memory_space<semaphore_mem>>
      tpu.enqueue_dma source(%205 : memref<1x768xf32, #tpu.memory_space<any>>) target(%207 : memref<1x768xf32, #tpu.memory_space<vmem>>) target_semaphore(%209 : memref<!tpu.dma_semaphore, #tpu.memory_space<semaphore_mem>>)
      %c7 = arith.constant 7 : index
      %210 = memref.load %arg1[%c7] : memref<8xi32, #tpu.memory_space<smem>>
      %c7_227 = arith.constant 7 : index
      %211 = memref.load %arg2[%c7_227] : memref<8xi32, #tpu.memory_space<smem>>
      %c0_i32_228 = arith.constant 0 : i32
      %c0_i32_229 = arith.constant 0 : i32
      %c0_i32_230 = arith.constant 0 : i32
      %c7_i32_231 = arith.constant 7 : i32
      %c0_i32_232 = arith.constant 0 : i32
      %212 = tpu.memref_slice %arg3[%210, %c0_i32_232] : memref<16x768xf32, #tpu.memory_space<any>> -> memref<1x768xf32, #tpu.memory_space<any>>
      %c7_i32_233 = arith.constant 7 : i32
      %c0_i32_234 = arith.constant 0 : i32
      %213 = tpu.memref_slice %arg13[%c0_i32_228, %c7_i32_233, %c0_i32_234] : memref<2x8x768xf32, #tpu.memory_space<vmem>> -> memref<1x1x768xf32, #tpu.memory_space<vmem>>
      %214 = tpu.memref_squeeze %213 : memref<1x1x768xf32, #tpu.memory_space<vmem>> -> memref<1x768xf32, #tpu.memory_space<vmem>>
      %215 = tpu.memref_slice %arg15[%c0_i32_229, %c0_i32_230, %c7_i32_231] : memref<2x2x8x!tpu.dma_semaphore, #tpu.memory_space<semaphore_mem>> -> memref<1x1x1x!tpu.dma_semaphore, #tpu.memory_space<semaphore_mem>>
      %216 = tpu.memref_squeeze %215 : memref<1x1x1x!tpu.dma_semaphore, #tpu.memory_space<semaphore_mem>> -> memref<!tpu.dma_semaphore, #tpu.memory_space<semaphore_mem>>
      tpu.enqueue_dma source(%212 : memref<1x768xf32, #tpu.memory_space<any>>) target(%214 : memref<1x768xf32, #tpu.memory_space<vmem>>) target_semaphore(%216 : memref<!tpu.dma_semaphore, #tpu.memory_space<semaphore_mem>>)
      %c0_i32_235 = arith.constant 0 : i32
      %c1_i32_236 = arith.constant 1 : i32
      %c0_i32_237 = arith.constant 0 : i32
      %c7_i32_238 = arith.constant 7 : i32
      %c0_i32_239 = arith.constant 0 : i32
      %217 = tpu.memref_slice %arg4[%211, %c0_i32_239] : memref<16x768xf32, #tpu.memory_space<any>> -> memref<1x768xf32, #tpu.memory_space<any>>
      %c7_i32_240 = arith.constant 7 : i32
      %c0_i32_241 = arith.constant 0 : i32
      %218 = tpu.memref_slice %arg14[%c0_i32_235, %c7_i32_240, %c0_i32_241] : memref<2x8x768xf32, #tpu.memory_space<vmem>> -> memref<1x1x768xf32, #tpu.memory_space<vmem>>
      %219 = tpu.memref_squeeze %218 : memref<1x1x768xf32, #tpu.memory_space<vmem>> -> memref<1x768xf32, #tpu.memory_space<vmem>>
      %220 = tpu.memref_slice %arg15[%c1_i32_236, %c0_i32_237, %c7_i32_238] : memref<2x2x8x!tpu.dma_semaphore, #tpu.memory_space<semaphore_mem>> -> memref<1x1x1x!tpu.dma_semaphore, #tpu.memory_space<semaphore_mem>>
      %221 = tpu.memref_squeeze %220 : memref<1x1x1x!tpu.dma_semaphore, #tpu.memory_space<semaphore_mem>> -> memref<!tpu.dma_semaphore, #tpu.memory_space<semaphore_mem>>
      tpu.enqueue_dma source(%217 : memref<1x768xf32, #tpu.memory_space<any>>) target(%219 : memref<1x768xf32, #tpu.memory_space<vmem>>) target_semaphore(%221 : memref<!tpu.dma_semaphore, #tpu.memory_space<semaphore_mem>>)
    } else {
    }
    %c1_i32_5 = arith.constant 1 : i32
    %13 = arith.addi %arg0, %c1_i32_5 : i32
    %c1_i32_6 = arith.constant 1 : i32
    %14 = arith.cmpi slt, %13, %c1_i32_6 : i32
    %15 = arith.extui %14 : i1 to i32
    %c0_i32_7 = arith.constant 0 : i32
    %16 = arith.cmpi ne, %15, %c0_i32_7 : i32
    scf.if %16 {
      %c1_i32_121 = arith.constant 1 : i32
      %126 = arith.addi %arg0, %c1_i32_121 : i32
      %c1_i32_122 = arith.constant 1 : i32
      %127 = arith.subi %c1_i32_122, %9 : i32
      %c8_i32 = arith.constant 8 : i32
      %128 = arith.muli %126, %c8_i32 : i32
      %c0_i32_123 = arith.constant 0 : i32
      %129 = arith.addi %128, %c0_i32_123 : i32
      %130 = arith.index_cast %129 : i32 to index
      %131 = memref.load %arg1[%130] : memref<8xi32, #tpu.memory_space<smem>>
      %c0_i32_124 = arith.constant 0 : i32
      %132 = arith.addi %128, %c0_i32_124 : i32
      %133 = arith.index_cast %132 : i32 to index
      %134 = memref.load %arg2[%133] : memref<8xi32, #tpu.memory_space<smem>>
      %c0_i32_125 = arith.constant 0 : i32
      %c0_i32_126 = arith.constant 0 : i32
      %c0_i32_127 = arith.constant 0 : i32
      %135 = tpu.memref_slice %arg3[%131, %c0_i32_127] : memref<16x768xf32, #tpu.memory_space<any>> -> memref<1x768xf32, #tpu.memory_space<any>>
      %c0_i32_128 = arith.constant 0 : i32
      %c0_i32_129 = arith.constant 0 : i32
      %136 = tpu.memref_slice %arg13[%127, %c0_i32_128, %c0_i32_129] : memref<2x8x768xf32, #tpu.memory_space<vmem>> -> memref<1x1x768xf32, #tpu.memory_space<vmem>>
      %137 = tpu.memref_squeeze %136 : memref<1x1x768xf32, #tpu.memory_space<vmem>> -> memref<1x768xf32, #tpu.memory_space<vmem>>
      %138 = tpu.memref_slice %arg15[%c0_i32_125, %127, %c0_i32_126] : memref<2x2x8x!tpu.dma_semaphore, #tpu.memory_space<semaphore_mem>> -> memref<1x1x1x!tpu.dma_semaphore, #tpu.memory_space<semaphore_mem>>
      %139 = tpu.memref_squeeze %138 : memref<1x1x1x!tpu.dma_semaphore, #tpu.memory_space<semaphore_mem>> -> memref<!tpu.dma_semaphore, #tpu.memory_space<semaphore_mem>>
      tpu.enqueue_dma source(%135 : memref<1x768xf32, #tpu.memory_space<any>>) target(%137 : memref<1x768xf32, #tpu.memory_space<vmem>>) target_semaphore(%139 : memref<!tpu.dma_semaphore, #tpu.memory_space<semaphore_mem>>)
      %c1_i32_130 = arith.constant 1 : i32
      %c0_i32_131 = arith.constant 0 : i32
      %c0_i32_132 = arith.constant 0 : i32
      %140 = tpu.memref_slice %arg4[%134, %c0_i32_132] : memref<16x768xf32, #tpu.memory_space<any>> -> memref<1x768xf32, #tpu.memory_space<any>>
      %c0_i32_133 = arith.constant 0 : i32
      %c0_i32_134 = arith.constant 0 : i32
      %141 = tpu.memref_slice %arg14[%127, %c0_i32_133, %c0_i32_134] : memref<2x8x768xf32, #tpu.memory_space<vmem>> -> memref<1x1x768xf32, #tpu.memory_space<vmem>>
      %142 = tpu.memref_squeeze %141 : memref<1x1x768xf32, #tpu.memory_space<vmem>> -> memref<1x768xf32, #tpu.memory_space<vmem>>
      %143 = tpu.memref_slice %arg15[%c1_i32_130, %127, %c0_i32_131] : memref<2x2x8x!tpu.dma_semaphore, #tpu.memory_space<semaphore_mem>> -> memref<1x1x1x!tpu.dma_semaphore, #tpu.memory_space<semaphore_mem>>
      %144 = tpu.memref_squeeze %143 : memref<1x1x1x!tpu.dma_semaphore, #tpu.memory_space<semaphore_mem>> -> memref<!tpu.dma_semaphore, #tpu.memory_space<semaphore_mem>>
      tpu.enqueue_dma source(%140 : memref<1x768xf32, #tpu.memory_space<any>>) target(%142 : memref<1x768xf32, #tpu.memory_space<vmem>>) target_semaphore(%144 : memref<!tpu.dma_semaphore, #tpu.memory_space<semaphore_mem>>)
      %c1_i32_135 = arith.constant 1 : i32
      %145 = arith.addi %128, %c1_i32_135 : i32
      %146 = arith.index_cast %145 : i32 to index
      %147 = memref.load %arg1[%146] : memref<8xi32, #tpu.memory_space<smem>>
      %c1_i32_136 = arith.constant 1 : i32
      %148 = arith.addi %128, %c1_i32_136 : i32
      %149 = arith.index_cast %148 : i32 to index
      %150 = memref.load %arg2[%149] : memref<8xi32, #tpu.memory_space<smem>>
      %c0_i32_137 = arith.constant 0 : i32
      %c1_i32_138 = arith.constant 1 : i32
      %c0_i32_139 = arith.constant 0 : i32
      %151 = tpu.memref_slice %arg3[%147, %c0_i32_139] : memref<16x768xf32, #tpu.memory_space<any>> -> memref<1x768xf32, #tpu.memory_space<any>>
      %c1_i32_140 = arith.constant 1 : i32
      %c0_i32_141 = arith.constant 0 : i32
      %152 = tpu.memref_slice %arg13[%127, %c1_i32_140, %c0_i32_141] : memref<2x8x768xf32, #tpu.memory_space<vmem>> -> memref<1x1x768xf32, #tpu.memory_space<vmem>>
      %153 = tpu.memref_squeeze %152 : memref<1x1x768xf32, #tpu.memory_space<vmem>> -> memref<1x768xf32, #tpu.memory_space<vmem>>
      %154 = tpu.memref_slice %arg15[%c0_i32_137, %127, %c1_i32_138] : memref<2x2x8x!tpu.dma_semaphore, #tpu.memory_space<semaphore_mem>> -> memref<1x1x1x!tpu.dma_semaphore, #tpu.memory_space<semaphore_mem>>
      %155 = tpu.memref_squeeze %154 : memref<1x1x1x!tpu.dma_semaphore, #tpu.memory_space<semaphore_mem>> -> memref<!tpu.dma_semaphore, #tpu.memory_space<semaphore_mem>>
      tpu.enqueue_dma source(%151 : memref<1x768xf32, #tpu.memory_space<any>>) target(%153 : memref<1x768xf32, #tpu.memory_space<vmem>>) target_semaphore(%155 : memref<!tpu.dma_semaphore, #tpu.memory_space<semaphore_mem>>)
      %c1_i32_142 = arith.constant 1 : i32
      %c1_i32_143 = arith.constant 1 : i32
      %c0_i32_144 = arith.constant 0 : i32
      %156 = tpu.memref_slice %arg4[%150, %c0_i32_144] : memref<16x768xf32, #tpu.memory_space<any>> -> memref<1x768xf32, #tpu.memory_space<any>>
      %c1_i32_145 = arith.constant 1 : i32
      %c0_i32_146 = arith.constant 0 : i32
      %157 = tpu.memref_slice %arg14[%127, %c1_i32_145, %c0_i32_146] : memref<2x8x768xf32, #tpu.memory_space<vmem>> -> memref<1x1x768xf32, #tpu.memory_space<vmem>>
      %158 = tpu.memref_squeeze %157 : memref<1x1x768xf32, #tpu.memory_space<vmem>> -> memref<1x768xf32, #tpu.memory_space<vmem>>
      %159 = tpu.memref_slice %arg15[%c1_i32_142, %127, %c1_i32_143] : memref<2x2x8x!tpu.dma_semaphore, #tpu.memory_space<semaphore_mem>> -> memref<1x1x1x!tpu.dma_semaphore, #tpu.memory_space<semaphore_mem>>
      %160 = tpu.memref_squeeze %159 : memref<1x1x1x!tpu.dma_semaphore, #tpu.memory_space<semaphore_mem>> -> memref<!tpu.dma_semaphore, #tpu.memory_space<semaphore_mem>>
      tpu.enqueue_dma source(%156 : memref<1x768xf32, #tpu.memory_space<any>>) target(%158 : memref<1x768xf32, #tpu.memory_space<vmem>>) target_semaphore(%160 : memref<!tpu.dma_semaphore, #tpu.memory_space<semaphore_mem>>)
      %c2_i32_147 = arith.constant 2 : i32
      %161 = arith.addi %128, %c2_i32_147 : i32
      %162 = arith.index_cast %161 : i32 to index
      %163 = memref.load %arg1[%162] : memref<8xi32, #tpu.memory_space<smem>>
      %c2_i32_148 = arith.constant 2 : i32
      %164 = arith.addi %128, %c2_i32_148 : i32
      %165 = arith.index_cast %164 : i32 to index
      %166 = memref.load %arg2[%165] : memref<8xi32, #tpu.memory_space<smem>>
      %c0_i32_149 = arith.constant 0 : i32
      %c2_i32_150 = arith.constant 2 : i32
      %c0_i32_151 = arith.constant 0 : i32
      %167 = tpu.memref_slice %arg3[%163, %c0_i32_151] : memref<16x768xf32, #tpu.memory_space<any>> -> memref<1x768xf32, #tpu.memory_space<any>>
      %c2_i32_152 = arith.constant 2 : i32
      %c0_i32_153 = arith.constant 0 : i32
      %168 = tpu.memref_slice %arg13[%127, %c2_i32_152, %c0_i32_153] : memref<2x8x768xf32, #tpu.memory_space<vmem>> -> memref<1x1x768xf32, #tpu.memory_space<vmem>>
      %169 = tpu.memref_squeeze %168 : memref<1x1x768xf32, #tpu.memory_space<vmem>> -> memref<1x768xf32, #tpu.memory_space<vmem>>
      %170 = tpu.memref_slice %arg15[%c0_i32_149, %127, %c2_i32_150] : memref<2x2x8x!tpu.dma_semaphore, #tpu.memory_space<semaphore_mem>> -> memref<1x1x1x!tpu.dma_semaphore, #tpu.memory_space<semaphore_mem>>
      %171 = tpu.memref_squeeze %170 : memref<1x1x1x!tpu.dma_semaphore, #tpu.memory_space<semaphore_mem>> -> memref<!tpu.dma_semaphore, #tpu.memory_space<semaphore_mem>>
      tpu.enqueue_dma source(%167 : memref<1x768xf32, #tpu.memory_space<any>>) target(%169 : memref<1x768xf32, #tpu.memory_space<vmem>>) target_semaphore(%171 : memref<!tpu.dma_semaphore, #tpu.memory_space<semaphore_mem>>)
      %c1_i32_154 = arith.constant 1 : i32
      %c2_i32_155 = arith.constant 2 : i32
      %c0_i32_156 = arith.constant 0 : i32
      %172 = tpu.memref_slice %arg4[%166, %c0_i32_156] : memref<16x768xf32, #tpu.memory_space<any>> -> memref<1x768xf32, #tpu.memory_space<any>>
      %c2_i32_157 = arith.constant 2 : i32
      %c0_i32_158 = arith.constant 0 : i32
      %173 = tpu.memref_slice %arg14[%127, %c2_i32_157, %c0_i32_158] : memref<2x8x768xf32, #tpu.memory_space<vmem>> -> memref<1x1x768xf32, #tpu.memory_space<vmem>>
      %174 = tpu.memref_squeeze %173 : memref<1x1x768xf32, #tpu.memory_space<vmem>> -> memref<1x768xf32, #tpu.memory_space<vmem>>
      %175 = tpu.memref_slice %arg15[%c1_i32_154, %127, %c2_i32_155] : memref<2x2x8x!tpu.dma_semaphore, #tpu.memory_space<semaphore_mem>> -> memref<1x1x1x!tpu.dma_semaphore, #tpu.memory_space<semaphore_mem>>
      %176 = tpu.memref_squeeze %175 : memref<1x1x1x!tpu.dma_semaphore, #tpu.memory_space<semaphore_mem>> -> memref<!tpu.dma_semaphore, #tpu.memory_space<semaphore_mem>>
      tpu.enqueue_dma source(%172 : memref<1x768xf32, #tpu.memory_space<any>>) target(%174 : memref<1x768xf32, #tpu.memory_space<vmem>>) target_semaphore(%176 : memref<!tpu.dma_semaphore, #tpu.memory_space<semaphore_mem>>)
      %c3_i32_159 = arith.constant 3 : i32
      %177 = arith.addi %128, %c3_i32_159 : i32
      %178 = arith.index_cast %177 : i32 to index
      %179 = memref.load %arg1[%178] : memref<8xi32, #tpu.memory_space<smem>>
      %c3_i32_160 = arith.constant 3 : i32
      %180 = arith.addi %128, %c3_i32_160 : i32
      %181 = arith.index_cast %180 : i32 to index
      %182 = memref.load %arg2[%181] : memref<8xi32, #tpu.memory_space<smem>>
      %c0_i32_161 = arith.constant 0 : i32
      %c3_i32_162 = arith.constant 3 : i32
      %c0_i32_163 = arith.constant 0 : i32
      %183 = tpu.memref_slice %arg3[%179, %c0_i32_163] : memref<16x768xf32, #tpu.memory_space<any>> -> memref<1x768xf32, #tpu.memory_space<any>>
      %c3_i32_164 = arith.constant 3 : i32
      %c0_i32_165 = arith.constant 0 : i32
      %184 = tpu.memref_slice %arg13[%127, %c3_i32_164, %c0_i32_165] : memref<2x8x768xf32, #tpu.memory_space<vmem>> -> memref<1x1x768xf32, #tpu.memory_space<vmem>>
      %185 = tpu.memref_squeeze %184 : memref<1x1x768xf32, #tpu.memory_space<vmem>> -> memref<1x768xf32, #tpu.memory_space<vmem>>
      %186 = tpu.memref_slice %arg15[%c0_i32_161, %127, %c3_i32_162] : memref<2x2x8x!tpu.dma_semaphore, #tpu.memory_space<semaphore_mem>> -> memref<1x1x1x!tpu.dma_semaphore, #tpu.memory_space<semaphore_mem>>
      %187 = tpu.memref_squeeze %186 : memref<1x1x1x!tpu.dma_semaphore, #tpu.memory_space<semaphore_mem>> -> memref<!tpu.dma_semaphore, #tpu.memory_space<semaphore_mem>>
      tpu.enqueue_dma source(%183 : memref<1x768xf32, #tpu.memory_space<any>>) target(%185 : memref<1x768xf32, #tpu.memory_space<vmem>>) target_semaphore(%187 : memref<!tpu.dma_semaphore, #tpu.memory_space<semaphore_mem>>)
      %c1_i32_166 = arith.constant 1 : i32
      %c3_i32_167 = arith.constant 3 : i32
      %c0_i32_168 = arith.constant 0 : i32
      %188 = tpu.memref_slice %arg4[%182, %c0_i32_168] : memref<16x768xf32, #tpu.memory_space<any>> -> memref<1x768xf32, #tpu.memory_space<any>>
      %c3_i32_169 = arith.constant 3 : i32
      %c0_i32_170 = arith.constant 0 : i32
      %189 = tpu.memref_slice %arg14[%127, %c3_i32_169, %c0_i32_170] : memref<2x8x768xf32, #tpu.memory_space<vmem>> -> memref<1x1x768xf32, #tpu.memory_space<vmem>>
      %190 = tpu.memref_squeeze %189 : memref<1x1x768xf32, #tpu.memory_space<vmem>> -> memref<1x768xf32, #tpu.memory_space<vmem>>
      %191 = tpu.memref_slice %arg15[%c1_i32_166, %127, %c3_i32_167] : memref<2x2x8x!tpu.dma_semaphore, #tpu.memory_space<semaphore_mem>> -> memref<1x1x1x!tpu.dma_semaphore, #tpu.memory_space<semaphore_mem>>
      %192 = tpu.memref_squeeze %191 : memref<1x1x1x!tpu.dma_semaphore, #tpu.memory_space<semaphore_mem>> -> memref<!tpu.dma_semaphore, #tpu.memory_space<semaphore_mem>>
      tpu.enqueue_dma source(%188 : memref<1x768xf32, #tpu.memory_space<any>>) target(%190 : memref<1x768xf32, #tpu.memory_space<vmem>>) target_semaphore(%192 : memref<!tpu.dma_semaphore, #tpu.memory_space<semaphore_mem>>)
      %c4_i32_171 = arith.constant 4 : i32
      %193 = arith.addi %128, %c4_i32_171 : i32
      %194 = arith.index_cast %193 : i32 to index
      %195 = memref.load %arg1[%194] : memref<8xi32, #tpu.memory_space<smem>>
      %c4_i32_172 = arith.constant 4 : i32
      %196 = arith.addi %128, %c4_i32_172 : i32
      %197 = arith.index_cast %196 : i32 to index
      %198 = memref.load %arg2[%197] : memref<8xi32, #tpu.memory_space<smem>>
      %c0_i32_173 = arith.constant 0 : i32
      %c4_i32_174 = arith.constant 4 : i32
      %c0_i32_175 = arith.constant 0 : i32
      %199 = tpu.memref_slice %arg3[%195, %c0_i32_175] : memref<16x768xf32, #tpu.memory_space<any>> -> memref<1x768xf32, #tpu.memory_space<any>>
      %c4_i32_176 = arith.constant 4 : i32
      %c0_i32_177 = arith.constant 0 : i32
      %200 = tpu.memref_slice %arg13[%127, %c4_i32_176, %c0_i32_177] : memref<2x8x768xf32, #tpu.memory_space<vmem>> -> memref<1x1x768xf32, #tpu.memory_space<vmem>>
      %201 = tpu.memref_squeeze %200 : memref<1x1x768xf32, #tpu.memory_space<vmem>> -> memref<1x768xf32, #tpu.memory_space<vmem>>
      %202 = tpu.memref_slice %arg15[%c0_i32_173, %127, %c4_i32_174] : memref<2x2x8x!tpu.dma_semaphore, #tpu.memory_space<semaphore_mem>> -> memref<1x1x1x!tpu.dma_semaphore, #tpu.memory_space<semaphore_mem>>
      %203 = tpu.memref_squeeze %202 : memref<1x1x1x!tpu.dma_semaphore, #tpu.memory_space<semaphore_mem>> -> memref<!tpu.dma_semaphore, #tpu.memory_space<semaphore_mem>>
      tpu.enqueue_dma source(%199 : memref<1x768xf32, #tpu.memory_space<any>>) target(%201 : memref<1x768xf32, #tpu.memory_space<vmem>>) target_semaphore(%203 : memref<!tpu.dma_semaphore, #tpu.memory_space<semaphore_mem>>)
      %c1_i32_178 = arith.constant 1 : i32
      %c4_i32_179 = arith.constant 4 : i32
      %c0_i32_180 = arith.constant 0 : i32
      %204 = tpu.memref_slice %arg4[%198, %c0_i32_180] : memref<16x768xf32, #tpu.memory_space<any>> -> memref<1x768xf32, #tpu.memory_space<any>>
      %c4_i32_181 = arith.constant 4 : i32
      %c0_i32_182 = arith.constant 0 : i32
      %205 = tpu.memref_slice %arg14[%127, %c4_i32_181, %c0_i32_182] : memref<2x8x768xf32, #tpu.memory_space<vmem>> -> memref<1x1x768xf32, #tpu.memory_space<vmem>>
      %206 = tpu.memref_squeeze %205 : memref<1x1x768xf32, #tpu.memory_space<vmem>> -> memref<1x768xf32, #tpu.memory_space<vmem>>
      %207 = tpu.memref_slice %arg15[%c1_i32_178, %127, %c4_i32_179] : memref<2x2x8x!tpu.dma_semaphore, #tpu.memory_space<semaphore_mem>> -> memref<1x1x1x!tpu.dma_semaphore, #tpu.memory_space<semaphore_mem>>
      %208 = tpu.memref_squeeze %207 : memref<1x1x1x!tpu.dma_semaphore, #tpu.memory_space<semaphore_mem>> -> memref<!tpu.dma_semaphore, #tpu.memory_space<semaphore_mem>>
      tpu.enqueue_dma source(%204 : memref<1x768xf32, #tpu.memory_space<any>>) target(%206 : memref<1x768xf32, #tpu.memory_space<vmem>>) target_semaphore(%208 : memref<!tpu.dma_semaphore, #tpu.memory_space<semaphore_mem>>)
      %c5_i32_183 = arith.constant 5 : i32
      %209 = arith.addi %128, %c5_i32_183 : i32
      %210 = arith.index_cast %209 : i32 to index
      %211 = memref.load %arg1[%210] : memref<8xi32, #tpu.memory_space<smem>>
      %c5_i32_184 = arith.constant 5 : i32
      %212 = arith.addi %128, %c5_i32_184 : i32
      %213 = arith.index_cast %212 : i32 to index
      %214 = memref.load %arg2[%213] : memref<8xi32, #tpu.memory_space<smem>>
      %c0_i32_185 = arith.constant 0 : i32
      %c5_i32_186 = arith.constant 5 : i32
      %c0_i32_187 = arith.constant 0 : i32
      %215 = tpu.memref_slice %arg3[%211, %c0_i32_187] : memref<16x768xf32, #tpu.memory_space<any>> -> memref<1x768xf32, #tpu.memory_space<any>>
      %c5_i32_188 = arith.constant 5 : i32
      %c0_i32_189 = arith.constant 0 : i32
      %216 = tpu.memref_slice %arg13[%127, %c5_i32_188, %c0_i32_189] : memref<2x8x768xf32, #tpu.memory_space<vmem>> -> memref<1x1x768xf32, #tpu.memory_space<vmem>>
      %217 = tpu.memref_squeeze %216 : memref<1x1x768xf32, #tpu.memory_space<vmem>> -> memref<1x768xf32, #tpu.memory_space<vmem>>
      %218 = tpu.memref_slice %arg15[%c0_i32_185, %127, %c5_i32_186] : memref<2x2x8x!tpu.dma_semaphore, #tpu.memory_space<semaphore_mem>> -> memref<1x1x1x!tpu.dma_semaphore, #tpu.memory_space<semaphore_mem>>
      %219 = tpu.memref_squeeze %218 : memref<1x1x1x!tpu.dma_semaphore, #tpu.memory_space<semaphore_mem>> -> memref<!tpu.dma_semaphore, #tpu.memory_space<semaphore_mem>>
      tpu.enqueue_dma source(%215 : memref<1x768xf32, #tpu.memory_space<any>>) target(%217 : memref<1x768xf32, #tpu.memory_space<vmem>>) target_semaphore(%219 : memref<!tpu.dma_semaphore, #tpu.memory_space<semaphore_mem>>)
      %c1_i32_190 = arith.constant 1 : i32
      %c5_i32_191 = arith.constant 5 : i32
      %c0_i32_192 = arith.constant 0 : i32
      %220 = tpu.memref_slice %arg4[%214, %c0_i32_192] : memref<16x768xf32, #tpu.memory_space<any>> -> memref<1x768xf32, #tpu.memory_space<any>>
      %c5_i32_193 = arith.constant 5 : i32
      %c0_i32_194 = arith.constant 0 : i32
      %221 = tpu.memref_slice %arg14[%127, %c5_i32_193, %c0_i32_194] : memref<2x8x768xf32, #tpu.memory_space<vmem>> -> memref<1x1x768xf32, #tpu.memory_space<vmem>>
      %222 = tpu.memref_squeeze %221 : memref<1x1x768xf32, #tpu.memory_space<vmem>> -> memref<1x768xf32, #tpu.memory_space<vmem>>
      %223 = tpu.memref_slice %arg15[%c1_i32_190, %127, %c5_i32_191] : memref<2x2x8x!tpu.dma_semaphore, #tpu.memory_space<semaphore_mem>> -> memref<1x1x1x!tpu.dma_semaphore, #tpu.memory_space<semaphore_mem>>
      %224 = tpu.memref_squeeze %223 : memref<1x1x1x!tpu.dma_semaphore, #tpu.memory_space<semaphore_mem>> -> memref<!tpu.dma_semaphore, #tpu.memory_space<semaphore_mem>>
      tpu.enqueue_dma source(%220 : memref<1x768xf32, #tpu.memory_space<any>>) target(%222 : memref<1x768xf32, #tpu.memory_space<vmem>>) target_semaphore(%224 : memref<!tpu.dma_semaphore, #tpu.memory_space<semaphore_mem>>)
      %c6_i32_195 = arith.constant 6 : i32
      %225 = arith.addi %128, %c6_i32_195 : i32
      %226 = arith.index_cast %225 : i32 to index
      %227 = memref.load %arg1[%226] : memref<8xi32, #tpu.memory_space<smem>>
      %c6_i32_196 = arith.constant 6 : i32
      %228 = arith.addi %128, %c6_i32_196 : i32
      %229 = arith.index_cast %228 : i32 to index
      %230 = memref.load %arg2[%229] : memref<8xi32, #tpu.memory_space<smem>>
      %c0_i32_197 = arith.constant 0 : i32
      %c6_i32_198 = arith.constant 6 : i32
      %c0_i32_199 = arith.constant 0 : i32
      %231 = tpu.memref_slice %arg3[%227, %c0_i32_199] : memref<16x768xf32, #tpu.memory_space<any>> -> memref<1x768xf32, #tpu.memory_space<any>>
      %c6_i32_200 = arith.constant 6 : i32
      %c0_i32_201 = arith.constant 0 : i32
      %232 = tpu.memref_slice %arg13[%127, %c6_i32_200, %c0_i32_201] : memref<2x8x768xf32, #tpu.memory_space<vmem>> -> memref<1x1x768xf32, #tpu.memory_space<vmem>>
      %233 = tpu.memref_squeeze %232 : memref<1x1x768xf32, #tpu.memory_space<vmem>> -> memref<1x768xf32, #tpu.memory_space<vmem>>
      %234 = tpu.memref_slice %arg15[%c0_i32_197, %127, %c6_i32_198] : memref<2x2x8x!tpu.dma_semaphore, #tpu.memory_space<semaphore_mem>> -> memref<1x1x1x!tpu.dma_semaphore, #tpu.memory_space<semaphore_mem>>
      %235 = tpu.memref_squeeze %234 : memref<1x1x1x!tpu.dma_semaphore, #tpu.memory_space<semaphore_mem>> -> memref<!tpu.dma_semaphore, #tpu.memory_space<semaphore_mem>>
      tpu.enqueue_dma source(%231 : memref<1x768xf32, #tpu.memory_space<any>>) target(%233 : memref<1x768xf32, #tpu.memory_space<vmem>>) target_semaphore(%235 : memref<!tpu.dma_semaphore, #tpu.memory_space<semaphore_mem>>)
      %c1_i32_202 = arith.constant 1 : i32
      %c6_i32_203 = arith.constant 6 : i32
      %c0_i32_204 = arith.constant 0 : i32
      %236 = tpu.memref_slice %arg4[%230, %c0_i32_204] : memref<16x768xf32, #tpu.memory_space<any>> -> memref<1x768xf32, #tpu.memory_space<any>>
      %c6_i32_205 = arith.constant 6 : i32
      %c0_i32_206 = arith.constant 0 : i32
      %237 = tpu.memref_slice %arg14[%127, %c6_i32_205, %c0_i32_206] : memref<2x8x768xf32, #tpu.memory_space<vmem>> -> memref<1x1x768xf32, #tpu.memory_space<vmem>>
      %238 = tpu.memref_squeeze %237 : memref<1x1x768xf32, #tpu.memory_space<vmem>> -> memref<1x768xf32, #tpu.memory_space<vmem>>
      %239 = tpu.memref_slice %arg15[%c1_i32_202, %127, %c6_i32_203] : memref<2x2x8x!tpu.dma_semaphore, #tpu.memory_space<semaphore_mem>> -> memref<1x1x1x!tpu.dma_semaphore, #tpu.memory_space<semaphore_mem>>
      %240 = tpu.memref_squeeze %239 : memref<1x1x1x!tpu.dma_semaphore, #tpu.memory_space<semaphore_mem>> -> memref<!tpu.dma_semaphore, #tpu.memory_space<semaphore_mem>>
      tpu.enqueue_dma source(%236 : memref<1x768xf32, #tpu.memory_space<any>>) target(%238 : memref<1x768xf32, #tpu.memory_space<vmem>>) target_semaphore(%240 : memref<!tpu.dma_semaphore, #tpu.memory_space<semaphore_mem>>)
      %c7_i32_207 = arith.constant 7 : i32
      %241 = arith.addi %128, %c7_i32_207 : i32
      %242 = arith.index_cast %241 : i32 to index
      %243 = memref.load %arg1[%242] : memref<8xi32, #tpu.memory_space<smem>>
      %c7_i32_208 = arith.constant 7 : i32
      %244 = arith.addi %128, %c7_i32_208 : i32
      %245 = arith.index_cast %244 : i32 to index
      %246 = memref.load %arg2[%245] : memref<8xi32, #tpu.memory_space<smem>>
      %c0_i32_209 = arith.constant 0 : i32
      %c7_i32_210 = arith.constant 7 : i32
      %c0_i32_211 = arith.constant 0 : i32
      %247 = tpu.memref_slice %arg3[%243, %c0_i32_211] : memref<16x768xf32, #tpu.memory_space<any>> -> memref<1x768xf32, #tpu.memory_space<any>>
      %c7_i32_212 = arith.constant 7 : i32
      %c0_i32_213 = arith.constant 0 : i32
      %248 = tpu.memref_slice %arg13[%127, %c7_i32_212, %c0_i32_213] : memref<2x8x768xf32, #tpu.memory_space<vmem>> -> memref<1x1x768xf32, #tpu.memory_space<vmem>>
      %249 = tpu.memref_squeeze %248 : memref<1x1x768xf32, #tpu.memory_space<vmem>> -> memref<1x768xf32, #tpu.memory_space<vmem>>
      %250 = tpu.memref_slice %arg15[%c0_i32_209, %127, %c7_i32_210] : memref<2x2x8x!tpu.dma_semaphore, #tpu.memory_space<semaphore_mem>> -> memref<1x1x1x!tpu.dma_semaphore, #tpu.memory_space<semaphore_mem>>
      %251 = tpu.memref_squeeze %250 : memref<1x1x1x!tpu.dma_semaphore, #tpu.memory_space<semaphore_mem>> -> memref<!tpu.dma_semaphore, #tpu.memory_space<semaphore_mem>>
      tpu.enqueue_dma source(%247 : memref<1x768xf32, #tpu.memory_space<any>>) target(%249 : memref<1x768xf32, #tpu.memory_space<vmem>>) target_semaphore(%251 : memref<!tpu.dma_semaphore, #tpu.memory_space<semaphore_mem>>)
      %c1_i32_214 = arith.constant 1 : i32
      %c7_i32_215 = arith.constant 7 : i32
      %c0_i32_216 = arith.constant 0 : i32
      %252 = tpu.memref_slice %arg4[%246, %c0_i32_216] : memref<16x768xf32, #tpu.memory_space<any>> -> memref<1x768xf32, #tpu.memory_space<any>>
      %c7_i32_217 = arith.constant 7 : i32
      %c0_i32_218 = arith.constant 0 : i32
      %253 = tpu.memref_slice %arg14[%127, %c7_i32_217, %c0_i32_218] : memref<2x8x768xf32, #tpu.memory_space<vmem>> -> memref<1x1x768xf32, #tpu.memory_space<vmem>>
      %254 = tpu.memref_squeeze %253 : memref<1x1x768xf32, #tpu.memory_space<vmem>> -> memref<1x768xf32, #tpu.memory_space<vmem>>
      %255 = tpu.memref_slice %arg15[%c1_i32_214, %127, %c7_i32_215] : memref<2x2x8x!tpu.dma_semaphore, #tpu.memory_space<semaphore_mem>> -> memref<1x1x1x!tpu.dma_semaphore, #tpu.memory_space<semaphore_mem>>
      %256 = tpu.memref_squeeze %255 : memref<1x1x1x!tpu.dma_semaphore, #tpu.memory_space<semaphore_mem>> -> memref<!tpu.dma_semaphore, #tpu.memory_space<semaphore_mem>>
      tpu.enqueue_dma source(%252 : memref<1x768xf32, #tpu.memory_space<any>>) target(%254 : memref<1x768xf32, #tpu.memory_space<vmem>>) target_semaphore(%256 : memref<!tpu.dma_semaphore, #tpu.memory_space<semaphore_mem>>)
    } else {
    }
    %c0_i32_8 = arith.constant 0 : i32
    %c0_i32_9 = arith.constant 0 : i32
    %c0_i32_10 = arith.constant 0 : i32
    %c0_i32_11 = arith.constant 0 : i32
    %17 = tpu.memref_slice %arg3[%c0_i32_10, %c0_i32_11] : memref<16x768xf32, #tpu.memory_space<any>> -> memref<1x768xf32, #tpu.memory_space<any>>
    %c0_i32_12 = arith.constant 0 : i32
    %c0_i32_13 = arith.constant 0 : i32
    %18 = tpu.memref_slice %arg13[%9, %c0_i32_12, %c0_i32_13] : memref<2x8x768xf32, #tpu.memory_space<vmem>> -> memref<1x1x768xf32, #tpu.memory_space<vmem>>
    %19 = tpu.memref_squeeze %18 : memref<1x1x768xf32, #tpu.memory_space<vmem>> -> memref<1x768xf32, #tpu.memory_space<vmem>>
    %20 = tpu.memref_slice %arg15[%c0_i32_8, %9, %c0_i32_9] : memref<2x2x8x!tpu.dma_semaphore, #tpu.memory_space<semaphore_mem>> -> memref<1x1x1x!tpu.dma_semaphore, #tpu.memory_space<semaphore_mem>>
    %21 = tpu.memref_squeeze %20 : memref<1x1x1x!tpu.dma_semaphore, #tpu.memory_space<semaphore_mem>> -> memref<!tpu.dma_semaphore, #tpu.memory_space<semaphore_mem>>
    tpu.wait_dma2 semaphore(%21 : memref<!tpu.dma_semaphore, #tpu.memory_space<semaphore_mem>>) src(%17 : memref<1x768xf32, #tpu.memory_space<any>>) dst(%19 : memref<1x768xf32, #tpu.memory_space<vmem>>)
    %c1_i32_14 = arith.constant 1 : i32
    %c0_i32_15 = arith.constant 0 : i32
    %c0_i32_16 = arith.constant 0 : i32
    %c0_i32_17 = arith.constant 0 : i32
    %22 = tpu.memref_slice %arg4[%c0_i32_16, %c0_i32_17] : memref<16x768xf32, #tpu.memory_space<any>> -> memref<1x768xf32, #tpu.memory_space<any>>
    %c0_i32_18 = arith.constant 0 : i32
    %c0_i32_19 = arith.constant 0 : i32
    %23 = tpu.memref_slice %arg14[%9, %c0_i32_18, %c0_i32_19] : memref<2x8x768xf32, #tpu.memory_space<vmem>> -> memref<1x1x768xf32, #tpu.memory_space<vmem>>
    %24 = tpu.memref_squeeze %23 : memref<1x1x768xf32, #tpu.memory_space<vmem>> -> memref<1x768xf32, #tpu.memory_space<vmem>>
    %25 = tpu.memref_slice %arg15[%c1_i32_14, %9, %c0_i32_15] : memref<2x2x8x!tpu.dma_semaphore, #tpu.memory_space<semaphore_mem>> -> memref<1x1x1x!tpu.dma_semaphore, #tpu.memory_space<semaphore_mem>>
    %26 = tpu.memref_squeeze %25 : memref<1x1x1x!tpu.dma_semaphore, #tpu.memory_space<semaphore_mem>> -> memref<!tpu.dma_semaphore, #tpu.memory_space<semaphore_mem>>
    tpu.wait_dma2 semaphore(%26 : memref<!tpu.dma_semaphore, #tpu.memory_space<semaphore_mem>>) src(%22 : memref<1x768xf32, #tpu.memory_space<any>>) dst(%24 : memref<1x768xf32, #tpu.memory_space<vmem>>)
    %c0_i32_20 = arith.constant 0 : i32
    %c1_i32_21 = arith.constant 1 : i32
    %c0_i32_22 = arith.constant 0 : i32
    %c0_i32_23 = arith.constant 0 : i32
    %27 = tpu.memref_slice %arg3[%c0_i32_22, %c0_i32_23] : memref<16x768xf32, #tpu.memory_space<any>> -> memref<1x768xf32, #tpu.memory_space<any>>
    %c1_i32_24 = arith.constant 1 : i32
    %c0_i32_25 = arith.constant 0 : i32
    %28 = tpu.memref_slice %arg13[%9, %c1_i32_24, %c0_i32_25] : memref<2x8x768xf32, #tpu.memory_space<vmem>> -> memref<1x1x768xf32, #tpu.memory_space<vmem>>
    %29 = tpu.memref_squeeze %28 : memref<1x1x768xf32, #tpu.memory_space<vmem>> -> memref<1x768xf32, #tpu.memory_space<vmem>>
    %30 = tpu.memref_slice %arg15[%c0_i32_20, %9, %c1_i32_21] : memref<2x2x8x!tpu.dma_semaphore, #tpu.memory_space<semaphore_mem>> -> memref<1x1x1x!tpu.dma_semaphore, #tpu.memory_space<semaphore_mem>>
    %31 = tpu.memref_squeeze %30 : memref<1x1x1x!tpu.dma_semaphore, #tpu.memory_space<semaphore_mem>> -> memref<!tpu.dma_semaphore, #tpu.memory_space<semaphore_mem>>
    tpu.wait_dma2 semaphore(%31 : memref<!tpu.dma_semaphore, #tpu.memory_space<semaphore_mem>>) src(%27 : memref<1x768xf32, #tpu.memory_space<any>>) dst(%29 : memref<1x768xf32, #tpu.memory_space<vmem>>)
    %c1_i32_26 = arith.constant 1 : i32
    %c1_i32_27 = arith.constant 1 : i32
    %c0_i32_28 = arith.constant 0 : i32
    %c0_i32_29 = arith.constant 0 : i32
    %32 = tpu.memref_slice %arg4[%c0_i32_28, %c0_i32_29] : memref<16x768xf32, #tpu.memory_space<any>> -> memref<1x768xf32, #tpu.memory_space<any>>
    %c1_i32_30 = arith.constant 1 : i32
    %c0_i32_31 = arith.constant 0 : i32
    %33 = tpu.memref_slice %arg14[%9, %c1_i32_30, %c0_i32_31] : memref<2x8x768xf32, #tpu.memory_space<vmem>> -> memref<1x1x768xf32, #tpu.memory_space<vmem>>
    %34 = tpu.memref_squeeze %33 : memref<1x1x768xf32, #tpu.memory_space<vmem>> -> memref<1x768xf32, #tpu.memory_space<vmem>>
    %35 = tpu.memref_slice %arg15[%c1_i32_26, %9, %c1_i32_27] : memref<2x2x8x!tpu.dma_semaphore, #tpu.memory_space<semaphore_mem>> -> memref<1x1x1x!tpu.dma_semaphore, #tpu.memory_space<semaphore_mem>>
    %36 = tpu.memref_squeeze %35 : memref<1x1x1x!tpu.dma_semaphore, #tpu.memory_space<semaphore_mem>> -> memref<!tpu.dma_semaphore, #tpu.memory_space<semaphore_mem>>
    tpu.wait_dma2 semaphore(%36 : memref<!tpu.dma_semaphore, #tpu.memory_space<semaphore_mem>>) src(%32 : memref<1x768xf32, #tpu.memory_space<any>>) dst(%34 : memref<1x768xf32, #tpu.memory_space<vmem>>)
    %c0_i32_32 = arith.constant 0 : i32
    %c2_i32_33 = arith.constant 2 : i32
    %c0_i32_34 = arith.constant 0 : i32
    %c0_i32_35 = arith.constant 0 : i32
    %37 = tpu.memref_slice %arg3[%c0_i32_34, %c0_i32_35] : memref<16x768xf32, #tpu.memory_space<any>> -> memref<1x768xf32, #tpu.memory_space<any>>
    %c2_i32_36 = arith.constant 2 : i32
    %c0_i32_37 = arith.constant 0 : i32
    %38 = tpu.memref_slice %arg13[%9, %c2_i32_36, %c0_i32_37] : memref<2x8x768xf32, #tpu.memory_space<vmem>> -> memref<1x1x768xf32, #tpu.memory_space<vmem>>
    %39 = tpu.memref_squeeze %38 : memref<1x1x768xf32, #tpu.memory_space<vmem>> -> memref<1x768xf32, #tpu.memory_space<vmem>>
    %40 = tpu.memref_slice %arg15[%c0_i32_32, %9, %c2_i32_33] : memref<2x2x8x!tpu.dma_semaphore, #tpu.memory_space<semaphore_mem>> -> memref<1x1x1x!tpu.dma_semaphore, #tpu.memory_space<semaphore_mem>>
    %41 = tpu.memref_squeeze %40 : memref<1x1x1x!tpu.dma_semaphore, #tpu.memory_space<semaphore_mem>> -> memref<!tpu.dma_semaphore, #tpu.memory_space<semaphore_mem>>
    tpu.wait_dma2 semaphore(%41 : memref<!tpu.dma_semaphore, #tpu.memory_space<semaphore_mem>>) src(%37 : memref<1x768xf32, #tpu.memory_space<any>>) dst(%39 : memref<1x768xf32, #tpu.memory_space<vmem>>)
    %c1_i32_38 = arith.constant 1 : i32
    %c2_i32_39 = arith.constant 2 : i32
    %c0_i32_40 = arith.constant 0 : i32
    %c0_i32_41 = arith.constant 0 : i32
    %42 = tpu.memref_slice %arg4[%c0_i32_40, %c0_i32_41] : memref<16x768xf32, #tpu.memory_space<any>> -> memref<1x768xf32, #tpu.memory_space<any>>
    %c2_i32_42 = arith.constant 2 : i32
    %c0_i32_43 = arith.constant 0 : i32
    %43 = tpu.memref_slice %arg14[%9, %c2_i32_42, %c0_i32_43] : memref<2x8x768xf32, #tpu.memory_space<vmem>> -> memref<1x1x768xf32, #tpu.memory_space<vmem>>
    %44 = tpu.memref_squeeze %43 : memref<1x1x768xf32, #tpu.memory_space<vmem>> -> memref<1x768xf32, #tpu.memory_space<vmem>>
    %45 = tpu.memref_slice %arg15[%c1_i32_38, %9, %c2_i32_39] : memref<2x2x8x!tpu.dma_semaphore, #tpu.memory_space<semaphore_mem>> -> memref<1x1x1x!tpu.dma_semaphore, #tpu.memory_space<semaphore_mem>>
    %46 = tpu.memref_squeeze %45 : memref<1x1x1x!tpu.dma_semaphore, #tpu.memory_space<semaphore_mem>> -> memref<!tpu.dma_semaphore, #tpu.memory_space<semaphore_mem>>
    tpu.wait_dma2 semaphore(%46 : memref<!tpu.dma_semaphore, #tpu.memory_space<semaphore_mem>>) src(%42 : memref<1x768xf32, #tpu.memory_space<any>>) dst(%44 : memref<1x768xf32, #tpu.memory_space<vmem>>)
    %c0_i32_44 = arith.constant 0 : i32
    %c3_i32 = arith.constant 3 : i32
    %c0_i32_45 = arith.constant 0 : i32
    %c0_i32_46 = arith.constant 0 : i32
    %47 = tpu.memref_slice %arg3[%c0_i32_45, %c0_i32_46] : memref<16x768xf32, #tpu.memory_space<any>> -> memref<1x768xf32, #tpu.memory_space<any>>
    %c3_i32_47 = arith.constant 3 : i32
    %c0_i32_48 = arith.constant 0 : i32
    %48 = tpu.memref_slice %arg13[%9, %c3_i32_47, %c0_i32_48] : memref<2x8x768xf32, #tpu.memory_space<vmem>> -> memref<1x1x768xf32, #tpu.memory_space<vmem>>
    %49 = tpu.memref_squeeze %48 : memref<1x1x768xf32, #tpu.memory_space<vmem>> -> memref<1x768xf32, #tpu.memory_space<vmem>>
    %50 = tpu.memref_slice %arg15[%c0_i32_44, %9, %c3_i32] : memref<2x2x8x!tpu.dma_semaphore, #tpu.memory_space<semaphore_mem>> -> memref<1x1x1x!tpu.dma_semaphore, #tpu.memory_space<semaphore_mem>>
    %51 = tpu.memref_squeeze %50 : memref<1x1x1x!tpu.dma_semaphore, #tpu.memory_space<semaphore_mem>> -> memref<!tpu.dma_semaphore, #tpu.memory_space<semaphore_mem>>
    tpu.wait_dma2 semaphore(%51 : memref<!tpu.dma_semaphore, #tpu.memory_space<semaphore_mem>>) src(%47 : memref<1x768xf32, #tpu.memory_space<any>>) dst(%49 : memref<1x768xf32, #tpu.memory_space<vmem>>)
    %c1_i32_49 = arith.constant 1 : i32
    %c3_i32_50 = arith.constant 3 : i32
    %c0_i32_51 = arith.constant 0 : i32
    %c0_i32_52 = arith.constant 0 : i32
    %52 = tpu.memref_slice %arg4[%c0_i32_51, %c0_i32_52] : memref<16x768xf32, #tpu.memory_space<any>> -> memref<1x768xf32, #tpu.memory_space<any>>
    %c3_i32_53 = arith.constant 3 : i32
    %c0_i32_54 = arith.constant 0 : i32
    %53 = tpu.memref_slice %arg14[%9, %c3_i32_53, %c0_i32_54] : memref<2x8x768xf32, #tpu.memory_space<vmem>> -> memref<1x1x768xf32, #tpu.memory_space<vmem>>
    %54 = tpu.memref_squeeze %53 : memref<1x1x768xf32, #tpu.memory_space<vmem>> -> memref<1x768xf32, #tpu.memory_space<vmem>>
    %55 = tpu.memref_slice %arg15[%c1_i32_49, %9, %c3_i32_50] : memref<2x2x8x!tpu.dma_semaphore, #tpu.memory_space<semaphore_mem>> -> memref<1x1x1x!tpu.dma_semaphore, #tpu.memory_space<semaphore_mem>>
    %56 = tpu.memref_squeeze %55 : memref<1x1x1x!tpu.dma_semaphore, #tpu.memory_space<semaphore_mem>> -> memref<!tpu.dma_semaphore, #tpu.memory_space<semaphore_mem>>
    tpu.wait_dma2 semaphore(%56 : memref<!tpu.dma_semaphore, #tpu.memory_space<semaphore_mem>>) src(%52 : memref<1x768xf32, #tpu.memory_space<any>>) dst(%54 : memref<1x768xf32, #tpu.memory_space<vmem>>)
    %c0_i32_55 = arith.constant 0 : i32
    %c4_i32 = arith.constant 4 : i32
    %c0_i32_56 = arith.constant 0 : i32
    %c0_i32_57 = arith.constant 0 : i32
    %57 = tpu.memref_slice %arg3[%c0_i32_56, %c0_i32_57] : memref<16x768xf32, #tpu.memory_space<any>> -> memref<1x768xf32, #tpu.memory_space<any>>
    %c4_i32_58 = arith.constant 4 : i32
    %c0_i32_59 = arith.constant 0 : i32
    %58 = tpu.memref_slice %arg13[%9, %c4_i32_58, %c0_i32_59] : memref<2x8x768xf32, #tpu.memory_space<vmem>> -> memref<1x1x768xf32, #tpu.memory_space<vmem>>
    %59 = tpu.memref_squeeze %58 : memref<1x1x768xf32, #tpu.memory_space<vmem>> -> memref<1x768xf32, #tpu.memory_space<vmem>>
    %60 = tpu.memref_slice %arg15[%c0_i32_55, %9, %c4_i32] : memref<2x2x8x!tpu.dma_semaphore, #tpu.memory_space<semaphore_mem>> -> memref<1x1x1x!tpu.dma_semaphore, #tpu.memory_space<semaphore_mem>>
    %61 = tpu.memref_squeeze %60 : memref<1x1x1x!tpu.dma_semaphore, #tpu.memory_space<semaphore_mem>> -> memref<!tpu.dma_semaphore, #tpu.memory_space<semaphore_mem>>
    tpu.wait_dma2 semaphore(%61 : memref<!tpu.dma_semaphore, #tpu.memory_space<semaphore_mem>>) src(%57 : memref<1x768xf32, #tpu.memory_space<any>>) dst(%59 : memref<1x768xf32, #tpu.memory_space<vmem>>)
    %c1_i32_60 = arith.constant 1 : i32
    %c4_i32_61 = arith.constant 4 : i32
    %c0_i32_62 = arith.constant 0 : i32
    %c0_i32_63 = arith.constant 0 : i32
    %62 = tpu.memref_slice %arg4[%c0_i32_62, %c0_i32_63] : memref<16x768xf32, #tpu.memory_space<any>> -> memref<1x768xf32, #tpu.memory_space<any>>
    %c4_i32_64 = arith.constant 4 : i32
    %c0_i32_65 = arith.constant 0 : i32
    %63 = tpu.memref_slice %arg14[%9, %c4_i32_64, %c0_i32_65] : memref<2x8x768xf32, #tpu.memory_space<vmem>> -> memref<1x1x768xf32, #tpu.memory_space<vmem>>
    %64 = tpu.memref_squeeze %63 : memref<1x1x768xf32, #tpu.memory_space<vmem>> -> memref<1x768xf32, #tpu.memory_space<vmem>>
    %65 = tpu.memref_slice %arg15[%c1_i32_60, %9, %c4_i32_61] : memref<2x2x8x!tpu.dma_semaphore, #tpu.memory_space<semaphore_mem>> -> memref<1x1x1x!tpu.dma_semaphore, #tpu.memory_space<semaphore_mem>>
    %66 = tpu.memref_squeeze %65 : memref<1x1x1x!tpu.dma_semaphore, #tpu.memory_space<semaphore_mem>> -> memref<!tpu.dma_semaphore, #tpu.memory_space<semaphore_mem>>
    tpu.wait_dma2 semaphore(%66 : memref<!tpu.dma_semaphore, #tpu.memory_space<semaphore_mem>>) src(%62 : memref<1x768xf32, #tpu.memory_space<any>>) dst(%64 : memref<1x768xf32, #tpu.memory_space<vmem>>)
    %c0_i32_66 = arith.constant 0 : i32
    %c5_i32 = arith.constant 5 : i32
    %c0_i32_67 = arith.constant 0 : i32
    %c0_i32_68 = arith.constant 0 : i32
    %67 = tpu.memref_slice %arg3[%c0_i32_67, %c0_i32_68] : memref<16x768xf32, #tpu.memory_space<any>> -> memref<1x768xf32, #tpu.memory_space<any>>
    %c5_i32_69 = arith.constant 5 : i32
    %c0_i32_70 = arith.constant 0 : i32
    %68 = tpu.memref_slice %arg13[%9, %c5_i32_69, %c0_i32_70] : memref<2x8x768xf32, #tpu.memory_space<vmem>> -> memref<1x1x768xf32, #tpu.memory_space<vmem>>
    %69 = tpu.memref_squeeze %68 : memref<1x1x768xf32, #tpu.memory_space<vmem>> -> memref<1x768xf32, #tpu.memory_space<vmem>>
    %70 = tpu.memref_slice %arg15[%c0_i32_66, %9, %c5_i32] : memref<2x2x8x!tpu.dma_semaphore, #tpu.memory_space<semaphore_mem>> -> memref<1x1x1x!tpu.dma_semaphore, #tpu.memory_space<semaphore_mem>>
    %71 = tpu.memref_squeeze %70 : memref<1x1x1x!tpu.dma_semaphore, #tpu.memory_space<semaphore_mem>> -> memref<!tpu.dma_semaphore, #tpu.memory_space<semaphore_mem>>
    tpu.wait_dma2 semaphore(%71 : memref<!tpu.dma_semaphore, #tpu.memory_space<semaphore_mem>>) src(%67 : memref<1x768xf32, #tpu.memory_space<any>>) dst(%69 : memref<1x768xf32, #tpu.memory_space<vmem>>)
    %c1_i32_71 = arith.constant 1 : i32
    %c5_i32_72 = arith.constant 5 : i32
    %c0_i32_73 = arith.constant 0 : i32
    %c0_i32_74 = arith.constant 0 : i32
    %72 = tpu.memref_slice %arg4[%c0_i32_73, %c0_i32_74] : memref<16x768xf32, #tpu.memory_space<any>> -> memref<1x768xf32, #tpu.memory_space<any>>
    %c5_i32_75 = arith.constant 5 : i32
    %c0_i32_76 = arith.constant 0 : i32
    %73 = tpu.memref_slice %arg14[%9, %c5_i32_75, %c0_i32_76] : memref<2x8x768xf32, #tpu.memory_space<vmem>> -> memref<1x1x768xf32, #tpu.memory_space<vmem>>
    %74 = tpu.memref_squeeze %73 : memref<1x1x768xf32, #tpu.memory_space<vmem>> -> memref<1x768xf32, #tpu.memory_space<vmem>>
    %75 = tpu.memref_slice %arg15[%c1_i32_71, %9, %c5_i32_72] : memref<2x2x8x!tpu.dma_semaphore, #tpu.memory_space<semaphore_mem>> -> memref<1x1x1x!tpu.dma_semaphore, #tpu.memory_space<semaphore_mem>>
    %76 = tpu.memref_squeeze %75 : memref<1x1x1x!tpu.dma_semaphore, #tpu.memory_space<semaphore_mem>> -> memref<!tpu.dma_semaphore, #tpu.memory_space<semaphore_mem>>
    tpu.wait_dma2 semaphore(%76 : memref<!tpu.dma_semaphore, #tpu.memory_space<semaphore_mem>>) src(%72 : memref<1x768xf32, #tpu.memory_space<any>>) dst(%74 : memref<1x768xf32, #tpu.memory_space<vmem>>)
    %c0_i32_77 = arith.constant 0 : i32
    %c6_i32 = arith.constant 6 : i32
    %c0_i32_78 = arith.constant 0 : i32
    %c0_i32_79 = arith.constant 0 : i32
    %77 = tpu.memref_slice %arg3[%c0_i32_78, %c0_i32_79] : memref<16x768xf32, #tpu.memory_space<any>> -> memref<1x768xf32, #tpu.memory_space<any>>
    %c6_i32_80 = arith.constant 6 : i32
    %c0_i32_81 = arith.constant 0 : i32
    %78 = tpu.memref_slice %arg13[%9, %c6_i32_80, %c0_i32_81] : memref<2x8x768xf32, #tpu.memory_space<vmem>> -> memref<1x1x768xf32, #tpu.memory_space<vmem>>
    %79 = tpu.memref_squeeze %78 : memref<1x1x768xf32, #tpu.memory_space<vmem>> -> memref<1x768xf32, #tpu.memory_space<vmem>>
    %80 = tpu.memref_slice %arg15[%c0_i32_77, %9, %c6_i32] : memref<2x2x8x!tpu.dma_semaphore, #tpu.memory_space<semaphore_mem>> -> memref<1x1x1x!tpu.dma_semaphore, #tpu.memory_space<semaphore_mem>>
    %81 = tpu.memref_squeeze %80 : memref<1x1x1x!tpu.dma_semaphore, #tpu.memory_space<semaphore_mem>> -> memref<!tpu.dma_semaphore, #tpu.memory_space<semaphore_mem>>
    tpu.wait_dma2 semaphore(%81 : memref<!tpu.dma_semaphore, #tpu.memory_space<semaphore_mem>>) src(%77 : memref<1x768xf32, #tpu.memory_space<any>>) dst(%79 : memref<1x768xf32, #tpu.memory_space<vmem>>)
    %c1_i32_82 = arith.constant 1 : i32
    %c6_i32_83 = arith.constant 6 : i32
    %c0_i32_84 = arith.constant 0 : i32
    %c0_i32_85 = arith.constant 0 : i32
    %82 = tpu.memref_slice %arg4[%c0_i32_84, %c0_i32_85] : memref<16x768xf32, #tpu.memory_space<any>> -> memref<1x768xf32, #tpu.memory_space<any>>
    %c6_i32_86 = arith.constant 6 : i32
    %c0_i32_87 = arith.constant 0 : i32
    %83 = tpu.memref_slice %arg14[%9, %c6_i32_86, %c0_i32_87] : memref<2x8x768xf32, #tpu.memory_space<vmem>> -> memref<1x1x768xf32, #tpu.memory_space<vmem>>
    %84 = tpu.memref_squeeze %83 : memref<1x1x768xf32, #tpu.memory_space<vmem>> -> memref<1x768xf32, #tpu.memory_space<vmem>>
    %85 = tpu.memref_slice %arg15[%c1_i32_82, %9, %c6_i32_83] : memref<2x2x8x!tpu.dma_semaphore, #tpu.memory_space<semaphore_mem>> -> memref<1x1x1x!tpu.dma_semaphore, #tpu.memory_space<semaphore_mem>>
    %86 = tpu.memref_squeeze %85 : memref<1x1x1x!tpu.dma_semaphore, #tpu.memory_space<semaphore_mem>> -> memref<!tpu.dma_semaphore, #tpu.memory_space<semaphore_mem>>
    tpu.wait_dma2 semaphore(%86 : memref<!tpu.dma_semaphore, #tpu.memory_space<semaphore_mem>>) src(%82 : memref<1x768xf32, #tpu.memory_space<any>>) dst(%84 : memref<1x768xf32, #tpu.memory_space<vmem>>)
    %c0_i32_88 = arith.constant 0 : i32
    %c7_i32 = arith.constant 7 : i32
    %c0_i32_89 = arith.constant 0 : i32
    %c0_i32_90 = arith.constant 0 : i32
    %87 = tpu.memref_slice %arg3[%c0_i32_89, %c0_i32_90] : memref<16x768xf32, #tpu.memory_space<any>> -> memref<1x768xf32, #tpu.memory_space<any>>
    %c7_i32_91 = arith.constant 7 : i32
    %c0_i32_92 = arith.constant 0 : i32
    %88 = tpu.memref_slice %arg13[%9, %c7_i32_91, %c0_i32_92] : memref<2x8x768xf32, #tpu.memory_space<vmem>> -> memref<1x1x768xf32, #tpu.memory_space<vmem>>
    %89 = tpu.memref_squeeze %88 : memref<1x1x768xf32, #tpu.memory_space<vmem>> -> memref<1x768xf32, #tpu.memory_space<vmem>>
    %90 = tpu.memref_slice %arg15[%c0_i32_88, %9, %c7_i32] : memref<2x2x8x!tpu.dma_semaphore, #tpu.memory_space<semaphore_mem>> -> memref<1x1x1x!tpu.dma_semaphore, #tpu.memory_space<semaphore_mem>>
    %91 = tpu.memref_squeeze %90 : memref<1x1x1x!tpu.dma_semaphore, #tpu.memory_space<semaphore_mem>> -> memref<!tpu.dma_semaphore, #tpu.memory_space<semaphore_mem>>
    tpu.wait_dma2 semaphore(%91 : memref<!tpu.dma_semaphore, #tpu.memory_space<semaphore_mem>>) src(%87 : memref<1x768xf32, #tpu.memory_space<any>>) dst(%89 : memref<1x768xf32, #tpu.memory_space<vmem>>)
    %c1_i32_93 = arith.constant 1 : i32
    %c7_i32_94 = arith.constant 7 : i32
    %c0_i32_95 = arith.constant 0 : i32
    %c0_i32_96 = arith.constant 0 : i32
    %92 = tpu.memref_slice %arg4[%c0_i32_95, %c0_i32_96] : memref<16x768xf32, #tpu.memory_space<any>> -> memref<1x768xf32, #tpu.memory_space<any>>
    %c7_i32_97 = arith.constant 7 : i32
    %c0_i32_98 = arith.constant 0 : i32
    %93 = tpu.memref_slice %arg14[%9, %c7_i32_97, %c0_i32_98] : memref<2x8x768xf32, #tpu.memory_space<vmem>> -> memref<1x1x768xf32, #tpu.memory_space<vmem>>
    %94 = tpu.memref_squeeze %93 : memref<1x1x768xf32, #tpu.memory_space<vmem>> -> memref<1x768xf32, #tpu.memory_space<vmem>>
    %95 = tpu.memref_slice %arg15[%c1_i32_93, %9, %c7_i32_94] : memref<2x2x8x!tpu.dma_semaphore, #tpu.memory_space<semaphore_mem>> -> memref<1x1x1x!tpu.dma_semaphore, #tpu.memory_space<semaphore_mem>>
    %96 = tpu.memref_squeeze %95 : memref<1x1x1x!tpu.dma_semaphore, #tpu.memory_space<semaphore_mem>> -> memref<!tpu.dma_semaphore, #tpu.memory_space<semaphore_mem>>
    tpu.wait_dma2 semaphore(%96 : memref<!tpu.dma_semaphore, #tpu.memory_space<semaphore_mem>>) src(%92 : memref<1x768xf32, #tpu.memory_space<any>>) dst(%94 : memref<1x768xf32, #tpu.memory_space<vmem>>)
    %97 = arith.index_cast %9 : i32 to index
    %c0 = arith.constant 0 : index
    %c0_99 = arith.constant 0 : index
    %98 = vector.load %arg13[%97, %c0, %c0_99] : memref<2x8x768xf32, #tpu.memory_space<vmem>>, vector<1x8x768xf32>
    %99 = vector.shape_cast %98 : vector<1x8x768xf32> to vector<8x768xf32>
    %100 = arith.truncf %99 : vector<8x768xf32> to vector<8x768xbf16>
    %101 = arith.index_cast %9 : i32 to index
    %c0_100 = arith.constant 0 : index
    %c0_101 = arith.constant 0 : index
    %102 = vector.load %arg14[%101, %c0_100, %c0_101] : memref<2x8x768xf32, #tpu.memory_space<vmem>>, vector<1x8x768xf32>
    %103 = vector.shape_cast %102 : vector<1x8x768xf32> to vector<8x768xf32>
    %104 = arith.truncf %103 : vector<8x768xf32> to vector<8x768xbf16>
    %c0_102 = arith.constant 0 : index
    %c0_103 = arith.constant 0 : index
    %105 = vector.load %arg5[%c0_102, %c0_103] : memref<768x128xbf16, #tpu.memory_space<vmem>>, vector<768x128xbf16>
    %cst = arith.constant dense<0.000000e+00> : vector<8x128xf32>
    %106 = tpu.matmul %100, %105, %cst {dimension_numbers = #tpu.dot_dimension_numbers<[1], [0], [0], [1], [0, 0, 1, 1], [], []>} : vector<8x768xbf16>, vector<768x128xbf16>, vector<8x128xf32> -> vector<8x128xf32>
    %c0_104 = arith.constant 0 : index
    %c0_105 = arith.constant 0 : index
    %107 = vector.load %arg9[%c0_104, %c0_105] : memref<1x128xf32, #tpu.memory_space<vmem>>, vector<1x128xf32>
    %108 = vector.broadcast %107 : vector<1x128xf32> to vector<8x128xf32>
    %109 = arith.addf %106, %108 : vector<8x128xf32>
    %c0_106 = arith.constant 0 : index
    %c0_107 = arith.constant 0 : index
    %110 = vector.load %arg6[%c0_106, %c0_107] : memref<768x128xbf16, #tpu.memory_space<vmem>>, vector<768x128xbf16>
    %cst_108 = arith.constant dense<0.000000e+00> : vector<8x128xf32>
    %111 = tpu.matmul %104, %110, %cst_108 {dimension_numbers = #tpu.dot_dimension_numbers<[1], [0], [0], [1], [0, 0, 1, 1], [], []>} : vector<8x768xbf16>, vector<768x128xbf16>, vector<8x128xf32> -> vector<8x128xf32>
    %c0_109 = arith.constant 0 : index
    %c0_110 = arith.constant 0 : index
    %112 = vector.load %arg10[%c0_109, %c0_110] : memref<1x128xf32, #tpu.memory_space<vmem>>, vector<1x128xf32>
    %113 = vector.broadcast %112 : vector<1x128xf32> to vector<8x128xf32>
    %114 = arith.addf %111, %113 : vector<8x128xf32>
    %115 = arith.truncf %109 : vector<8x128xf32> to vector<8x128xbf16>
    %c0_111 = arith.constant 0 : index
    %c0_112 = arith.constant 0 : index
    %116 = vector.load %arg7[%c0_111, %c0_112] : memref<128x128xbf16, #tpu.memory_space<vmem>>, vector<128x128xbf16>
    %cst_113 = arith.constant dense<0.000000e+00> : vector<8x128xf32>
    %117 = tpu.matmul %115, %116, %cst_113 {dimension_numbers = #tpu.dot_dimension_numbers<[1], [0], [0], [1], [0, 0, 1, 1], [], []>} : vector<8x128xbf16>, vector<128x128xbf16>, vector<8x128xf32> -> vector<8x128xf32>
    %118 = arith.truncf %114 : vector<8x128xf32> to vector<8x128xbf16>
    %c0_114 = arith.constant 0 : index
    %c0_115 = arith.constant 0 : index
    %119 = vector.load %arg8[%c0_114, %c0_115] : memref<128x128xbf16, #tpu.memory_space<vmem>>, vector<128x128xbf16>
    %cst_116 = arith.constant dense<0.000000e+00> : vector<8x128xf32>
    %120 = tpu.matmul %118, %119, %cst_116 {dimension_numbers = #tpu.dot_dimension_numbers<[1], [0], [0], [1], [0, 0, 1, 1], [], []>} : vector<8x128xbf16>, vector<128x128xbf16>, vector<8x128xf32> -> vector<8x128xf32>
    %121 = arith.addf %117, %120 : vector<8x128xf32>
    %c0_117 = arith.constant 0 : index
    %c0_118 = arith.constant 0 : index
    %122 = vector.load %arg11[%c0_117, %c0_118] : memref<1x128xf32, #tpu.memory_space<vmem>>, vector<1x128xf32>
    %123 = vector.broadcast %122 : vector<1x128xf32> to vector<8x128xf32>
    %124 = arith.addf %121, %123 : vector<8x128xf32>
    %c0_119 = arith.constant 0 : index
    %c0_120 = arith.constant 0 : index
    %125 = vector.load %arg12[%c0_119, %c0_120] : memref<8x128xf32, #tpu.memory_space<vmem>>, vector<8x128xf32>
    tpu.vector_store %arg12[%c0_119, %c0_120], %124 {strides = array<i32>} : memref<8x128xf32, #tpu.memory_space<vmem>>, vector<8x128xf32>,
    return
  }
  func.func @transform_2(%arg0: i32, %arg1: memref<8xi32, #tpu.memory_space<smem>>, %arg2: memref<8xi32, #tpu.memory_space<smem>>) -> (i32, i32) {
    %c0_i32 = arith.constant 0 : i32
    %c0_i32_0 = arith.constant 0 : i32
    %c0_i32_1 = arith.constant 0 : i32
    return %c0_i32, %c0_i32_0 : i32, i32
  }
  func.func @transform_3(%arg0: i32, %arg1: memref<8xi32, #tpu.memory_space<smem>>, %arg2: memref<8xi32, #tpu.memory_space<smem>>) -> (i32, i32) {
    %c0_i32 = arith.constant 0 : i32
    %c0_i32_0 = arith.constant 0 : i32
    %c0_i32_1 = arith.constant 0 : i32
    return %c0_i32, %c0_i32_0 : i32, i32
  }
  func.func @transform_4(%arg0: i32, %arg1: memref<8xi32, #tpu.memory_space<smem>>, %arg2: memref<8xi32, #tpu.memory_space<smem>>) -> (i32, i32) {
    %c0_i32 = arith.constant 0 : i32
    %c0_i32_0 = arith.constant 0 : i32
    %c0_i32_1 = arith.constant 0 : i32
    return %c0_i32, %c0_i32_0 : i32, i32
  }
  func.func @transform_5(%arg0: i32, %arg1: memref<8xi32, #tpu.memory_space<smem>>, %arg2: memref<8xi32, #tpu.memory_space<smem>>) -> (i32, i32) {
    %c0_i32 = arith.constant 0 : i32
    %c0_i32_0 = arith.constant 0 : i32
    %c0_i32_1 = arith.constant 0 : i32
    return %c0_i32, %c0_i32_0 : i32, i32
  }
  func.func @transform_6(%arg0: i32, %arg1: memref<8xi32, #tpu.memory_space<smem>>, %arg2: memref<8xi32, #tpu.memory_space<smem>>) -> (i32, i32) {
    %c0_i32 = arith.constant 0 : i32
    %c0_i32_0 = arith.constant 0 : i32
    %c0_i32_1 = arith.constant 0 : i32
    return %c0_i32, %c0_i32_0 : i32, i32
  }
  func.func @transform_7(%arg0: i32, %arg1: memref<8xi32, #tpu.memory_space<smem>>, %arg2: memref<8xi32, #tpu.memory_space<smem>>) -> (i32, i32) {
    %c0_i32 = arith.constant 0 : i32
    %c0_i32_0 = arith.constant 0 : i32
    %c0_i32_1 = arith.constant 0 : i32
    return %c0_i32, %c0_i32_0 : i32, i32
  }
  func.func @transform_8(%arg0: i32, %arg1: memref<8xi32, #tpu.memory_space<smem>>, %arg2: memref<8xi32, #tpu.memory_space<smem>>) -> (i32, i32) {
    %c0_i32 = arith.constant 0 : i32
    %c0_i32_0 = arith.constant 0 : i32
    %c0_i32_1 = arith.constant 0 : i32
    return %c0_i32, %c0_i32_0 : i32, i32
  }
  func.func @transform_9(%arg0: i32, %arg1: memref<8xi32, #tpu.memory_space<smem>>, %arg2: memref<8xi32, #tpu.memory_space<smem>>) -> (i32, i32) {
    %c0_i32 = arith.constant 0 : i32
    %c0_i32_0 = arith.constant 0 : i32
    return %arg0, %c0_i32 : i32, i32
  }
}

</mosaic_0001>

<llo_original>
// kernel: tpu_custom_call.1
$region0: #{tpu_custom_call.1}
  #allocation0 [shape = 'u32[]', space=smem, size = 0x4, offset = 0x4, fixed_abs, tag = 'smem constant byte address 0x4 - core index']
  #allocation1 [shape = 'u32[144,128]{1,0:T(1,128)}', space=vmem, size = 0x12000, scoped, tag = 'internal scratch']
  #allocation2 [shape = 'f32[2,8,768]{2,1,0:T(8,128)}', space=vmem, size = 0xc000, scoped, tag = 'scratch operand']
  #allocation3 [shape = 'f32[2,8,768]{2,1,0:T(8,128)}', space=vmem, size = 0xc000, scoped, tag = 'scratch operand']
  #allocation4 [shape = 's32[32]{0}', space=sflag, size = 0x80, scoped, tag = 'scratch operand']
  #allocation5 [shape = 's32[1]{0}', space=sflag, size = 0x4, scoped, tag = 'scoped memory for tpu_custom_call.1']
  #allocation6 [shape = 'u8[512]{0}', space=smem, size = 0x200, scoped, tag = 'prefetched SMEM operand 0']
  #allocation7 [shape = 'u8[512]{0}', space=smem, size = 0x200, scoped, tag = 'prefetched SMEM operand 1']
  #allocation17 [shape = 's32[]', space=sflag, size = 0x4, offset = 0, fixed_abs, tag = 'sflag constant byte address 0x0 - dummy sync flag']
  #allocation18 [shape = 's32[]', space=sflag, size = 0x4, offset = 0, fixed_abs, tag = 'sflag constant byte address 0x0 - dummy sync flag']
  #allocation19 [shape = 's32[]', space=sflag, size = 0x4, offset = 0, fixed_abs, tag = 'sflag constant byte address 0x0 - dummy sync flag']
  #allocation20 [shape = 's32[]', space=sflag, size = 0x4, offset = 0, fixed_abs, tag = 'sflag constant byte address 0x0 - dummy sync flag']
  #allocation21 [shape = 's32[]', space=sflag, size = 0x4, offset = 0, fixed_abs, tag = 'sflag constant byte address 0x0 - dummy sync flag']
  #allocation22 [shape = 's32[]', space=sflag, size = 0x4, offset = 0, fixed_abs, tag = 'sflag constant byte address 0x0 - dummy sync flag']
  #allocation23 [shape = 's32[]', space=sflag, size = 0x4, offset = 0, fixed_abs, tag = 'sflag constant byte address 0x0 - dummy sync flag']
  #allocation24 [shape = 's32[]', space=sflag, size = 0x4, offset = 0, fixed_abs, tag = 'sflag constant byte address 0x0 - dummy sync flag']
  #allocation25 [shape = 's32[]', space=sflag, size = 0x4, offset = 0, fixed_abs, tag = 'sflag constant byte address 0x0 - dummy sync flag']
  #allocation26 [shape = 's32[]', space=sflag, size = 0x4, offset = 0, fixed_abs, tag = 'sflag constant byte address 0x0 - dummy sync flag']
  #allocation27 [shape = 's32[]', space=sflag, size = 0x4, offset = 0, fixed_abs, tag = 'sflag constant byte address 0x0 - dummy sync flag']
  #allocation28 [shape = 's32[]', space=sflag, size = 0x4, offset = 0, fixed_abs, tag = 'sflag constant byte address 0x0 - dummy sync flag']
  #allocation29 [shape = 's32[]', space=sflag, size = 0x4, offset = 0, fixed_abs, tag = 'sflag constant byte address 0x0 - dummy sync flag']
  #allocation30 [shape = 's32[]', space=sflag, size = 0x4, offset = 0, fixed_abs, tag = 'sflag constant byte address 0x0 - dummy sync flag']
  #allocation31 [shape = 's32[]', space=sflag, size = 0x4, offset = 0, fixed_abs, tag = 'sflag constant byte address 0x0 - dummy sync flag']
  #allocation32 [shape = 's32[]', space=sflag, size = 0x4, offset = 0, fixed_abs, tag = 'sflag constant byte address 0x0 - dummy sync flag']
  #allocation33 [shape = 's32[]', space=sflag, size = 0x4, offset = 0, fixed_abs, tag = 'sflag constant byte address 0x0 - dummy sync flag']
  #allocation34 [shape = 's32[]', space=sflag, size = 0x4, offset = 0, fixed_abs, tag = 'sflag constant byte address 0x0 - dummy sync flag']
  #allocation35 [shape = 's32[]', space=sflag, size = 0x4, offset = 0, fixed_abs, tag = 'sflag constant byte address 0x0 - dummy sync flag']
  #allocation36 [shape = 's32[]', space=sflag, size = 0x4, offset = 0, fixed_abs, tag = 'sflag constant byte address 0x0 - dummy sync flag']
  #allocation37 [shape = 's32[]', space=sflag, size = 0x4, offset = 0, fixed_abs, tag = 'sflag constant byte address 0x0 - dummy sync flag']
  #allocation38 [shape = 's32[]', space=sflag, size = 0x4, offset = 0, fixed_abs, tag = 'sflag constant byte address 0x0 - dummy sync flag']
  #allocation39 [shape = 's32[]', space=sflag, size = 0x4, offset = 0, fixed_abs, tag = 'sflag constant byte address 0x0 - dummy sync flag']
  #allocation40 [shape = 's32[]', space=sflag, size = 0x4, offset = 0, fixed_abs, tag = 'sflag constant byte address 0x0 - dummy sync flag']
  #allocation41 [shape = 's32[]', space=sflag, size = 0x4, offset = 0, fixed_abs, tag = 'sflag constant byte address 0x0 - dummy sync flag']
  #allocation42 [shape = 's32[]', space=sflag, size = 0x4, offset = 0, fixed_abs, tag = 'sflag constant byte address 0x0 - dummy sync flag']
  #allocation43 [shape = 's32[]', space=sflag, size = 0x4, offset = 0, fixed_abs, tag = 'sflag constant byte address 0x0 - dummy sync flag']
  #allocation44 [shape = 's32[]', space=sflag, size = 0x4, offset = 0, fixed_abs, tag = 'sflag constant byte address 0x0 - dummy sync flag']
  #allocation45 [shape = 's32[]', space=sflag, size = 0x4, offset = 0, fixed_abs, tag = 'sflag constant byte address 0x0 - dummy sync flag']
  #allocation46 [shape = 's32[]', space=sflag, size = 0x4, offset = 0, fixed_abs, tag = 'sflag constant byte address 0x0 - dummy sync flag']
  #allocation47 [shape = 's32[]', space=sflag, size = 0x4, offset = 0, fixed_abs, tag = 'sflag constant byte address 0x0 - dummy sync flag']
  #allocation48 [shape = 's32[]', space=sflag, size = 0x4, offset = 0, fixed_abs, tag = 'sflag constant byte address 0x0 - dummy sync flag']
  %s0 = inlined_call_operand.hbm [shape: s32[8], index: 0, kind: input, shape index: {}]
  %s1 = inlined_call_operand.vmem [shape: s32[8], index: 1, kind: input, shape index: {}]
  %s2 = inlined_call_operand.hbm [shape: f32[16,768], index: 2, kind: input, shape index: {}]
  %s3 = inlined_call_operand.hbm [shape: f32[16,768], index: 3, kind: input, shape index: {}]
  %s4 = inlined_call_operand.hbm [shape: bf16[768,128], index: 4, kind: input, shape index: {}]
  %s5 = inlined_call_operand.hbm [shape: bf16[768,128], index: 5, kind: input, shape index: {}]
  %s6 = inlined_call_operand.hbm [shape: bf16[128,128], index: 6, kind: input, shape index: {}]
  %s7 = inlined_call_operand.hbm [shape: bf16[128,128], index: 7, kind: input, shape index: {}]
  %s8 = inlined_call_operand.vmem [shape: f32[1,128], index: 8, kind: input, shape index: {}]
  %s9 = inlined_call_operand.vmem [shape: f32[1,128], index: 9, kind: input, shape index: {}]
  %s10 = inlined_call_operand.vmem [shape: f32[1,128], index: 10, kind: input, shape index: {}]
  %s11 = inlined_call_operand.hbm [shape: f32[8,128], index: 11, kind: output, shape index: {}]
  %s12 = sld [smem:[#allocation0]]
  $region62: #{tpu_custom_call.1} parent=0
    _
  %s14 = ssub.s32 1, %s12
  %s15 = scalar_select 0, %s14, %s12
  %17 = dma.hbm_to_smem %s0, 16, [#allocation6], [#allocation5]
  %s18 = sshll.u32 %s1, 4
  %s19 = int_to_ptr.vmem [resolvable:$true] %s18
  %21 = dma.vmem_to_smem %s19, 16, [#allocation7], [#allocation5]
  %22 = dma.done [#allocation5], 32
  %23 = sfence
  $region1: #{tpu_custom_call.1} parent=0
    #allocation8 [shape = 'u8[196608]{0}', space=vmem, size = 0x30000, scoped, tag = 'input window, operand 4, single buffered']
    #allocation9 [shape = 's32[1]{0}', space=sflag, size = 0x4, scoped, tag = 'scoped memory for tpu_custom_call.1']
    #allocation10 [shape = 's32[1]{0}', space=sflag, size = 0x4, scoped, tag = 'scoped memory for tpu_custom_call.1']
    #allocation11 [shape = 'u8[196608]{0}', space=vmem, size = 0x30000, scoped, tag = 'input window, operand 5, single buffered']
    #allocation12 [shape = 's32[1]{0}', space=sflag, size = 0x4, scoped, tag = 'scoped memory for tpu_custom_call.1']
    #allocation13 [shape = 'u8[32768]{0}', space=vmem, size = 0x8000, scoped, tag = 'input window, operand 6, single buffered']
    #allocation14 [shape = 'u8[32768]{0}', space=vmem, size = 0x8000, scoped, tag = 'input window, operand 7, single buffered']
    #allocation15 [shape = 's32[1]{0}', space=sflag, size = 0x4, scoped, tag = 'scoped memory for tpu_custom_call.1']
    #allocation16 [shape = 'u8[4096]{0}', space=vmem, size = 0x1000, scoped, tag = 'output window, operand 0, single buffered']
    %24 = vsyncpa [#allocation9], 0
    %25 = vsyncpa [#allocation12], 0
    %26 = vsyncpa [#allocation15], 0
    %27 = vsyncpa [#allocation10], 0
    // Predicated region
    $region2: #{tpu_custom_call.1} parent=1 // pred_check
      _
    $region3: #{tpu_custom_call.1} parent=1 // pred_check_branch
      %29 = sbr.rel (0) target = $region5
    $region4: #{tpu_custom_call.1} parent=1 // pred_region
      %s31 = ssub.s32 6144, 6144
      %32 = vsyncadd [#allocation9], %s31
      %s33 = sshll.u32 [#allocation8], 4
      %s34 = int_to_ptr.vmem [resolvable:$true] %s33
      %39 = dma.hbm_to_vmem [thread:$0]  %s4, 6144, %s34, [#allocation9], 64, 64, 4
    $region5: #{tpu_custom_call.1} parent=1 // pred_fallthru
      _
    // Predicated region
    $region6: #{tpu_custom_call.1} parent=1 // pred_check
      _
    $region7: #{tpu_custom_call.1} parent=1 // pred_check_branch
      %41 = sbr.rel (0) target = $region9
    $region8: #{tpu_custom_call.1} parent=1 // pred_region
      %s43 = ssub.s32 6144, 6144
      %44 = vsyncadd [#allocation12], %s43
      %s45 = sshll.u32 [#allocation11], 4
      %s46 = int_to_ptr.vmem [resolvable:$true] %s45
      %51 = dma.hbm_to_vmem [thread:$0]  %s5, 6144, %s46, [#allocation12], 64, 64, 4
    $region9: #{tpu_custom_call.1} parent=1 // pred_fallthru
      _
    // Predicated region
    $region10: #{tpu_custom_call.1} parent=1 // pred_check
      _
    $region11: #{tpu_custom_call.1} parent=1 // pred_check_branch
      %53 = sbr.rel (0) target = $region13
    $region12: #{tpu_custom_call.1} parent=1 // pred_region
      %s55 = ssub.s32 1024, 1024
      %56 = vsyncadd [#allocation12], %s55
      %s57 = sshll.u32 [#allocation13], 4
      %s58 = int_to_ptr.vmem [resolvable:$true] %s57
      %63 = dma.hbm_to_vmem [thread:$0]  %s6, 1024, %s58, [#allocation12], 64, 64, 4
    $region13: #{tpu_custom_call.1} parent=1 // pred_fallthru
      _
    // Predicated region
    $region14: #{tpu_custom_call.1} parent=1 // pred_check
      _
    $region15: #{tpu_custom_call.1} parent=1 // pred_check_branch
      %65 = sbr.rel (0) target = $region17
    $region16: #{tpu_custom_call.1} parent=1 // pred_region
      %s67 = ssub.s32 1024, 1024
      %68 = vsyncadd [#allocation15], %s67
      %s69 = sshll.u32 [#allocation14], 4
      %s70 = int_to_ptr.vmem [resolvable:$true] %s69
      %75 = dma.hbm_to_vmem [thread:$0]  %s7, 1024, %s70, [#allocation15], 64, 64, 4
    $region17: #{tpu_custom_call.1} parent=1 // pred_fallthru
      _
    // Predicated region
    $region18: #{tpu_custom_call.1} parent=1 // pred_check
      _
    $region19: #{tpu_custom_call.1} parent=1 // pred_check_branch
      %77 = sbr.rel (0) target = $region21
    $region20: #{tpu_custom_call.1} parent=1 // pred_region
      _
    $region21: #{tpu_custom_call.1} parent=1 // pred_fallthru
      _
    // Predicated region
    $region22: #{tpu_custom_call.1} parent=1 // pred_check
      _
    $region23: #{tpu_custom_call.1} parent=1 // pred_check_branch
      %79 = sbr.rel (0) target = $region25
    $region24: #{tpu_custom_call.1} parent=1 // pred_region
      _
    $region25: #{tpu_custom_call.1} parent=1 // pred_fallthru
      _
    // Predicated region
    $region26: #{tpu_custom_call.1} parent=1 // pred_check
      _
    $region27: #{tpu_custom_call.1} parent=1 // pred_check_branch
      %81 = sbr.rel (0) target = $region29
    $region28: #{tpu_custom_call.1} parent=1 // pred_region
      _
    $region29: #{tpu_custom_call.1} parent=1 // pred_fallthru
      _
    // Predicated region
    $region30: #{tpu_custom_call.1} parent=1 // pred_check
      _
    $region31: #{tpu_custom_call.1} parent=1 // pred_check_branch
      %83 = sbr.rel (0) target = $region33
    $region32: #{tpu_custom_call.1} parent=1 // pred_region
      %84 = dma.done [#allocation9], 6144
    $region33: #{tpu_custom_call.1} parent=1 // pred_fallthru
      _
    // Predicated region
    $region34: #{tpu_custom_call.1} parent=1 // pred_check
      _
    $region35: #{tpu_custom_call.1} parent=1 // pred_check_branch
      %86 = sbr.rel (0) target = $region37
    $region36: #{tpu_custom_call.1} parent=1 // pred_region
      %87 = dma.done [#allocation12], 6144
    $region37: #{tpu_custom_call.1} parent=1 // pred_fallthru
      _
    // Predicated region
    $region38: #{tpu_custom_call.1} parent=1 // pred_check
      _
    $region39: #{tpu_custom_call.1} parent=1 // pred_check_branch
      %89 = sbr.rel (0) target = $region41
    $region40: #{tpu_custom_call.1} parent=1 // pred_region
      %90 = dma.done [#allocation12], 1024
    $region41: #{tpu_custom_call.1} parent=1 // pred_fallthru
      _
    // Predicated region
    $region42: #{tpu_custom_call.1} parent=1 // pred_check
      _
    $region43: #{tpu_custom_call.1} parent=1 // pred_check_branch
      %92 = sbr.rel (0) target = $region45
    $region44: #{tpu_custom_call.1} parent=1 // pred_region
      %93 = dma.done [#allocation15], 1024
    $region45: #{tpu_custom_call.1} parent=1 // pred_fallthru
      _
    %s95 = ssub.s32 0, 0
    %s96 = ssub.s32 0, 0
    %p97 = scmp.ne.s32.totalorder 0, 0
    %p98 = scmp.lt.s32.totalorder 0, 0
    %p99 = pnand %p98, %p97
    %p100 = pneg %p99
    %s101 = sadd.s32 0, 2
    %s102 = scalar_select %p100, %s101, 0
    %p103 = scmp.eq.s32.totalorder 0, 0
    // Predicated region
    $region46: #{tpu_custom_call.1} parent=1 // pred_check
      %p104 = pneg %p103
    $region47: #{tpu_custom_call.1} parent=1 // pred_check_branch
      %106 = sbr.rel (%p104) target = $region49
    $region48: #{tpu_custom_call.1} parent=1 // pred_region
      %s107 = sld [smem:[#allocation6]]
      %s108 = sld [smem:[#allocation7]]
      %s109 = sshrl.u32 %s107, 3
      %s110 = sand.u32 %s107, 7
      %s111 = smul.u32 %s109, 48
      %s112 = sadd.s32 %s110, %s111
      %s113 = smul.addr %s112, 16
      %s114 = scalar_lea.hbm %s2, %s113
      %s116 = sshll.u32 [#allocation2], 4
      %s117 = int_to_ptr.vmem [resolvable:$true] %s116
      %119 = dma.hbm_to_vmem [thread:$0]  %s114, 96, %s117, [#allocation4], 128, 128, 1
      %s120 = sshrl.u32 %s108, 3
      %s121 = sand.u32 %s108, 7
      %s122 = smul.u32 %s120, 48
      %s123 = sadd.s32 %s121, %s122
      %s124 = smul.addr %s123, 16
      %s125 = scalar_lea.hbm %s3, %s124
      %s126 = scalar_lea.sflag [#allocation4], 16
      %s128 = sshll.u32 [#allocation3], 4
      %s129 = int_to_ptr.vmem [resolvable:$true] %s128
      %131 = dma.hbm_to_vmem [thread:$0]  %s125, 96, %s129, %s126, 128, 128, 1
      %s132 = sld [smem:[#allocation6 + $0x1]]
      %s133 = sld [smem:[#allocation7 + $0x1]]
      %s134 = sshrl.u32 %s132, 3
      %s135 = sand.u32 %s132, 7
      %s136 = smul.u32 %s134, 48
      %s137 = sadd.s32 %s135, %s136
      %s138 = smul.addr %s137, 16
      %s139 = scalar_lea.hbm %s2, %s138
      %s140 = scalar_lea.vmem [#allocation2], 1
      %s141 = scalar_lea.sflag [#allocation4], 1
      %s143 = sshll.u32 %s140, 4
      %s144 = int_to_ptr.vmem [resolvable:$true] %s143
      %146 = dma.hbm_to_vmem [thread:$0]  %s139, 96, %s144, %s141, 128, 128, 1
      %s147 = sshrl.u32 %s133, 3
      %s148 = sand.u32 %s133, 7
      %s149 = smul.u32 %s147, 48
      %s150 = sadd.s32 %s148, %s149
      %s151 = smul.addr %s150, 16
      %s152 = scalar_lea.hbm %s3, %s151
      %s153 = scalar_lea.vmem [#allocation3], 1
      %s154 = scalar_lea.sflag [#allocation4], 17
      %s156 = sshll.u32 %s153, 4
      %s157 = int_to_ptr.vmem [resolvable:$true] %s156
      %159 = dma.hbm_to_vmem [thread:$0]  %s152, 96, %s157, %s154, 128, 128, 1
      %s160 = sld [smem:[#allocation6 + $0x2]]
      %s161 = sld [smem:[#allocation7 + $0x2]]
      %s162 = sshrl.u32 %s160, 3
      %s163 = sand.u32 %s160, 7
      %s164 = smul.u32 %s162, 48
      %s165 = sadd.s32 %s163, %s164
      %s166 = smul.addr %s165, 16
      %s167 = scalar_lea.hbm %s2, %s166
      %s168 = scalar_lea.vmem [#allocation2], 2
      %s169 = scalar_lea.sflag [#allocation4], 2
      %s171 = sshll.u32 %s168, 4
      %s172 = int_to_ptr.vmem [resolvable:$true] %s171
      %174 = dma.hbm_to_vmem [thread:$0]  %s167, 96, %s172, %s169, 128, 128, 1
      %s175 = sshrl.u32 %s161, 3
      %s176 = sand.u32 %s161, 7
      %s177 = smul.u32 %s175, 48
      %s178 = sadd.s32 %s176, %s177
      %s179 = smul.addr %s178, 16
      %s180 = scalar_lea.hbm %s3, %s179
      %s181 = scalar_lea.vmem [#allocation3], 2
      %s182 = scalar_lea.sflag [#allocation4], 18
      %s184 = sshll.u32 %s181, 4
      %s185 = int_to_ptr.vmem [resolvable:$true] %s184
      %187 = dma.hbm_to_vmem [thread:$0]  %s180, 96, %s185, %s182, 128, 128, 1
      %s188 = sld [smem:[#allocation6 + $0x3]]
      %s189 = sld [smem:[#allocation7 + $0x3]]
      %s190 = sshrl.u32 %s188, 3
      %s191 = sand.u32 %s188, 7
      %s192 = smul.u32 %s190, 48
      %s193 = sadd.s32 %s191, %s192
      %s194 = smul.addr %s193, 16
      %s195 = scalar_lea.hbm %s2, %s194
      %s196 = scalar_lea.vmem [#allocation2], 3
      %s197 = scalar_lea.sflag [#allocation4], 3
      %s199 = sshll.u32 %s196, 4
      %s200 = int_to_ptr.vmem [resolvable:$true] %s199
      %202 = dma.hbm_to_vmem [thread:$0]  %s195, 96, %s200, %s197, 128, 128, 1
      %s203 = sshrl.u32 %s189, 3
      %s204 = sand.u32 %s189, 7
      %s205 = smul.u32 %s203, 48
      %s206 = sadd.s32 %s204, %s205
      %s207 = smul.addr %s206, 16
      %s208 = scalar_lea.hbm %s3, %s207
      %s209 = scalar_lea.vmem [#allocation3], 3
      %s210 = scalar_lea.sflag [#allocation4], 19
      %s212 = sshll.u32 %s209, 4
      %s213 = int_to_ptr.vmem [resolvable:$true] %s212
      %215 = dma.hbm_to_vmem [thread:$0]  %s208, 96, %s213, %s210, 128, 128, 1
      %s216 = sld [smem:[#allocation6 + $0x4]]
      %s217 = sld [smem:[#allocation7 + $0x4]]
      %s218 = sshrl.u32 %s216, 3
      %s219 = sand.u32 %s216, 7
      %s220 = smul.u32 %s218, 48
      %s221 = sadd.s32 %s219, %s220
      %s222 = smul.addr %s221, 16
      %s223 = scalar_lea.hbm %s2, %s222
      %s224 = scalar_lea.vmem [#allocation2], 4
      %s225 = scalar_lea.sflag [#allocation4], 4
      %s227 = sshll.u32 %s224, 4
      %s228 = int_to_ptr.vmem [resolvable:$true] %s227
      %230 = dma.hbm_to_vmem [thread:$0]  %s223, 96, %s228, %s225, 128, 128, 1
      %s231 = sshrl.u32 %s217, 3
      %s232 = sand.u32 %s217, 7
      %s233 = smul.u32 %s231, 48
      %s234 = sadd.s32 %s232, %s233
      %s235 = smul.addr %s234, 16
      %s236 = scalar_lea.hbm %s3, %s235
      %s237 = scalar_lea.vmem [#allocation3], 4
      %s238 = scalar_lea.sflag [#allocation4], 20
      %s240 = sshll.u32 %s237, 4
      %s241 = int_to_ptr.vmem [resolvable:$true] %s240
      %243 = dma.hbm_to_vmem [thread:$0]  %s236, 96, %s241, %s238, 128, 128, 1
      %s244 = sld [smem:[#allocation6 + $0x5]]
      %s245 = sld [smem:[#allocation7 + $0x5]]
      %s246 = sshrl.u32 %s244, 3
      %s247 = sand.u32 %s244, 7
      %s248 = smul.u32 %s246, 48
      %s249 = sadd.s32 %s247, %s248
      %s250 = smul.addr %s249, 16
      %s251 = scalar_lea.hbm %s2, %s250
      %s252 = scalar_lea.vmem [#allocation2], 5
      %s253 = scalar_lea.sflag [#allocation4], 5
      %s255 = sshll.u32 %s252, 4
      %s256 = int_to_ptr.vmem [resolvable:$true] %s255
      %258 = dma.hbm_to_vmem [thread:$0]  %s251, 96, %s256, %s253, 128, 128, 1
      %s259 = sshrl.u32 %s245, 3
      %s260 = sand.u32 %s245, 7
      %s261 = smul.u32 %s259, 48
      %s262 = sadd.s32 %s260, %s261
      %s263 = smul.addr %s262, 16
      %s264 = scalar_lea.hbm %s3, %s263
      %s265 = scalar_lea.vmem [#allocation3], 5
      %s266 = scalar_lea.sflag [#allocation4], 21
      %s268 = sshll.u32 %s265, 4
      %s269 = int_to_ptr.vmem [resolvable:$true] %s268
      %271 = dma.hbm_to_vmem [thread:$0]  %s264, 96, %s269, %s266, 128, 128, 1
      %s272 = sld [smem:[#allocation6 + $0x6]]
      %s273 = sld [smem:[#allocation7 + $0x6]]
      %s274 = sshrl.u32 %s272, 3
      %s275 = sand.u32 %s272, 7
      %s276 = smul.u32 %s274, 48
      %s277 = sadd.s32 %s275, %s276
      %s278 = smul.addr %s277, 16
      %s279 = scalar_lea.hbm %s2, %s278
      %s280 = scalar_lea.vmem [#allocation2], 6
      %s281 = scalar_lea.sflag [#allocation4], 6
      %s283 = sshll.u32 %s280, 4
      %s284 = int_to_ptr.vmem [resolvable:$true] %s283
      %286 = dma.hbm_to_vmem [thread:$0]  %s279, 96, %s284, %s281, 128, 128, 1
      %s287 = sshrl.u32 %s273, 3
      %s288 = sand.u32 %s273, 7
      %s289 = smul.u32 %s287, 48
      %s290 = sadd.s32 %s288, %s289
      %s291 = smul.addr %s290, 16
      %s292 = scalar_lea.hbm %s3, %s291
      %s293 = scalar_lea.vmem [#allocation3], 6
      %s294 = scalar_lea.sflag [#allocation4], 22
      %s296 = sshll.u32 %s293, 4
      %s297 = int_to_ptr.vmem [resolvable:$true] %s296
      %299 = dma.hbm_to_vmem [thread:$0]  %s292, 96, %s297, %s294, 128, 128, 1
      %s300 = sld [smem:[#allocation6 + $0x7]]
      %s301 = sld [smem:[#allocation7 + $0x7]]
      %s302 = sshrl.u32 %s300, 3
      %s303 = sand.u32 %s300, 7
      %s304 = smul.u32 %s302, 48
      %s305 = sadd.s32 %s303, %s304
      %s306 = smul.addr %s305, 16
      %s307 = scalar_lea.hbm %s2, %s306
      %s308 = scalar_lea.vmem [#allocation2], 7
      %s309 = scalar_lea.sflag [#allocation4], 7
      %s311 = sshll.u32 %s308, 4
      %s312 = int_to_ptr.vmem [resolvable:$true] %s311
      %314 = dma.hbm_to_vmem [thread:$0]  %s307, 96, %s312, %s309, 128, 128, 1
      %s315 = sshrl.u32 %s301, 3
      %s316 = sand.u32 %s301, 7
      %s317 = smul.u32 %s315, 48
      %s318 = sadd.s32 %s316, %s317
      %s319 = smul.addr %s318, 16
      %s320 = scalar_lea.hbm %s3, %s319
      %s321 = scalar_lea.vmem [#allocation3], 7
      %s322 = scalar_lea.sflag [#allocation4], 23
      %s324 = sshll.u32 %s321, 4
      %s325 = int_to_ptr.vmem [resolvable:$true] %s324
      %327 = dma.hbm_to_vmem [thread:$0]  %s320, 96, %s325, %s322, 128, 128, 1
    $region49: #{tpu_custom_call.1} parent=1 // pred_fallthru
      _
    %s328 = sadd.s32 0, 1
    %p329 = scmp.lt.s32.totalorder %s328, 1
    // Predicated region
    $region50: #{tpu_custom_call.1} parent=1 // pred_check
      %p330 = pneg %p329
    $region51: #{tpu_custom_call.1} parent=1 // pred_check_branch
      %332 = sbr.rel (%p330) target = $region53
    $region52: #{tpu_custom_call.1} parent=1 // pred_region
      %s333 = ssub.s32 1, %s102
      %s334 = smul.u32 %s328, 8
      %s335 = sld [smem:[#allocation6 + %s334]]
      %s336 = sld [smem:[#allocation7 + %s334]]
      %s337 = sshrl.u32 %s335, 3
      %s338 = sand.u32 %s335, 7
      %s339 = smul.u32 %s337, 48
      %s340 = sadd.s32 %s338, %s339
      %s341 = smul.addr %s340, 16
      %s342 = scalar_lea.hbm %s2, %s341
      %s343 = smul.u32 %s333, 48
      %s344 = scalar_lea.vmem [#allocation2], %s343
      %s345 = smul.u32 %s333, 8
      %s346 = scalar_lea.sflag [#allocation4], %s345
      %s348 = sshll.u32 %s344, 4
      %s349 = int_to_ptr.vmem [resolvable:$true] %s348
      %351 = dma.hbm_to_vmem [thread:$0]  %s342, 96, %s349, %s346, 128, 128, 1
      %s352 = sshrl.u32 %s336, 3
      %s353 = sand.u32 %s336, 7
      %s354 = smul.u32 %s352, 48
      %s355 = sadd.s32 %s353, %s354
      %s356 = smul.addr %s355, 16
      %s357 = scalar_lea.hbm %s3, %s356
      %s358 = scalar_lea.vmem [#allocation3], %s343
      %s359 = sadd.s32 %s345, 16
      %s360 = scalar_lea.sflag [#allocation4], %s359
      %s362 = sshll.u32 %s358, 4
      %s363 = int_to_ptr.vmem [resolvable:$true] %s362
      %365 = dma.hbm_to_vmem [thread:$0]  %s357, 96, %s363, %s360, 128, 128, 1
      %s366 = sadd.s32 %s334, 1
      %s367 = sld [smem:[#allocation6 + %s366]]
      %s368 = sld [smem:[#allocation7 + %s366]]
      %s369 = sshrl.u32 %s367, 3
      %s370 = sand.u32 %s367, 7
      %s371 = smul.u32 %s369, 48
      %s372 = sadd.s32 %s370, %s371
      %s373 = smul.addr %s372, 16
      %s374 = scalar_lea.hbm %s2, %s373
      %s375 = sadd.s32 1, %s343
      %s376 = scalar_lea.vmem [#allocation2], %s375
      %s377 = sadd.s32 1, %s345
      %s378 = scalar_lea.sflag [#allocation4], %s377
      %s380 = sshll.u32 %s376, 4
      %s381 = int_to_ptr.vmem [resolvable:$true] %s380
      %383 = dma.hbm_to_vmem [thread:$0]  %s374, 96, %s381, %s378, 128, 128, 1
      %s384 = sshrl.u32 %s368, 3
      %s385 = sand.u32 %s368, 7
      %s386 = smul.u32 %s384, 48
      %s387 = sadd.s32 %s385, %s386
      %s388 = smul.addr %s387, 16
      %s389 = scalar_lea.hbm %s3, %s388
      %s390 = scalar_lea.vmem [#allocation3], %s375
      %s391 = sadd.s32 %s377, 16
      %s392 = scalar_lea.sflag [#allocation4], %s391
      %s394 = sshll.u32 %s390, 4
      %s395 = int_to_ptr.vmem [resolvable:$true] %s394
      %397 = dma.hbm_to_vmem [thread:$0]  %s389, 96, %s395, %s392, 128, 128, 1
      %s398 = sadd.s32 %s334, 2
      %s399 = sld [smem:[#allocation6 + %s398]]
      %s400 = sld [smem:[#allocation7 + %s398]]
      %s401 = sshrl.u32 %s399, 3
      %s402 = sand.u32 %s399, 7
      %s403 = smul.u32 %s401, 48
      %s404 = sadd.s32 %s402, %s403
      %s405 = smul.addr %s404, 16
      %s406 = scalar_lea.hbm %s2, %s405
      %s407 = sadd.s32 2, %s343
      %s408 = scalar_lea.vmem [#allocation2], %s407
      %s409 = sadd.s32 2, %s345
      %s410 = scalar_lea.sflag [#allocation4], %s409
      %s412 = sshll.u32 %s408, 4
      %s413 = int_to_ptr.vmem [resolvable:$true] %s412
      %415 = dma.hbm_to_vmem [thread:$0]  %s406, 96, %s413, %s410, 128, 128, 1
      %s416 = sshrl.u32 %s400, 3
      %s417 = sand.u32 %s400, 7
      %s418 = smul.u32 %s416, 48
      %s419 = sadd.s32 %s417, %s418
      %s420 = smul.addr %s419, 16
      %s421 = scalar_lea.hbm %s3, %s420
      %s422 = scalar_lea.vmem [#allocation3], %s407
      %s423 = sadd.s32 %s409, 16
      %s424 = scalar_lea.sflag [#allocation4], %s423
      %s426 = sshll.u32 %s422, 4
      %s427 = int_to_ptr.vmem [resolvable:$true] %s426
      %429 = dma.hbm_to_vmem [thread:$0]  %s421, 96, %s427, %s424, 128, 128, 1
      %s430 = sadd.s32 %s334, 3
      %s431 = sld [smem:[#allocation6 + %s430]]
      %s432 = sld [smem:[#allocation7 + %s430]]
      %s433 = sshrl.u32 %s431, 3
      %s434 = sand.u32 %s431, 7
      %s435 = smul.u32 %s433, 48
      %s436 = sadd.s32 %s434, %s435
      %s437 = smul.addr %s436, 16
      %s438 = scalar_lea.hbm %s2, %s437
      %s439 = sadd.s32 3, %s343
      %s440 = scalar_lea.vmem [#allocation2], %s439
      %s441 = sadd.s32 3, %s345
      %s442 = scalar_lea.sflag [#allocation4], %s441
      %s444 = sshll.u32 %s440, 4
      %s445 = int_to_ptr.vmem [resolvable:$true] %s444
      %447 = dma.hbm_to_vmem [thread:$0]  %s438, 96, %s445, %s442, 128, 128, 1
      %s448 = sshrl.u32 %s432, 3
      %s449 = sand.u32 %s432, 7
      %s450 = smul.u32 %s448, 48
      %s451 = sadd.s32 %s449, %s450
      %s452 = smul.addr %s451, 16
      %s453 = scalar_lea.hbm %s3, %s452
      %s454 = scalar_lea.vmem [#allocation3], %s439
      %s455 = sadd.s32 %s441, 16
      %s456 = scalar_lea.sflag [#allocation4], %s455
      %s458 = sshll.u32 %s454, 4
      %s459 = int_to_ptr.vmem [resolvable:$true] %s458
      %461 = dma.hbm_to_vmem [thread:$0]  %s453, 96, %s459, %s456, 128, 128, 1
      %s462 = sadd.s32 %s334, 4
      %s463 = sld [smem:[#allocation6 + %s462]]
      %s464 = sld [smem:[#allocation7 + %s462]]
      %s465 = sshrl.u32 %s463, 3
      %s466 = sand.u32 %s463, 7
      %s467 = smul.u32 %s465, 48
      %s468 = sadd.s32 %s466, %s467
      %s469 = smul.addr %s468, 16
      %s470 = scalar_lea.hbm %s2, %s469
      %s471 = sadd.s32 4, %s343
      %s472 = scalar_lea.vmem [#allocation2], %s471
      %s473 = sadd.s32 4, %s345
      %s474 = scalar_lea.sflag [#allocation4], %s473
      %s476 = sshll.u32 %s472, 4
      %s477 = int_to_ptr.vmem [resolvable:$true] %s476
      %479 = dma.hbm_to_vmem [thread:$0]  %s470, 96, %s477, %s474, 128, 128, 1
      %s480 = sshrl.u32 %s464, 3
      %s481 = sand.u32 %s464, 7
      %s482 = smul.u32 %s480, 48
      %s483 = sadd.s32 %s481, %s482
      %s484 = smul.addr %s483, 16
      %s485 = scalar_lea.hbm %s3, %s484
      %s486 = scalar_lea.vmem [#allocation3], %s471
      %s487 = sadd.s32 %s473, 16
      %s488 = scalar_lea.sflag [#allocation4], %s487
      %s490 = sshll.u32 %s486, 4
      %s491 = int_to_ptr.vmem [resolvable:$true] %s490
      %493 = dma.hbm_to_vmem [thread:$0]  %s485, 96, %s491, %s488, 128, 128, 1
      %s494 = sadd.s32 %s334, 5
      %s495 = sld [smem:[#allocation6 + %s494]]
      %s496 = sld [smem:[#allocation7 + %s494]]
      %s497 = sshrl.u32 %s495, 3
      %s498 = sand.u32 %s495, 7
      %s499 = smul.u32 %s497, 48
      %s500 = sadd.s32 %s498, %s499
      %s501 = smul.addr %s500, 16
      %s502 = scalar_lea.hbm %s2, %s501
      %s503 = sadd.s32 5, %s343
      %s504 = scalar_lea.vmem [#allocation2], %s503
      %s505 = sadd.s32 5, %s345
      %s506 = scalar_lea.sflag [#allocation4], %s505
      %s508 = sshll.u32 %s504, 4
      %s509 = int_to_ptr.vmem [resolvable:$true] %s508
      %511 = dma.hbm_to_vmem [thread:$0]  %s502, 96, %s509, %s506, 128, 128, 1
      %s512 = sshrl.u32 %s496, 3
      %s513 = sand.u32 %s496, 7
      %s514 = smul.u32 %s512, 48
      %s515 = sadd.s32 %s513, %s514
      %s516 = smul.addr %s515, 16
      %s517 = scalar_lea.hbm %s3, %s516
      %s518 = scalar_lea.vmem [#allocation3], %s503
      %s519 = sadd.s32 %s505, 16
      %s520 = scalar_lea.sflag [#allocation4], %s519
      %s522 = sshll.u32 %s518, 4
      %s523 = int_to_ptr.vmem [resolvable:$true] %s522
      %525 = dma.hbm_to_vmem [thread:$0]  %s517, 96, %s523, %s520, 128, 128, 1
      %s526 = sadd.s32 %s334, 6
      %s527 = sld [smem:[#allocation6 + %s526]]
      %s528 = sld [smem:[#allocation7 + %s526]]
      %s529 = sshrl.u32 %s527, 3
      %s530 = sand.u32 %s527, 7
      %s531 = smul.u32 %s529, 48
      %s532 = sadd.s32 %s530, %s531
      %s533 = smul.addr %s532, 16
      %s534 = scalar_lea.hbm %s2, %s533
      %s535 = sadd.s32 6, %s343
      %s536 = scalar_lea.vmem [#allocation2], %s535
      %s537 = sadd.s32 6, %s345
      %s538 = scalar_lea.sflag [#allocation4], %s537
      %s540 = sshll.u32 %s536, 4
      %s541 = int_to_ptr.vmem [resolvable:$true] %s540
      %543 = dma.hbm_to_vmem [thread:$0]  %s534, 96, %s541, %s538, 128, 128, 1
      %s544 = sshrl.u32 %s528, 3
      %s545 = sand.u32 %s528, 7
      %s546 = smul.u32 %s544, 48
      %s547 = sadd.s32 %s545, %s546
      %s548 = smul.addr %s547, 16
      %s549 = scalar_lea.hbm %s3, %s548
      %s550 = scalar_lea.vmem [#allocation3], %s535
      %s551 = sadd.s32 %s537, 16
      %s552 = scalar_lea.sflag [#allocation4], %s551
      %s554 = sshll.u32 %s550, 4
      %s555 = int_to_ptr.vmem [resolvable:$true] %s554
      %557 = dma.hbm_to_vmem [thread:$0]  %s549, 96, %s555, %s552, 128, 128, 1
      %s558 = sadd.s32 %s334, 7
      %s559 = sld [smem:[#allocation6 + %s558]]
      %s560 = sld [smem:[#allocation7 + %s558]]
      %s561 = sshrl.u32 %s559, 3
      %s562 = sand.u32 %s559, 7
      %s563 = smul.u32 %s561, 48
      %s564 = sadd.s32 %s562, %s563
      %s565 = smul.addr %s564, 16
      %s566 = scalar_lea.hbm %s2, %s565
      %s567 = sadd.s32 7, %s343
      %s568 = scalar_lea.vmem [#allocation2], %s567
      %s569 = sadd.s32 7, %s345
      %s570 = scalar_lea.sflag [#allocation4], %s569
      %s572 = sshll.u32 %s568, 4
      %s573 = int_to_ptr.vmem [resolvable:$true] %s572
      %575 = dma.hbm_to_vmem [thread:$0]  %s566, 96, %s573, %s570, 128, 128, 1
      %s576 = sshrl.u32 %s560, 3
      %s577 = sand.u32 %s560, 7
      %s578 = smul.u32 %s576, 48
      %s579 = sadd.s32 %s577, %s578
      %s580 = smul.addr %s579, 16
      %s581 = scalar_lea.hbm %s3, %s580
      %s582 = scalar_lea.vmem [#allocation3], %s567
      %s583 = sadd.s32 %s569, 16
      %s584 = scalar_lea.sflag [#allocation4], %s583
      %s586 = sshll.u32 %s582, 4
      %s587 = int_to_ptr.vmem [resolvable:$true] %s586
      %589 = dma.hbm_to_vmem [thread:$0]  %s581, 96, %s587, %s584, 128, 128, 1
    $region53: #{tpu_custom_call.1} parent=1 // pred_fallthru
      _
    %s590 = smul.u32 %s102, 8
    %s591 = scalar_lea.sflag [#allocation4], %s590
    %s592 = smul.u32 1, 6
    %s593 = sshll.u32 %s592, 4
    %594 = dma.done %s591, %s593
    %s595 = sadd.s32 %s590, 16
    %s596 = scalar_lea.sflag [#allocation4], %s595
    %s597 = sshll.u32 %s592, 4
    %598 = dma.done %s596, %s597
    %s599 = sadd.s32 1, %s590
    %s600 = scalar_lea.sflag [#allocation4], %s599
    %s601 = sshll.u32 %s592, 4
    %602 = dma.done %s600, %s601
    %s603 = sadd.s32 %s599, 16
    %s604 = scalar_lea.sflag [#allocation4], %s603
    %s605 = sshll.u32 %s592, 4
    %606 = dma.done %s604, %s605
    %s607 = sadd.s32 2, %s590
    %s608 = scalar_lea.sflag [#allocation4], %s607
    %s609 = sshll.u32 %s592, 4
    %610 = dma.done %s608, %s609
    %s611 = sadd.s32 %s607, 16
    %s612 = scalar_lea.sflag [#allocation4], %s611
    %s613 = sshll.u32 %s592, 4
    %614 = dma.done %s612, %s613
    %s615 = sadd.s32 3, %s590
    %s616 = scalar_lea.sflag [#allocation4], %s615
    %s617 = sshll.u32 %s592, 4
    %618 = dma.done %s616, %s617
    %s619 = sadd.s32 %s615, 16
    %s620 = scalar_lea.sflag [#allocation4], %s619
    %s621 = sshll.u32 %s592, 4
    %622 = dma.done %s620, %s621
    %s623 = sadd.s32 4, %s590
    %s624 = scalar_lea.sflag [#allocation4], %s623
    %s625 = sshll.u32 %s592, 4
    %626 = dma.done %s624, %s625
    %s627 = sadd.s32 %s623, 16
    %s628 = scalar_lea.sflag [#allocation4], %s627
    %s629 = sshll.u32 %s592, 4
    %630 = dma.done %s628, %s629
    %s631 = sadd.s32 5, %s590
    %s632 = scalar_lea.sflag [#allocation4], %s631
    %s633 = sshll.u32 %s592, 4
    %634 = dma.done %s632, %s633
    %s635 = sadd.s32 %s631, 16
    %s636 = scalar_lea.sflag [#allocation4], %s635
    %s637 = sshll.u32 %s592, 4
    %638 = dma.done %s636, %s637
    %s639 = sadd.s32 6, %s590
    %s640 = scalar_lea.sflag [#allocation4], %s639
    %s641 = sshll.u32 %s592, 4
    %642 = dma.done %s640, %s641
    %s643 = sadd.s32 %s639, 16
    %s644 = scalar_lea.sflag [#allocation4], %s643
    %s645 = sshll.u32 %s592, 4
    %646 = dma.done %s644, %s645
    %s647 = sadd.s32 7, %s590
    %s648 = scalar_lea.sflag [#allocation4], %s647
    %s649 = sshll.u32 %s592, 4
    %650 = dma.done %s648, %s649
    %s651 = sadd.s32 %s647, 16
    %s652 = scalar_lea.sflag [#allocation4], %s651
    %s653 = sshll.u32 %s592, 4
    %654 = dma.done %s652, %s653
    %s655 = smul.u32 %s102, 6
    %s656 = smul.addr %s655, 8
    %s657 = scalar_lea.vmem [#allocation2], %s656
    %v658 = vld [vmem:[%s657] sm:$0xff]
    %v659 = vld [vmem:[%s657 + $0x8] sm:$0xff]
    %v660 = vld [vmem:[%s657 + $0x10] sm:$0xff]
    %v661 = vld [vmem:[%s657 + $0x18] sm:$0xff]
    %v662 = vld [vmem:[%s657 + $0x20] sm:$0xff]
    %v663 = vld [vmem:[%s657 + $0x28] sm:$0xff]
    %v664 = vpack.c.bf16 %v658, %v658
    %v665 = vpack.c.bf16 %v659, %v659
    %v666 = vpack.c.bf16 %v660, %v660
    %v667 = vpack.c.bf16 %v661, %v661
    %v668 = vpack.c.bf16 %v662, %v662
    %v669 = vpack.c.bf16 %v663, %v663
    %s670 = smul.addr %s655, 8
    %s671 = scalar_lea.vmem [#allocation3], %s670
    %v672 = vld [vmem:[%s671] sm:$0xff]
    %v673 = vld [vmem:[%s671 + $0x8] sm:$0xff]
    %v674 = vld [vmem:[%s671 + $0x10] sm:$0xff]
    %v675 = vld [vmem:[%s671 + $0x18] sm:$0xff]
    %v676 = vld [vmem:[%s671 + $0x20] sm:$0xff]
    %v677 = vld [vmem:[%s671 + $0x28] sm:$0xff]
    %v678 = vpack.c.bf16 %v672, %v672
    %v679 = vpack.c.bf16 %v673, %v673
    %v680 = vpack.c.bf16 %v674, %v674
    %v681 = vpack.c.bf16 %v675, %v675
    %v682 = vpack.c.bf16 %v676, %v676
    %v683 = vpack.c.bf16 %v677, %v677
    %v684 = vld [vmem:[#allocation8] sm:$0xf]
    %v685 = vld [vmem:[#allocation8 + $0x4] sm:$0xf]
    %v686 = vld [vmem:[#allocation8 + $0x8] sm:$0xf]
    %v687 = vld [vmem:[#allocation8 + $0xc] sm:$0xf]
    %v688 = vld [vmem:[#allocation8 + $0x10] sm:$0xf]
    %v689 = vld [vmem:[#allocation8 + $0x14] sm:$0xf]
    %v690 = vld [vmem:[#allocation8 + $0x18] sm:$0xf]
    %v691 = vld [vmem:[#allocation8 + $0x1c] sm:$0xf]
    %v692 = vld [vmem:[#allocation8 + $0x20] sm:$0xf]
    %v693 = vld [vmem:[#allocation8 + $0x24] sm:$0xf]
    %v694 = vld [vmem:[#allocation8 + $0x28] sm:$0xf]
    %v695 = vld [vmem:[#allocation8 + $0x2c] sm:$0xf]
    %v696 = vld [vmem:[#allocation8 + $0x30] sm:$0xf]
    %v697 = vld [vmem:[#allocation8 + $0x34] sm:$0xf]
    %v698 = vld [vmem:[#allocation8 + $0x38] sm:$0xf]
    %v699 = vld [vmem:[#allocation8 + $0x3c] sm:$0xf]
    %v700 = vld [vmem:[#allocation8 + $0x40] sm:$0xf]
    %v701 = vld [vmem:[#allocation8 + $0x44] sm:$0xf]
    %v702 = vld [vmem:[#allocation8 + $0x48] sm:$0xf]
    %v703 = vld [vmem:[#allocation8 + $0x4c] sm:$0xf]
    %v704 = vld [vmem:[#allocation8 + $0x50] sm:$0xf]
    %v705 = vld [vmem:[#allocation8 + $0x54] sm:$0xf]
    %v706 = vld [vmem:[#allocation8 + $0x58] sm:$0xf]
    %v707 = vld [vmem:[#allocation8 + $0x5c] sm:$0xf]
    %v708 = vld [vmem:[#allocation8 + $0x60] sm:$0xf]
    %v709 = vld [vmem:[#allocation8 + $0x64] sm:$0xf]
    %v710 = vld [vmem:[#allocation8 + $0x68] sm:$0xf]
    %v711 = vld [vmem:[#allocation8 + $0x6c] sm:$0xf]
    %v712 = vld [vmem:[#allocation8 + $0x70] sm:$0xf]
    %v713 = vld [vmem:[#allocation8 + $0x74] sm:$0xf]
    %v714 = vld [vmem:[#allocation8 + $0x78] sm:$0xf]
    %v715 = vld [vmem:[#allocation8 + $0x7c] sm:$0xf]
    %v716 = vld [vmem:[#allocation8 + $0x80] sm:$0xf]
    %v717 = vld [vmem:[#allocation8 + $0x84] sm:$0xf]
    %v718 = vld [vmem:[#allocation8 + $0x88] sm:$0xf]
    %v719 = vld [vmem:[#allocation8 + $0x8c] sm:$0xf]
    %v720 = vld [vmem:[#allocation8 + $0x90] sm:$0xf]
    %v721 = vld [vmem:[#allocation8 + $0x94] sm:$0xf]
    %v722 = vld [vmem:[#allocation8 + $0x98] sm:$0xf]
    %v723 = vld [vmem:[#allocation8 + $0x9c] sm:$0xf]
    %v724 = vld [vmem:[#allocation8 + $0xa0] sm:$0xf]
    %v725 = vld [vmem:[#allocation8 + $0xa4] sm:$0xf]
    %v726 = vld [vmem:[#allocation8 + $0xa8] sm:$0xf]
    %v727 = vld [vmem:[#allocation8 + $0xac] sm:$0xf]
    %v728 = vld [vmem:[#allocation8 + $0xb0] sm:$0xf]
    %v729 = vld [vmem:[#allocation8 + $0xb4] sm:$0xf]
    %v730 = vld [vmem:[#allocation8 + $0xb8] sm:$0xf]
    %v731 = vld [vmem:[#allocation8 + $0xbc] sm:$0xf]
    %v732 = vld [vmem:[#allocation8 + $0xc0] sm:$0xf]
    %v733 = vld [vmem:[#allocation8 + $0xc4] sm:$0xf]
    %v734 = vld [vmem:[#allocation8 + $0xc8] sm:$0xf]
    %v735 = vld [vmem:[#allocation8 + $0xcc] sm:$0xf]
    %v736 = vld [vmem:[#allocation8 + $0xd0] sm:$0xf]
    %v737 = vld [vmem:[#allocation8 + $0xd4] sm:$0xf]
    %v738 = vld [vmem:[#allocation8 + $0xd8] sm:$0xf]
    %v739 = vld [vmem:[#allocation8 + $0xdc] sm:$0xf]
    %v740 = vld [vmem:[#allocation8 + $0xe0] sm:$0xf]
    %v741 = vld [vmem:[#allocation8 + $0xe4] sm:$0xf]
    %v742 = vld [vmem:[#allocation8 + $0xe8] sm:$0xf]
    %v743 = vld [vmem:[#allocation8 + $0xec] sm:$0xf]
    %v744 = vld [vmem:[#allocation8 + $0xf0] sm:$0xf]
    %v745 = vld [vmem:[#allocation8 + $0xf4] sm:$0xf]
    %v746 = vld [vmem:[#allocation8 + $0xf8] sm:$0xf]
    %v747 = vld [vmem:[#allocation8 + $0xfc] sm:$0xf]
    %v748 = vld [vmem:[#allocation8 + $0x100] sm:$0xf]
    %v749 = vld [vmem:[#allocation8 + $0x104] sm:$0xf]
    %v750 = vld [vmem:[#allocation8 + $0x108] sm:$0xf]
    %v751 = vld [vmem:[#allocation8 + $0x10c] sm:$0xf]
    %v752 = vld [vmem:[#allocation8 + $0x110] sm:$0xf]
    %v753 = vld [vmem:[#allocation8 + $0x114] sm:$0xf]
    %v754 = vld [vmem:[#allocation8 + $0x118] sm:$0xf]
    %v755 = vld [vmem:[#allocation8 + $0x11c] sm:$0xf]
    %v756 = vld [vmem:[#allocation8 + $0x120] sm:$0xf]
    %v757 = vld [vmem:[#allocation8 + $0x124] sm:$0xf]
    %v758 = vld [vmem:[#allocation8 + $0x128] sm:$0xf]
    %v759 = vld [vmem:[#allocation8 + $0x12c] sm:$0xf]
    %v760 = vld [vmem:[#allocation8 + $0x130] sm:$0xf]
    %v761 = vld [vmem:[#allocation8 + $0x134] sm:$0xf]
    %v762 = vld [vmem:[#allocation8 + $0x138] sm:$0xf]
    %v763 = vld [vmem:[#allocation8 + $0x13c] sm:$0xf]
    %v764 = vld [vmem:[#allocation8 + $0x140] sm:$0xf]
    %v765 = vld [vmem:[#allocation8 + $0x144] sm:$0xf]
    %v766 = vld [vmem:[#allocation8 + $0x148] sm:$0xf]
    %v767 = vld [vmem:[#allocation8 + $0x14c] sm:$0xf]
    %v768 = vld [vmem:[#allocation8 + $0x150] sm:$0xf]
    %v769 = vld [vmem:[#allocation8 + $0x154] sm:$0xf]
    %v770 = vld [vmem:[#allocation8 + $0x158] sm:$0xf]
    %v771 = vld [vmem:[#allocation8 + $0x15c] sm:$0xf]
    %v772 = vld [vmem:[#allocation8 + $0x160] sm:$0xf]
    %v773 = vld [vmem:[#allocation8 + $0x164] sm:$0xf]
    %v774 = vld [vmem:[#allocation8 + $0x168] sm:$0xf]
    %v775 = vld [vmem:[#allocation8 + $0x16c] sm:$0xf]
    %v776 = vld [vmem:[#allocation8 + $0x170] sm:$0xf]
    %v777 = vld [vmem:[#allocation8 + $0x174] sm:$0xf]
    %v778 = vld [vmem:[#allocation8 + $0x178] sm:$0xf]
    %v779 = vld [vmem:[#allocation8 + $0x17c] sm:$0xf]
    %v780 = vld [vmem:[%s8] sm:$0x1]
    %v782 = vlaneseq
    %v783 = vshrl.u32 %v782, 7
    %v784 = vsub.s32 0, %v783
    %v785 = vrot.slane %v780, %v784
    %v883 = vunpack.c.l.b16 %v684
    %v884 = vunpack.c.l.b16 %v685
    %v885 = vunpack.c.l.b16 %v686
    %v886 = vunpack.c.l.b16 %v687
    %v887 = vunpack.c.l.b16 %v688
    %v888 = vunpack.c.l.b16 %v689
    %v889 = vunpack.c.l.b16 %v690
    %v890 = vunpack.c.l.b16 %v691
    %v891 = vunpack.c.l.b16 %v692
    %v892 = vunpack.c.l.b16 %v693
    %v893 = vunpack.c.l.b16 %v694
    %v894 = vunpack.c.l.b16 %v695
    %v895 = vunpack.c.l.b16 %v696
    %v896 = vunpack.c.l.b16 %v697
    %v897 = vunpack.c.l.b16 %v698
    %v898 = vunpack.c.l.b16 %v699
    %v899 = vunpack.c.l.b16 %v700
    %v900 = vunpack.c.l.b16 %v701
    %v901 = vunpack.c.l.b16 %v702
    %v902 = vunpack.c.l.b16 %v703
    %v903 = vunpack.c.l.b16 %v704
    %v904 = vunpack.c.l.b16 %v705
    %v905 = vunpack.c.l.b16 %v706
    %v906 = vunpack.c.l.b16 %v707
    %v907 = vunpack.c.l.b16 %v708
    %v908 = vunpack.c.l.b16 %v709
    %v909 = vunpack.c.l.b16 %v710
    %v910 = vunpack.c.l.b16 %v711
    %v911 = vunpack.c.l.b16 %v712
    %v912 = vunpack.c.l.b16 %v713
    %v913 = vunpack.c.l.b16 %v714
    %v914 = vunpack.c.l.b16 %v715
    %v915 = vunpack.c.l.b16 %v716
    %v916 = vunpack.c.l.b16 %v717
    %v917 = vunpack.c.l.b16 %v718
    %v918 = vunpack.c.l.b16 %v719
    %v919 = vunpack.c.l.b16 %v720
    %v920 = vunpack.c.l.b16 %v721
    %v921 = vunpack.c.l.b16 %v722
    %v922 = vunpack.c.l.b16 %v723
    %v923 = vunpack.c.l.b16 %v724
    %v924 = vunpack.c.l.b16 %v725
    %v925 = vunpack.c.l.b16 %v726
    %v926 = vunpack.c.l.b16 %v727
    %v927 = vunpack.c.l.b16 %v728
    %v928 = vunpack.c.l.b16 %v729
    %v929 = vunpack.c.l.b16 %v730
    %v930 = vunpack.c.l.b16 %v731
    %v931 = vunpack.c.l.b16 %v732
    %v932 = vunpack.c.l.b16 %v733
    %v933 = vunpack.c.l.b16 %v734
    %v934 = vunpack.c.l.b16 %v735
    %v935 = vunpack.c.l.b16 %v736
    %v936 = vunpack.c.l.b16 %v737
    %v937 = vunpack.c.l.b16 %v738
    %v938 = vunpack.c.l.b16 %v739
    %v939 = vunpack.c.l.b16 %v740
    %v940 = vunpack.c.l.b16 %v741
    %v941 = vunpack.c.l.b16 %v742
    %v942 = vunpack.c.l.b16 %v743
    %v943 = vunpack.c.l.b16 %v744
    %v944 = vunpack.c.l.b16 %v745
    %v945 = vunpack.c.l.b16 %v746
    %v946 = vunpack.c.l.b16 %v747
    %v947 = vunpack.c.l.b16 %v748
    %v948 = vunpack.c.l.b16 %v749
    %v949 = vunpack.c.l.b16 %v750
    %v950 = vunpack.c.l.b16 %v751
    %v951 = vunpack.c.l.b16 %v752
    %v952 = vunpack.c.l.b16 %v753
    %v953 = vunpack.c.l.b16 %v754
    %v954 = vunpack.c.l.b16 %v755
    %v955 = vunpack.c.l.b16 %v756
    %v956 = vunpack.c.l.b16 %v757
    %v957 = vunpack.c.l.b16 %v758
    %v958 = vunpack.c.l.b16 %v759
    %v959 = vunpack.c.l.b16 %v760
    %v960 = vunpack.c.l.b16 %v761
    %v961 = vunpack.c.l.b16 %v762
    %v962 = vunpack.c.l.b16 %v763
    %v963 = vunpack.c.l.b16 %v764
    %v964 = vunpack.c.l.b16 %v765
    %v965 = vunpack.c.l.b16 %v766
    %v966 = vunpack.c.l.b16 %v767
    %v967 = vunpack.c.l.b16 %v768
    %v968 = vunpack.c.l.b16 %v769
    %v969 = vunpack.c.l.b16 %v770
    %v970 = vunpack.c.l.b16 %v771
    %v971 = vunpack.c.l.b16 %v772
    %v972 = vunpack.c.l.b16 %v773
    %v973 = vunpack.c.l.b16 %v774
    %v974 = vunpack.c.l.b16 %v775
    %v975 = vunpack.c.l.b16 %v776
    %v976 = vunpack.c.l.b16 %v777
    %v977 = vunpack.c.l.b16 %v778
    %v978 = vunpack.c.l.b16 %v779
    %v979 = vpack.c.b16 %v884, %v883
    %v980 = vpack.c.b16 %v886, %v885
    %v981 = vpack.c.b16 %v888, %v887
    %v982 = vpack.c.b16 %v890, %v889
    %v983 = vpack.c.b16 %v892, %v891
    %v984 = vpack.c.b16 %v894, %v893
    %v985 = vpack.c.b16 %v896, %v895
    %v986 = vpack.c.b16 %v898, %v897
    %v987 = vpack.c.b16 %v900, %v899
    %v988 = vpack.c.b16 %v902, %v901
    %v989 = vpack.c.b16 %v904, %v903
    %v990 = vpack.c.b16 %v906, %v905
    %v991 = vpack.c.b16 %v908, %v907
    %v992 = vpack.c.b16 %v910, %v909
    %v993 = vpack.c.b16 %v912, %v911
    %v994 = vpack.c.b16 %v914, %v913
    %v995 = vpack.c.b16 %v916, %v915
    %v996 = vpack.c.b16 %v918, %v917
    %v997 = vpack.c.b16 %v920, %v919
    %v998 = vpack.c.b16 %v922, %v921
    %v999 = vpack.c.b16 %v924, %v923
    %v1000 = vpack.c.b16 %v926, %v925
    %v1001 = vpack.c.b16 %v928, %v927
    %v1002 = vpack.c.b16 %v930, %v929
    %v1003 = vpack.c.b16 %v932, %v931
    %v1004 = vpack.c.b16 %v934, %v933
    %v1005 = vpack.c.b16 %v936, %v935
    %v1006 = vpack.c.b16 %v938, %v937
    %v1007 = vpack.c.b16 %v940, %v939
    %v1008 = vpack.c.b16 %v942, %v941
    %v1009 = vpack.c.b16 %v944, %v943
    %v1010 = vpack.c.b16 %v946, %v945
    %v1011 = vpack.c.b16 %v948, %v947
    %v1012 = vpack.c.b16 %v950, %v949
    %v1013 = vpack.c.b16 %v952, %v951
    %v1014 = vpack.c.b16 %v954, %v953
    %v1015 = vpack.c.b16 %v956, %v955
    %v1016 = vpack.c.b16 %v958, %v957
    %v1017 = vpack.c.b16 %v960, %v959
    %v1018 = vpack.c.b16 %v962, %v961
    %v1019 = vpack.c.b16 %v964, %v963
    %v1020 = vpack.c.b16 %v966, %v965
    %v1021 = vpack.c.b16 %v968, %v967
    %v1022 = vpack.c.b16 %v970, %v969
    %v1023 = vpack.c.b16 %v972, %v971
    %v1024 = vpack.c.b16 %v974, %v973
    %v1025 = vpack.c.b16 %v976, %v975
    %v1026 = vpack.c.b16 %v978, %v977
    %1075 = vmatprep.subr.bf16.mxu0 0
    %1076 = vmatpush1.bf16.msra.mxu0 %v979
    %1077 = vmatprep.subr.bf16.mxu0 0
    %1078 = vmatpush1.bf16.msra.mxu0 %v980
    %1079 = vmatprep.subr.bf16.mxu0 0
    %1080 = vmatpush1.bf16.msra.mxu0 %v981
    %1081 = vmatprep.subr.bf16.mxu0 0
    %1082 = vmatpush1.bf16.msra.mxu0 %v982
    %1083 = vmatprep.subr.bf16.mxu0 0
    %1084 = vmatpush1.bf16.msra.mxu0 %v983
    %1085 = vmatprep.subr.bf16.mxu0 0
    %1086 = vmatpush1.bf16.msra.mxu0 %v984
    %1087 = vmatprep.subr.bf16.mxu0 0
    %1088 = vmatpush1.bf16.msra.mxu0 %v985
    %1089 = vmatprep.subr.bf16.mxu0 0
    %1090 = vmatpush1.bf16.msra.mxu0 %v986
    %1091 = vmatprep.subr.bf16.mxu0 0
    %1092 = vmatpush1.bf16.msra.mxu0 %v987
    %1093 = vmatprep.subr.bf16.mxu0 0
    %1094 = vmatpush1.bf16.msra.mxu0 %v988
    %1095 = vmatprep.subr.bf16.mxu0 0
    %1096 = vmatpush1.bf16.msra.mxu0 %v989
    %1097 = vmatprep.subr.bf16.mxu0 0
    %1098 = vmatpush1.bf16.msra.mxu0 %v990
    %1099 = vmatprep.subr.bf16.mxu0 0
    %1100 = vmatpush1.bf16.msra.mxu0 %v991
    %1101 = vmatprep.subr.bf16.mxu0 0
    %1102 = vmatpush1.bf16.msra.mxu0 %v992
    %1103 = vmatprep.subr.bf16.mxu0 0
    %1104 = vmatpush1.bf16.msra.mxu0 %v993
    %1105 = vmatprep.subr.bf16.mxu0 0
    %1106 = vmatpush1.bf16.msra.mxu0 %v994
    %1107 = vmatprep.mubr.bf16.mxu0 %v665
    %1108 = vmatmul.mubr.bf16.gmra.mrb[0].mxu0 %v664
    %v1109 = vpop.f32.mrb[0].mxu0
    %v1110 = vadd.f32 %v785, %v1109
    %v1111 = vpop.f32.mrb[0].mxu0
    %v1112 = vpop.f32.mrb[0].mxu0
    %v1113 = vpop.f32.mrb[0].mxu0
    %1114 = vdwg.mxu0
    %1115 = vmatprep.subr.bf16.mxu0 0
    %1116 = vmatpush1.bf16.msra.mxu0 %v995
    %1117 = vmatprep.subr.bf16.mxu0 0
    %1118 = vmatpush1.bf16.msra.mxu0 %v996
    %1119 = vmatprep.subr.bf16.mxu0 0
    %1120 = vmatpush1.bf16.msra.mxu0 %v997
    %1121 = vmatprep.subr.bf16.mxu0 0
    %1122 = vmatpush1.bf16.msra.mxu0 %v998
    %1123 = vmatprep.subr.bf16.mxu0 0
    %1124 = vmatpush1.bf16.msra.mxu0 %v999
    %1125 = vmatprep.subr.bf16.mxu0 0
    %1126 = vmatpush1.bf16.msra.mxu0 %v1000
    %1127 = vmatprep.subr.bf16.mxu0 0
    %1128 = vmatpush1.bf16.msra.mxu0 %v1001
    %1129 = vmatprep.subr.bf16.mxu0 0
    %1130 = vmatpush1.bf16.msra.mxu0 %v1002
    %1131 = vmatprep.subr.bf16.mxu0 0
    %1132 = vmatpush1.bf16.msra.mxu0 %v1003
    %1133 = vmatprep.subr.bf16.mxu0 0
    %1134 = vmatpush1.bf16.msra.mxu0 %v1004
    %1135 = vmatprep.subr.bf16.mxu0 0
    %1136 = vmatpush1.bf16.msra.mxu0 %v1005
    %1137 = vmatprep.subr.bf16.mxu0 0
    %1138 = vmatpush1.bf16.msra.mxu0 %v1006
    %1139 = vmatprep.subr.bf16.mxu0 0
    %1140 = vmatpush1.bf16.msra.mxu0 %v1007
    %1141 = vmatprep.subr.bf16.mxu0 0
    %1142 = vmatpush1.bf16.msra.mxu0 %v1008
    %1143 = vmatprep.subr.bf16.mxu0 0
    %1144 = vmatpush1.bf16.msra.mxu0 %v1009
    %1145 = vmatprep.subr.bf16.mxu0 0
    %1146 = vmatpush1.bf16.msra.mxu0 %v1010
    %1147 = vmatprep.mubr.bf16.mxu0 %v667
    %1148 = vmatmul.mubr.bf16.gmra.mrb[0].mxu0 %v666
    %v1149 = vpop.f32.mrb[0].mxu0
    %v1150 = vadd.f32 %v1110, %v1149
    %v1151 = vpop.f32.mrb[0].mxu0
    %v1152 = vpop.f32.mrb[0].mxu0
    %v1153 = vpop.f32.mrb[0].mxu0
    %1154 = vdwg.mxu0
    %1155 = vmatprep.subr.bf16.mxu0 0
    %1156 = vmatpush1.bf16.msra.mxu0 %v1011
    %1157 = vmatprep.subr.bf16.mxu0 0
    %1158 = vmatpush1.bf16.msra.mxu0 %v1012
    %1159 = vmatprep.subr.bf16.mxu0 0
    %1160 = vmatpush1.bf16.msra.mxu0 %v1013
    %1161 = vmatprep.subr.bf16.mxu0 0
    %1162 = vmatpush1.bf16.msra.mxu0 %v1014
    %1163 = vmatprep.subr.bf16.mxu0 0
    %1164 = vmatpush1.bf16.msra.mxu0 %v1015
    %1165 = vmatprep.subr.bf16.mxu0 0
    %1166 = vmatpush1.bf16.msra.mxu0 %v1016
    %1167 = vmatprep.subr.bf16.mxu0 0
    %1168 = vmatpush1.bf16.msra.mxu0 %v1017
    %1169 = vmatprep.subr.bf16.mxu0 0
    %1170 = vmatpush1.bf16.msra.mxu0 %v1018
    %1171 = vmatprep.subr.bf16.mxu0 0
    %1172 = vmatpush1.bf16.msra.mxu0 %v1019
    %1173 = vmatprep.subr.bf16.mxu0 0
    %1174 = vmatpush1.bf16.msra.mxu0 %v1020
    %1175 = vmatprep.subr.bf16.mxu0 0
    %1176 = vmatpush1.bf16.msra.mxu0 %v1021
    %1177 = vmatprep.subr.bf16.mxu0 0
    %1178 = vmatpush1.bf16.msra.mxu0 %v1022
    %1179 = vmatprep.subr.bf16.mxu0 0
    %1180 = vmatpush1.bf16.msra.mxu0 %v1023
    %1181 = vmatprep.subr.bf16.mxu0 0
    %1182 = vmatpush1.bf16.msra.mxu0 %v1024
    %1183 = vmatprep.subr.bf16.mxu0 0
    %1184 = vmatpush1.bf16.msra.mxu0 %v1025
    %1185 = vmatprep.subr.bf16.mxu0 0
    %1186 = vmatpush1.bf16.msra.mxu0 %v1026
    %1187 = vmatprep.mubr.bf16.mxu0 %v669
    %1188 = vmatmul.mubr.bf16.gmra.mrb[0].mxu0 %v668
    %v1189 = vpop.f32.mrb[0].mxu0
    %v1190 = vadd.f32 %v1150, %v1189
    %v1191 = vpop.f32.mrb[0].mxu0
    %v1192 = vpop.f32.mrb[0].mxu0
    %v1193 = vpop.f32.mrb[0].mxu0
    %1194 = vdwg.mxu0
    %v1195 = vld [vmem:[#allocation11] sm:$0xf]
    %v1196 = vld [vmem:[#allocation11 + $0x4] sm:$0xf]
    %v1197 = vld [vmem:[#allocation11 + $0x8] sm:$0xf]
    %v1198 = vld [vmem:[#allocation11 + $0xc] sm:$0xf]
    %v1199 = vld [vmem:[#allocation11 + $0x10] sm:$0xf]
    %v1200 = vld [vmem:[#allocation11 + $0x14] sm:$0xf]
    %v1201 = vld [vmem:[#allocation11 + $0x18] sm:$0xf]
    %v1202 = vld [vmem:[#allocation11 + $0x1c] sm:$0xf]
    %v1203 = vld [vmem:[#allocation11 + $0x20] sm:$0xf]
    %v1204 = vld [vmem:[#allocation11 + $0x24] sm:$0xf]
    %v1205 = vld [vmem:[#allocation11 + $0x28] sm:$0xf]
    %v1206 = vld [vmem:[#allocation11 + $0x2c] sm:$0xf]
    %v1207 = vld [vmem:[#allocation11 + $0x30] sm:$0xf]
    %v1208 = vld [vmem:[#allocation11 + $0x34] sm:$0xf]
    %v1209 = vld [vmem:[#allocation11 + $0x38] sm:$0xf]
    %v1210 = vld [vmem:[#allocation11 + $0x3c] sm:$0xf]
    %v1211 = vld [vmem:[#allocation11 + $0x40] sm:$0xf]
    %v1212 = vld [vmem:[#allocation11 + $0x44] sm:$0xf]
    %v1213 = vld [vmem:[#allocation11 + $0x48] sm:$0xf]
    %v1214 = vld [vmem:[#allocation11 + $0x4c] sm:$0xf]
    %v1215 = vld [vmem:[#allocation11 + $0x50] sm:$0xf]
    %v1216 = vld [vmem:[#allocation11 + $0x54] sm:$0xf]
    %v1217 = vld [vmem:[#allocation11 + $0x58] sm:$0xf]
    %v1218 = vld [vmem:[#allocation11 + $0x5c] sm:$0xf]
    %v1219 = vld [vmem:[#allocation11 + $0x60] sm:$0xf]
    %v1220 = vld [vmem:[#allocation11 + $0x64] sm:$0xf]
    %v1221 = vld [vmem:[#allocation11 + $0x68] sm:$0xf]
    %v1222 = vld [vmem:[#allocation11 + $0x6c] sm:$0xf]
    %v1223 = vld [vmem:[#allocation11 + $0x70] sm:$0xf]
    %v1224 = vld [vmem:[#allocation11 + $0x74] sm:$0xf]
    %v1225 = vld [vmem:[#allocation11 + $0x78] sm:$0xf]
    %v1226 = vld [vmem:[#allocation11 + $0x7c] sm:$0xf]
    %v1227 = vld [vmem:[#allocation11 + $0x80] sm:$0xf]
    %v1228 = vld [vmem:[#allocation11 + $0x84] sm:$0xf]
    %v1229 = vld [vmem:[#allocation11 + $0x88] sm:$0xf]
    %v1230 = vld [vmem:[#allocation11 + $0x8c] sm:$0xf]
    %v1231 = vld [vmem:[#allocation11 + $0x90] sm:$0xf]
    %v1232 = vld [vmem:[#allocation11 + $0x94] sm:$0xf]
    %v1233 = vld [vmem:[#allocation11 + $0x98] sm:$0xf]
    %v1234 = vld [vmem:[#allocation11 + $0x9c] sm:$0xf]
    %v1235 = vld [vmem:[#allocation11 + $0xa0] sm:$0xf]
    %v1236 = vld [vmem:[#allocation11 + $0xa4] sm:$0xf]
    %v1237 = vld [vmem:[#allocation11 + $0xa8] sm:$0xf]
    %v1238 = vld [vmem:[#allocation11 + $0xac] sm:$0xf]
    %v1239 = vld [vmem:[#allocation11 + $0xb0] sm:$0xf]
    %v1240 = vld [vmem:[#allocation11 + $0xb4] sm:$0xf]
    %v1241 = vld [vmem:[#allocation11 + $0xb8] sm:$0xf]
    %v1242 = vld [vmem:[#allocation11 + $0xbc] sm:$0xf]
    %v1243 = vld [vmem:[#allocation11 + $0xc0] sm:$0xf]
    %v1244 = vld [vmem:[#allocation11 + $0xc4] sm:$0xf]
    %v1245 = vld [vmem:[#allocation11 + $0xc8] sm:$0xf]
    %v1246 = vld [vmem:[#allocation11 + $0xcc] sm:$0xf]
    %v1247 = vld [vmem:[#allocation11 + $0xd0] sm:$0xf]
    %v1248 = vld [vmem:[#allocation11 + $0xd4] sm:$0xf]
    %v1249 = vld [vmem:[#allocation11 + $0xd8] sm:$0xf]
    %v1250 = vld [vmem:[#allocation11 + $0xdc] sm:$0xf]
    %v1251 = vld [vmem:[#allocation11 + $0xe0] sm:$0xf]
    %v1252 = vld [vmem:[#allocation11 + $0xe4] sm:$0xf]
    %v1253 = vld [vmem:[#allocation11 + $0xe8] sm:$0xf]
    %v1254 = vld [vmem:[#allocation11 + $0xec] sm:$0xf]
    %v1255 = vld [vmem:[#allocation11 + $0xf0] sm:$0xf]
    %v1256 = vld [vmem:[#allocation11 + $0xf4] sm:$0xf]
    %v1257 = vld [vmem:[#allocation11 + $0xf8] sm:$0xf]
    %v1258 = vld [vmem:[#allocation11 + $0xfc] sm:$0xf]
    %v1259 = vld [vmem:[#allocation11 + $0x100] sm:$0xf]
    %v1260 = vld [vmem:[#allocation11 + $0x104] sm:$0xf]
    %v1261 = vld [vmem:[#allocation11 + $0x108] sm:$0xf]
    %v1262 = vld [vmem:[#allocation11 + $0x10c] sm:$0xf]
    %v1263 = vld [vmem:[#allocation11 + $0x110] sm:$0xf]
    %v1264 = vld [vmem:[#allocation11 + $0x114] sm:$0xf]
    %v1265 = vld [vmem:[#allocation11 + $0x118] sm:$0xf]
    %v1266 = vld [vmem:[#allocation11 + $0x11c] sm:$0xf]
    %v1267 = vld [vmem:[#allocation11 + $0x120] sm:$0xf]
    %v1268 = vld [vmem:[#allocation11 + $0x124] sm:$0xf]
    %v1269 = vld [vmem:[#allocation11 + $0x128] sm:$0xf]
    %v1270 = vld [vmem:[#allocation11 + $0x12c] sm:$0xf]
    %v1271 = vld [vmem:[#allocation11 + $0x130] sm:$0xf]
    %v1272 = vld [vmem:[#allocation11 + $0x134] sm:$0xf]
    %v1273 = vld [vmem:[#allocation11 + $0x138] sm:$0xf]
    %v1274 = vld [vmem:[#allocation11 + $0x13c] sm:$0xf]
    %v1275 = vld [vmem:[#allocation11 + $0x140] sm:$0xf]
    %v1276 = vld [vmem:[#allocation11 + $0x144] sm:$0xf]
    %v1277 = vld [vmem:[#allocation11 + $0x148] sm:$0xf]
    %v1278 = vld [vmem:[#allocation11 + $0x14c] sm:$0xf]
    %v1279 = vld [vmem:[#allocation11 + $0x150] sm:$0xf]
    %v1280 = vld [vmem:[#allocation11 + $0x154] sm:$0xf]
    %v1281 = vld [vmem:[#allocation11 + $0x158] sm:$0xf]
    %v1282 = vld [vmem:[#allocation11 + $0x15c] sm:$0xf]
    %v1283 = vld [vmem:[#allocation11 + $0x160] sm:$0xf]
    %v1284 = vld [vmem:[#allocation11 + $0x164] sm:$0xf]
    %v1285 = vld [vmem:[#allocation11 + $0x168] sm:$0xf]
    %v1286 = vld [vmem:[#allocation11 + $0x16c] sm:$0xf]
    %v1287 = vld [vmem:[#allocation11 + $0x170] sm:$0xf]
    %v1288 = vld [vmem:[#allocation11 + $0x174] sm:$0xf]
    %v1289 = vld [vmem:[#allocation11 + $0x178] sm:$0xf]
    %v1290 = vld [vmem:[#allocation11 + $0x17c] sm:$0xf]
    %v1291 = vld [vmem:[%s9] sm:$0x1]
    %v1293 = vlaneseq
    %v1294 = vshrl.u32 %v1293, 7
    %v1295 = vsub.s32 0, %v1294
    %v1296 = vrot.slane %v1291, %v1295
    %v1394 = vunpack.c.l.b16 %v1195
    %v1395 = vunpack.c.l.b16 %v1196
    %v1396 = vunpack.c.l.b16 %v1197
    %v1397 = vunpack.c.l.b16 %v1198
    %v1398 = vunpack.c.l.b16 %v1199
    %v1399 = vunpack.c.l.b16 %v1200
    %v1400 = vunpack.c.l.b16 %v1201
    %v1401 = vunpack.c.l.b16 %v1202
    %v1402 = vunpack.c.l.b16 %v1203
    %v1403 = vunpack.c.l.b16 %v1204
    %v1404 = vunpack.c.l.b16 %v1205
    %v1405 = vunpack.c.l.b16 %v1206
    %v1406 = vunpack.c.l.b16 %v1207
    %v1407 = vunpack.c.l.b16 %v1208
    %v1408 = vunpack.c.l.b16 %v1209
    %v1409 = vunpack.c.l.b16 %v1210
    %v1410 = vunpack.c.l.b16 %v1211
    %v1411 = vunpack.c.l.b16 %v1212
    %v1412 = vunpack.c.l.b16 %v1213
    %v1413 = vunpack.c.l.b16 %v1214
    %v1414 = vunpack.c.l.b16 %v1215
    %v1415 = vunpack.c.l.b16 %v1216
    %v1416 = vunpack.c.l.b16 %v1217
    %v1417 = vunpack.c.l.b16 %v1218
    %v1418 = vunpack.c.l.b16 %v1219
    %v1419 = vunpack.c.l.b16 %v1220
    %v1420 = vunpack.c.l.b16 %v1221
    %v1421 = vunpack.c.l.b16 %v1222
    %v1422 = vunpack.c.l.b16 %v1223
    %v1423 = vunpack.c.l.b16 %v1224
    %v1424 = vunpack.c.l.b16 %v1225
    %v1425 = vunpack.c.l.b16 %v1226
    %v1426 = vunpack.c.l.b16 %v1227
    %v1427 = vunpack.c.l.b16 %v1228
    %v1428 = vunpack.c.l.b16 %v1229
    %v1429 = vunpack.c.l.b16 %v1230
    %v1430 = vunpack.c.l.b16 %v1231
    %v1431 = vunpack.c.l.b16 %v1232
    %v1432 = vunpack.c.l.b16 %v1233
    %v1433 = vunpack.c.l.b16 %v1234
    %v1434 = vunpack.c.l.b16 %v1235
    %v1435 = vunpack.c.l.b16 %v1236
    %v1436 = vunpack.c.l.b16 %v1237
    %v1437 = vunpack.c.l.b16 %v1238
    %v1438 = vunpack.c.l.b16 %v1239
    %v1439 = vunpack.c.l.b16 %v1240
    %v1440 = vunpack.c.l.b16 %v1241
    %v1441 = vunpack.c.l.b16 %v1242
    %v1442 = vunpack.c.l.b16 %v1243
    %v1443 = vunpack.c.l.b16 %v1244
    %v1444 = vunpack.c.l.b16 %v1245
    %v1445 = vunpack.c.l.b16 %v1246
    %v1446 = vunpack.c.l.b16 %v1247
    %v1447 = vunpack.c.l.b16 %v1248
    %v1448 = vunpack.c.l.b16 %v1249
    %v1449 = vunpack.c.l.b16 %v1250
    %v1450 = vunpack.c.l.b16 %v1251
    %v1451 = vunpack.c.l.b16 %v1252
    %v1452 = vunpack.c.l.b16 %v1253
    %v1453 = vunpack.c.l.b16 %v1254
    %v1454 = vunpack.c.l.b16 %v1255
    %v1455 = vunpack.c.l.b16 %v1256
    %v1456 = vunpack.c.l.b16 %v1257
    %v1457 = vunpack.c.l.b16 %v1258
    %v1458 = vunpack.c.l.b16 %v1259
    %v1459 = vunpack.c.l.b16 %v1260
    %v1460 = vunpack.c.l.b16 %v1261
    %v1461 = vunpack.c.l.b16 %v1262
    %v1462 = vunpack.c.l.b16 %v1263
    %v1463 = vunpack.c.l.b16 %v1264
    %v1464 = vunpack.c.l.b16 %v1265
    %v1465 = vunpack.c.l.b16 %v1266
    %v1466 = vunpack.c.l.b16 %v1267
    %v1467 = vunpack.c.l.b16 %v1268
    %v1468 = vunpack.c.l.b16 %v1269
    %v1469 = vunpack.c.l.b16 %v1270
    %v1470 = vunpack.c.l.b16 %v1271
    %v1471 = vunpack.c.l.b16 %v1272
    %v1472 = vunpack.c.l.b16 %v1273
    %v1473 = vunpack.c.l.b16 %v1274
    %v1474 = vunpack.c.l.b16 %v1275
    %v1475 = vunpack.c.l.b16 %v1276
    %v1476 = vunpack.c.l.b16 %v1277
    %v1477 = vunpack.c.l.b16 %v1278
    %v1478 = vunpack.c.l.b16 %v1279
    %v1479 = vunpack.c.l.b16 %v1280
    %v1480 = vunpack.c.l.b16 %v1281
    %v1481 = vunpack.c.l.b16 %v1282
    %v1482 = vunpack.c.l.b16 %v1283
    %v1483 = vunpack.c.l.b16 %v1284
    %v1484 = vunpack.c.l.b16 %v1285
    %v1485 = vunpack.c.l.b16 %v1286
    %v1486 = vunpack.c.l.b16 %v1287
    %v1487 = vunpack.c.l.b16 %v1288
    %v1488 = vunpack.c.l.b16 %v1289
    %v1489 = vunpack.c.l.b16 %v1290
    %v1490 = vpack.c.b16 %v1395, %v1394
    %v1491 = vpack.c.b16 %v1397, %v1396
    %v1492 = vpack.c.b16 %v1399, %v1398
    %v1493 = vpack.c.b16 %v1401, %v1400
    %v1494 = vpack.c.b16 %v1403, %v1402
    %v1495 = vpack.c.b16 %v1405, %v1404
    %v1496 = vpack.c.b16 %v1407, %v1406
    %v1497 = vpack.c.b16 %v1409, %v1408
    %v1498 = vpack.c.b16 %v1411, %v1410
    %v1499 = vpack.c.b16 %v1413, %v1412
    %v1500 = vpack.c.b16 %v1415, %v1414
    %v1501 = vpack.c.b16 %v1417, %v1416
    %v1502 = vpack.c.b16 %v1419, %v1418
    %v1503 = vpack.c.b16 %v1421, %v1420
    %v1504 = vpack.c.b16 %v1423, %v1422
    %v1505 = vpack.c.b16 %v1425, %v1424
    %v1506 = vpack.c.b16 %v1427, %v1426
    %v1507 = vpack.c.b16 %v1429, %v1428
    %v1508 = vpack.c.b16 %v1431, %v1430
    %v1509 = vpack.c.b16 %v1433, %v1432
    %v1510 = vpack.c.b16 %v1435, %v1434
    %v1511 = vpack.c.b16 %v1437, %v1436
    %v1512 = vpack.c.b16 %v1439, %v1438
    %v1513 = vpack.c.b16 %v1441, %v1440
    %v1514 = vpack.c.b16 %v1443, %v1442
    %v1515 = vpack.c.b16 %v1445, %v1444
    %v1516 = vpack.c.b16 %v1447, %v1446
    %v1517 = vpack.c.b16 %v1449, %v1448
    %v1518 = vpack.c.b16 %v1451, %v1450
    %v1519 = vpack.c.b16 %v1453, %v1452
    %v1520 = vpack.c.b16 %v1455, %v1454
    %v1521 = vpack.c.b16 %v1457, %v1456
    %v1522 = vpack.c.b16 %v1459, %v1458
    %v1523 = vpack.c.b16 %v1461, %v1460
    %v1524 = vpack.c.b16 %v1463, %v1462
    %v1525 = vpack.c.b16 %v1465, %v1464
    %v1526 = vpack.c.b16 %v1467, %v1466
    %v1527 = vpack.c.b16 %v1469, %v1468
    %v1528 = vpack.c.b16 %v1471, %v1470
    %v1529 = vpack.c.b16 %v1473, %v1472
    %v1530 = vpack.c.b16 %v1475, %v1474
    %v1531 = vpack.c.b16 %v1477, %v1476
    %v1532 = vpack.c.b16 %v1479, %v1478
    %v1533 = vpack.c.b16 %v1481, %v1480
    %v1534 = vpack.c.b16 %v1483, %v1482
    %v1535 = vpack.c.b16 %v1485, %v1484
    %v1536 = vpack.c.b16 %v1487, %v1486
    %v1537 = vpack.c.b16 %v1489, %v1488
    %1586 = vmatprep.subr.bf16.mxu0 0
    %1587 = vmatpush1.bf16.msra.mxu0 %v1490
    %1588 = vmatprep.subr.bf16.mxu0 0
    %1589 = vmatpush1.bf16.msra.mxu0 %v1491
    %1590 = vmatprep.subr.bf16.mxu0 0
    %1591 = vmatpush1.bf16.msra.mxu0 %v1492
    %1592 = vmatprep.subr.bf16.mxu0 0
    %1593 = vmatpush1.bf16.msra.mxu0 %v1493
    %1594 = vmatprep.subr.bf16.mxu0 0
    %1595 = vmatpush1.bf16.msra.mxu0 %v1494
    %1596 = vmatprep.subr.bf16.mxu0 0
    %1597 = vmatpush1.bf16.msra.mxu0 %v1495
    %1598 = vmatprep.subr.bf16.mxu0 0
    %1599 = vmatpush1.bf16.msra.mxu0 %v1496
    %1600 = vmatprep.subr.bf16.mxu0 0
    %1601 = vmatpush1.bf16.msra.mxu0 %v1497
    %1602 = vmatprep.subr.bf16.mxu0 0
    %1603 = vmatpush1.bf16.msra.mxu0 %v1498
    %1604 = vmatprep.subr.bf16.mxu0 0
    %1605 = vmatpush1.bf16.msra.mxu0 %v1499
    %1606 = vmatprep.subr.bf16.mxu0 0
    %1607 = vmatpush1.bf16.msra.mxu0 %v1500
    %1608 = vmatprep.subr.bf16.mxu0 0
    %1609 = vmatpush1.bf16.msra.mxu0 %v1501
    %1610 = vmatprep.subr.bf16.mxu0 0
    %1611 = vmatpush1.bf16.msra.mxu0 %v1502
    %1612 = vmatprep.subr.bf16.mxu0 0
    %1613 = vmatpush1.bf16.msra.mxu0 %v1503
    %1614 = vmatprep.subr.bf16.mxu0 0
    %1615 = vmatpush1.bf16.msra.mxu0 %v1504
    %1616 = vmatprep.subr.bf16.mxu0 0
    %1617 = vmatpush1.bf16.msra.mxu0 %v1505
    %1618 = vmatprep.mubr.bf16.mxu0 %v679
    %1619 = vmatmul.mubr.bf16.gmra.mrb[0].mxu0 %v678
    %v1620 = vpop.f32.mrb[0].mxu0
    %v1621 = vadd.f32 %v1296, %v1620
    %v1622 = vpop.f32.mrb[0].mxu0
    %v1623 = vpop.f32.mrb[0].mxu0
    %v1624 = vpop.f32.mrb[0].mxu0
    %1625 = vdwg.mxu0
    %1626 = vmatprep.subr.bf16.mxu0 0
    %1627 = vmatpush1.bf16.msra.mxu0 %v1506
    %1628 = vmatprep.subr.bf16.mxu0 0
    %1629 = vmatpush1.bf16.msra.mxu0 %v1507
    %1630 = vmatprep.subr.bf16.mxu0 0
    %1631 = vmatpush1.bf16.msra.mxu0 %v1508
    %1632 = vmatprep.subr.bf16.mxu0 0
    %1633 = vmatpush1.bf16.msra.mxu0 %v1509
    %1634 = vmatprep.subr.bf16.mxu0 0
    %1635 = vmatpush1.bf16.msra.mxu0 %v1510
    %1636 = vmatprep.subr.bf16.mxu0 0
    %1637 = vmatpush1.bf16.msra.mxu0 %v1511
    %1638 = vmatprep.subr.bf16.mxu0 0
    %1639 = vmatpush1.bf16.msra.mxu0 %v1512
    %1640 = vmatprep.subr.bf16.mxu0 0
    %1641 = vmatpush1.bf16.msra.mxu0 %v1513
    %1642 = vmatprep.subr.bf16.mxu0 0
    %1643 = vmatpush1.bf16.msra.mxu0 %v1514
    %1644 = vmatprep.subr.bf16.mxu0 0
    %1645 = vmatpush1.bf16.msra.mxu0 %v1515
    %1646 = vmatprep.subr.bf16.mxu0 0
    %1647 = vmatpush1.bf16.msra.mxu0 %v1516
    %1648 = vmatprep.subr.bf16.mxu0 0
    %1649 = vmatpush1.bf16.msra.mxu0 %v1517
    %1650 = vmatprep.subr.bf16.mxu0 0
    %1651 = vmatpush1.bf16.msra.mxu0 %v1518
    %1652 = vmatprep.subr.bf16.mxu0 0
    %1653 = vmatpush1.bf16.msra.mxu0 %v1519
    %1654 = vmatprep.subr.bf16.mxu0 0
    %1655 = vmatpush1.bf16.msra.mxu0 %v1520
    %1656 = vmatprep.subr.bf16.mxu0 0
    %1657 = vmatpush1.bf16.msra.mxu0 %v1521
    %1658 = vmatprep.mubr.bf16.mxu0 %v681
    %1659 = vmatmul.mubr.bf16.gmra.mrb[0].mxu0 %v680
    %v1660 = vpop.f32.mrb[0].mxu0
    %v1661 = vadd.f32 %v1621, %v1660
    %v1662 = vpop.f32.mrb[0].mxu0
    %v1663 = vpop.f32.mrb[0].mxu0
    %v1664 = vpop.f32.mrb[0].mxu0
    %1665 = vdwg.mxu0
    %1666 = vmatprep.subr.bf16.mxu0 0
    %1667 = vmatpush1.bf16.msra.mxu0 %v1522
    %1668 = vmatprep.subr.bf16.mxu0 0
    %1669 = vmatpush1.bf16.msra.mxu0 %v1523
    %1670 = vmatprep.subr.bf16.mxu0 0
    %1671 = vmatpush1.bf16.msra.mxu0 %v1524
    %1672 = vmatprep.subr.bf16.mxu0 0
    %1673 = vmatpush1.bf16.msra.mxu0 %v1525
    %1674 = vmatprep.subr.bf16.mxu0 0
    %1675 = vmatpush1.bf16.msra.mxu0 %v1526
    %1676 = vmatprep.subr.bf16.mxu0 0
    %1677 = vmatpush1.bf16.msra.mxu0 %v1527
    %1678 = vmatprep.subr.bf16.mxu0 0
    %1679 = vmatpush1.bf16.msra.mxu0 %v1528
    %1680 = vmatprep.subr.bf16.mxu0 0
    %1681 = vmatpush1.bf16.msra.mxu0 %v1529
    %1682 = vmatprep.subr.bf16.mxu0 0
    %1683 = vmatpush1.bf16.msra.mxu0 %v1530
    %1684 = vmatprep.subr.bf16.mxu0 0
    %1685 = vmatpush1.bf16.msra.mxu0 %v1531
    %1686 = vmatprep.subr.bf16.mxu0 0
    %1687 = vmatpush1.bf16.msra.mxu0 %v1532
    %1688 = vmatprep.subr.bf16.mxu0 0
    %1689 = vmatpush1.bf16.msra.mxu0 %v1533
    %1690 = vmatprep.subr.bf16.mxu0 0
    %1691 = vmatpush1.bf16.msra.mxu0 %v1534
    %1692 = vmatprep.subr.bf16.mxu0 0
    %1693 = vmatpush1.bf16.msra.mxu0 %v1535
    %1694 = vmatprep.subr.bf16.mxu0 0
    %1695 = vmatpush1.bf16.msra.mxu0 %v1536
    %1696 = vmatprep.subr.bf16.mxu0 0
    %1697 = vmatpush1.bf16.msra.mxu0 %v1537
    %1698 = vmatprep.mubr.bf16.mxu0 %v683
    %1699 = vmatmul.mubr.bf16.gmra.mrb[0].mxu0 %v682
    %v1700 = vpop.f32.mrb[0].mxu0
    %v1701 = vadd.f32 %v1661, %v1700
    %v1702 = vpop.f32.mrb[0].mxu0
    %v1703 = vpop.f32.mrb[0].mxu0
    %v1704 = vpop.f32.mrb[0].mxu0
    %1705 = vdwg.mxu0
    %v1706 = vpack.c.bf16 %v1190, %v1190
    %v1707 = vld [vmem:[#allocation13] sm:$0xf]
    %v1708 = vld [vmem:[#allocation13 + $0x4] sm:$0xf]
    %v1709 = vld [vmem:[#allocation13 + $0x8] sm:$0xf]
    %v1710 = vld [vmem:[#allocation13 + $0xc] sm:$0xf]
    %v1711 = vld [vmem:[#allocation13 + $0x10] sm:$0xf]
    %v1712 = vld [vmem:[#allocation13 + $0x14] sm:$0xf]
    %v1713 = vld [vmem:[#allocation13 + $0x18] sm:$0xf]
    %v1714 = vld [vmem:[#allocation13 + $0x1c] sm:$0xf]
    %v1715 = vld [vmem:[#allocation13 + $0x20] sm:$0xf]
    %v1716 = vld [vmem:[#allocation13 + $0x24] sm:$0xf]
    %v1717 = vld [vmem:[#allocation13 + $0x28] sm:$0xf]
    %v1718 = vld [vmem:[#allocation13 + $0x2c] sm:$0xf]
    %v1719 = vld [vmem:[#allocation13 + $0x30] sm:$0xf]
    %v1720 = vld [vmem:[#allocation13 + $0x34] sm:$0xf]
    %v1721 = vld [vmem:[#allocation13 + $0x38] sm:$0xf]
    %v1722 = vld [vmem:[#allocation13 + $0x3c] sm:$0xf]
    %v1723 = vpack.c.bf16 %v1701, %v1701
    %v1724 = vld [vmem:[#allocation14] sm:$0xf]
    %v1725 = vld [vmem:[#allocation14 + $0x4] sm:$0xf]
    %v1726 = vld [vmem:[#allocation14 + $0x8] sm:$0xf]
    %v1727 = vld [vmem:[#allocation14 + $0xc] sm:$0xf]
    %v1728 = vld [vmem:[#allocation14 + $0x10] sm:$0xf]
    %v1729 = vld [vmem:[#allocation14 + $0x14] sm:$0xf]
    %v1730 = vld [vmem:[#allocation14 + $0x18] sm:$0xf]
    %v1731 = vld [vmem:[#allocation14 + $0x1c] sm:$0xf]
    %v1732 = vld [vmem:[#allocation14 + $0x20] sm:$0xf]
    %v1733 = vld [vmem:[#allocation14 + $0x24] sm:$0xf]
    %v1734 = vld [vmem:[#allocation14 + $0x28] sm:$0xf]
    %v1735 = vld [vmem:[#allocation14 + $0x2c] sm:$0xf]
    %v1736 = vld [vmem:[#allocation14 + $0x30] sm:$0xf]
    %v1737 = vld [vmem:[#allocation14 + $0x34] sm:$0xf]
    %v1738 = vld [vmem:[#allocation14 + $0x38] sm:$0xf]
    %v1739 = vld [vmem:[#allocation14 + $0x3c] sm:$0xf]
    %v1756 = vunpack.c.l.b16 %v1724
    %v1757 = vunpack.c.l.b16 %v1725
    %v1758 = vunpack.c.l.b16 %v1726
    %v1759 = vunpack.c.l.b16 %v1727
    %v1760 = vunpack.c.l.b16 %v1728
    %v1761 = vunpack.c.l.b16 %v1729
    %v1762 = vunpack.c.l.b16 %v1730
    %v1763 = vunpack.c.l.b16 %v1731
    %v1764 = vunpack.c.l.b16 %v1732
    %v1765 = vunpack.c.l.b16 %v1733
    %v1766 = vunpack.c.l.b16 %v1734
    %v1767 = vunpack.c.l.b16 %v1735
    %v1768 = vunpack.c.l.b16 %v1736
    %v1769 = vunpack.c.l.b16 %v1737
    %v1770 = vunpack.c.l.b16 %v1738
    %v1771 = vunpack.c.l.b16 %v1739
    %v1772 = vpack.c.b16 %v1757, %v1756
    %v1773 = vpack.c.b16 %v1759, %v1758
    %v1774 = vpack.c.b16 %v1761, %v1760
    %v1775 = vpack.c.b16 %v1763, %v1762
    %v1776 = vpack.c.b16 %v1765, %v1764
    %v1777 = vpack.c.b16 %v1767, %v1766
    %v1778 = vpack.c.b16 %v1769, %v1768
    %v1779 = vpack.c.b16 %v1771, %v1770
    %1788 = vmatprep.subr.bf16.mxu0 0
    %1789 = vmatpush1.bf16.msra.mxu0 %v1772
    %1790 = vmatprep.subr.bf16.mxu0 0
    %1791 = vmatpush1.bf16.msra.mxu0 %v1773
    %1792 = vmatprep.subr.bf16.mxu0 0
    %1793 = vmatpush1.bf16.msra.mxu0 %v1774
    %1794 = vmatprep.subr.bf16.mxu0 0
    %1795 = vmatpush1.bf16.msra.mxu0 %v1775
    %1796 = vmatprep.subr.bf16.mxu0 0
    %1797 = vmatpush1.bf16.msra.mxu0 %v1776
    %1798 = vmatprep.subr.bf16.mxu0 0
    %1799 = vmatpush1.bf16.msra.mxu0 %v1777
    %1800 = vmatprep.subr.bf16.mxu0 0
    %1801 = vmatpush1.bf16.msra.mxu0 %v1778
    %1802 = vmatprep.subr.bf16.mxu0 0
    %1803 = vmatpush1.bf16.msra.mxu0 %v1779
    %1804 = vmatprep.subr.bf16.mxu0 0
    %1805 = vmatpush1.bf16.msra.mxu0 0
    %1806 = vmatprep.subr.bf16.mxu0 0
    %1807 = vmatpush1.bf16.msra.mxu0 0
    %1808 = vmatprep.subr.bf16.mxu0 0
    %1809 = vmatpush1.bf16.msra.mxu0 0
    %1810 = vmatprep.subr.bf16.mxu0 0
    %1811 = vmatpush1.bf16.msra.mxu0 0
    %1812 = vmatprep.subr.bf16.mxu0 0
    %1813 = vmatpush1.bf16.msra.mxu0 0
    %1814 = vmatprep.subr.bf16.mxu0 0
    %1815 = vmatpush1.bf16.msra.mxu0 0
    %1816 = vmatprep.subr.bf16.mxu0 0
    %1817 = vmatpush1.bf16.msra.mxu0 0
    %1818 = vmatprep.subr.bf16.mxu0 0
    %1819 = vmatpush1.bf16.msra.mxu0 0
    %1820 = vmatprep.mubr.bf16.mxu0 0
    %1821 = vmatmul.mubr.bf16.gmra.mrb[0].mxu0 %v1723
    %v1822 = vpop.f32.mrb[0].mxu0
    %v1823 = vadd.f32 0.0, %v1822
    %v1824 = vpop.f32.mrb[0].mxu0
    %v1825 = vpop.f32.mrb[0].mxu0
    %v1826 = vpop.f32.mrb[0].mxu0
    %1827 = vdwg.mxu0
    %v1844 = vunpack.c.l.b16 %v1707
    %v1845 = vunpack.c.l.b16 %v1708
    %v1846 = vunpack.c.l.b16 %v1709
    %v1847 = vunpack.c.l.b16 %v1710
    %v1848 = vunpack.c.l.b16 %v1711
    %v1849 = vunpack.c.l.b16 %v1712
    %v1850 = vunpack.c.l.b16 %v1713
    %v1851 = vunpack.c.l.b16 %v1714
    %v1852 = vunpack.c.l.b16 %v1715
    %v1853 = vunpack.c.l.b16 %v1716
    %v1854 = vunpack.c.l.b16 %v1717
    %v1855 = vunpack.c.l.b16 %v1718
    %v1856 = vunpack.c.l.b16 %v1719
    %v1857 = vunpack.c.l.b16 %v1720
    %v1858 = vunpack.c.l.b16 %v1721
    %v1859 = vunpack.c.l.b16 %v1722
    %v1860 = vpack.c.b16 %v1845, %v1844
    %v1861 = vpack.c.b16 %v1847, %v1846
    %v1862 = vpack.c.b16 %v1849, %v1848
    %v1863 = vpack.c.b16 %v1851, %v1850
    %v1864 = vpack.c.b16 %v1853, %v1852
    %v1865 = vpack.c.b16 %v1855, %v1854
    %v1866 = vpack.c.b16 %v1857, %v1856
    %v1867 = vpack.c.b16 %v1859, %v1858
    %1876 = vmatprep.subr.bf16.mxu0 0
    %1877 = vmatpush1.bf16.msra.mxu0 %v1860
    %1878 = vmatprep.subr.bf16.mxu0 0
    %1879 = vmatpush1.bf16.msra.mxu0 %v1861
    %1880 = vmatprep.subr.bf16.mxu0 0
    %1881 = vmatpush1.bf16.msra.mxu0 %v1862
    %1882 = vmatprep.subr.bf16.mxu0 0
    %1883 = vmatpush1.bf16.msra.mxu0 %v1863
    %1884 = vmatprep.subr.bf16.mxu0 0
    %1885 = vmatpush1.bf16.msra.mxu0 %v1864
    %1886 = vmatprep.subr.bf16.mxu0 0
    %1887 = vmatpush1.bf16.msra.mxu0 %v1865
    %1888 = vmatprep.subr.bf16.mxu0 0
    %1889 = vmatpush1.bf16.msra.mxu0 %v1866
    %1890 = vmatprep.subr.bf16.mxu0 0
    %1891 = vmatpush1.bf16.msra.mxu0 %v1867
    %1892 = vmatprep.subr.bf16.mxu0 0
    %1893 = vmatpush1.bf16.msra.mxu0 0
    %1894 = vmatprep.subr.bf16.mxu0 0
    %1895 = vmatpush1.bf16.msra.mxu0 0
    %1896 = vmatprep.subr.bf16.mxu0 0
    %1897 = vmatpush1.bf16.msra.mxu0 0
    %1898 = vmatprep.subr.bf16.mxu0 0
    %1899 = vmatpush1.bf16.msra.mxu0 0
    %1900 = vmatprep.subr.bf16.mxu0 0
    %1901 = vmatpush1.bf16.msra.mxu0 0
    %1902 = vmatprep.subr.bf16.mxu0 0
    %1903 = vmatpush1.bf16.msra.mxu0 0
    %1904 = vmatprep.subr.bf16.mxu0 0
    %1905 = vmatpush1.bf16.msra.mxu0 0
    %1906 = vmatprep.subr.bf16.mxu0 0
    %1907 = vmatpush1.bf16.msra.mxu0 0
    %1908 = vmatprep.mubr.bf16.mxu0 0
    %1909 = vmatmul.mubr.bf16.gmra.mrb[0].mxu0 %v1706
    %v1910 = vpop.f32.mrb[0].mxu0
    %v1911 = vadd.f32 %v1823, %v1910
    %v1912 = vpop.f32.mrb[0].mxu0
    %v1913 = vpop.f32.mrb[0].mxu0
    %v1914 = vpop.f32.mrb[0].mxu0
    %1915 = vdwg.mxu0
    %v1916 = vld [vmem:[%s10] sm:$0x1]
    %v1918 = vlaneseq
    %v1919 = vshrl.u32 %v1918, 7
    %v1920 = vsub.s32 0, %v1919
    %v1921 = vrot.slane %v1916, %v1920
    %v1923 = vadd.f32 %v1911, %v1921
    %1924 = vst [vmem:[#allocation16] sm:$0xff] %v1923
    // Predicated region
    $region54: #{tpu_custom_call.1} parent=1 // pred_check
      _
    $region55: #{tpu_custom_call.1} parent=1 // pred_check_branch
      %1926 = sbr.rel (0) target = $region57
    $region56: #{tpu_custom_call.1} parent=1 // pred_region
      %s1928 = ssub.s32 128, 128
      %1929 = vsyncadd [#allocation10], %s1928
      %s1931 = sshll.u32 [#allocation16], 4
      %s1932 = int_to_ptr.vmem [resolvable:$true] %s1931
      %1934 = dma.vmem_to_hbm [thread:$0]  %s1932, 128, %s11, [#allocation10]
    $region57: #{tpu_custom_call.1} parent=1 // pred_fallthru
      _
    // Predicated region
    $region58: #{tpu_custom_call.1} parent=1 // pred_check
      _
    $region59: #{tpu_custom_call.1} parent=1 // pred_check_branch
      %1936 = sbr.rel (0) target = $region61
    $region60: #{tpu_custom_call.1} parent=1 // pred_region
      %1937 = dma.done [#allocation10], 128
    $region61: #{tpu_custom_call.1} parent=1 // pred_fallthru
      _
    %1938 = vsyncpa [#allocation9], 1
    %1939 = vsyncpa [#allocation12], 1
    %1940 = vsyncpa [#allocation15], 1
    %1941 = vsyncpa [#allocation10], 1
  %1942 = vsyncmov [#allocation4]
  %s1943 = vpop.sfrf %1942
  %p1944 = scmp.eq.s32.totalorder %s1943, 0
  %p1945 = pneg %p1944
  %1947 = shalt.err (%p1945)
  %s1948 = scalar_lea.sflag [#allocation4], 1
  %1949 = vsyncmov %s1948
  %s1950 = vpop.sfrf %1949
  %p1951 = scmp.eq.s32.totalorder %s1950, 0
  %p1952 = pneg %p1951
  %1954 = shalt.err (%p1952)
  %s1955 = scalar_lea.sflag [#allocation4], 2
  %1956 = vsyncmov %s1955
  %s1957 = vpop.sfrf %1956
  %p1958 = scmp.eq.s32.totalorder %s1957, 0
  %p1959 = pneg %p1958
  %1961 = shalt.err (%p1959)
  %s1962 = scalar_lea.sflag [#allocation4], 3
  %1963 = vsyncmov %s1962
  %s1964 = vpop.sfrf %1963
  %p1965 = scmp.eq.s32.totalorder %s1964, 0
  %p1966 = pneg %p1965
  %1968 = shalt.err (%p1966)
  %s1969 = scalar_lea.sflag [#allocation4], 4
  %1970 = vsyncmov %s1969
  %s1971 = vpop.sfrf %1970
  %p1972 = scmp.eq.s32.totalorder %s1971, 0
  %p1973 = pneg %p1972
  %1975 = shalt.err (%p1973)
  %s1976 = scalar_lea.sflag [#allocation4], 5
  %1977 = vsyncmov %s1976
  %s1978 = vpop.sfrf %1977
  %p1979 = scmp.eq.s32.totalorder %s1978, 0
  %p1980 = pneg %p1979
  %1982 = shalt.err (%p1980)
  %s1983 = scalar_lea.sflag [#allocation4], 6
  %1984 = vsyncmov %s1983
  %s1985 = vpop.sfrf %1984
  %p1986 = scmp.eq.s32.totalorder %s1985, 0
  %p1987 = pneg %p1986
  %1989 = shalt.err (%p1987)
  %s1990 = scalar_lea.sflag [#allocation4], 7
  %1991 = vsyncmov %s1990
  %s1992 = vpop.sfrf %1991
  %p1993 = scmp.eq.s32.totalorder %s1992, 0
  %p1994 = pneg %p1993
  %1996 = shalt.err (%p1994)
  %s1997 = scalar_lea.sflag [#allocation4], 8
  %1998 = vsyncmov %s1997
  %s1999 = vpop.sfrf %1998
  %p2000 = scmp.eq.s32.totalorder %s1999, 0
  %p2001 = pneg %p2000
  %2003 = shalt.err (%p2001)
  %s2004 = scalar_lea.sflag [#allocation4], 9
  %2005 = vsyncmov %s2004
  %s2006 = vpop.sfrf %2005
  %p2007 = scmp.eq.s32.totalorder %s2006, 0
  %p2008 = pneg %p2007
  %2010 = shalt.err (%p2008)
  %s2011 = scalar_lea.sflag [#allocation4], 10
  %2012 = vsyncmov %s2011
  %s2013 = vpop.sfrf %2012
  %p2014 = scmp.eq.s32.totalorder %s2013, 0
  %p2015 = pneg %p2014
  %2017 = shalt.err (%p2015)
  %s2018 = scalar_lea.sflag [#allocation4], 11
  %2019 = vsyncmov %s2018
  %s2020 = vpop.sfrf %2019
  %p2021 = scmp.eq.s32.totalorder %s2020, 0
  %p2022 = pneg %p2021
  %2024 = shalt.err (%p2022)
  %s2025 = scalar_lea.sflag [#allocation4], 12
  %2026 = vsyncmov %s2025
  %s2027 = vpop.sfrf %2026
  %p2028 = scmp.eq.s32.totalorder %s2027, 0
  %p2029 = pneg %p2028
  %2031 = shalt.err (%p2029)
  %s2032 = scalar_lea.sflag [#allocation4], 13
  %2033 = vsyncmov %s2032
  %s2034 = vpop.sfrf %2033
  %p2035 = scmp.eq.s32.totalorder %s2034, 0
  %p2036 = pneg %p2035
  %2038 = shalt.err (%p2036)
  %s2039 = scalar_lea.sflag [#allocation4], 14
  %2040 = vsyncmov %s2039
  %s2041 = vpop.sfrf %2040
  %p2042 = scmp.eq.s32.totalorder %s2041, 0
  %p2043 = pneg %p2042
  %2045 = shalt.err (%p2043)
  %s2046 = scalar_lea.sflag [#allocation4], 15
  %2047 = vsyncmov %s2046
  %s2048 = vpop.sfrf %2047
  %p2049 = scmp.eq.s32.totalorder %s2048, 0
  %p2050 = pneg %p2049
  %2052 = shalt.err (%p2050)
  %s2053 = scalar_lea.sflag [#allocation4], 16
  %2054 = vsyncmov %s2053
  %s2055 = vpop.sfrf %2054
  %p2056 = scmp.eq.s32.totalorder %s2055, 0
  %p2057 = pneg %p2056
  %2059 = shalt.err (%p2057)
  %s2060 = scalar_lea.sflag [#allocation4], 17
  %2061 = vsyncmov %s2060
  %s2062 = vpop.sfrf %2061
  %p2063 = scmp.eq.s32.totalorder %s2062, 0
  %p2064 = pneg %p2063
  %2066 = shalt.err (%p2064)
  %s2067 = scalar_lea.sflag [#allocation4], 18
  %2068 = vsyncmov %s2067
  %s2069 = vpop.sfrf %2068
  %p2070 = scmp.eq.s32.totalorder %s2069, 0
  %p2071 = pneg %p2070
  %2073 = shalt.err (%p2071)
  %s2074 = scalar_lea.sflag [#allocation4], 19
  %2075 = vsyncmov %s2074
  %s2076 = vpop.sfrf %2075
  %p2077 = scmp.eq.s32.totalorder %s2076, 0
  %p2078 = pneg %p2077
  %2080 = shalt.err (%p2078)
  %s2081 = scalar_lea.sflag [#allocation4], 20
  %2082 = vsyncmov %s2081
  %s2083 = vpop.sfrf %2082
  %p2084 = scmp.eq.s32.totalorder %s2083, 0
  %p2085 = pneg %p2084
  %2087 = shalt.err (%p2085)
  %s2088 = scalar_lea.sflag [#allocation4], 21
  %2089 = vsyncmov %s2088
  %s2090 = vpop.sfrf %2089
  %p2091 = scmp.eq.s32.totalorder %s2090, 0
  %p2092 = pneg %p2091
  %2094 = shalt.err (%p2092)
  %s2095 = scalar_lea.sflag [#allocation4], 22
  %2096 = vsyncmov %s2095
  %s2097 = vpop.sfrf %2096
  %p2098 = scmp.eq.s32.totalorder %s2097, 0
  %p2099 = pneg %p2098
  %2101 = shalt.err (%p2099)
  %s2102 = scalar_lea.sflag [#allocation4], 23
  %2103 = vsyncmov %s2102
  %s2104 = vpop.sfrf %2103
  %p2105 = scmp.eq.s32.totalorder %s2104, 0
  %p2106 = pneg %p2105
  %2108 = shalt.err (%p2106)
  %s2109 = scalar_lea.sflag [#allocation4], 24
  %2110 = vsyncmov %s2109
  %s2111 = vpop.sfrf %2110
  %p2112 = scmp.eq.s32.totalorder %s2111, 0
  %p2113 = pneg %p2112
  %2115 = shalt.err (%p2113)
  %s2116 = scalar_lea.sflag [#allocation4], 25
  %2117 = vsyncmov %s2116
  %s2118 = vpop.sfrf %2117
  %p2119 = scmp.eq.s32.totalorder %s2118, 0
  %p2120 = pneg %p2119
  %2122 = shalt.err (%p2120)
  %s2123 = scalar_lea.sflag [#allocation4], 26
  %2124 = vsyncmov %s2123
  %s2125 = vpop.sfrf %2124
  %p2126 = scmp.eq.s32.totalorder %s2125, 0
  %p2127 = pneg %p2126
  %2129 = shalt.err (%p2127)
  %s2130 = scalar_lea.sflag [#allocation4], 27
  %2131 = vsyncmov %s2130
  %s2132 = vpop.sfrf %2131
  %p2133 = scmp.eq.s32.totalorder %s2132, 0
  %p2134 = pneg %p2133
  %2136 = shalt.err (%p2134)
  %s2137 = scalar_lea.sflag [#allocation4], 28
  %2138 = vsyncmov %s2137
  %s2139 = vpop.sfrf %2138
  %p2140 = scmp.eq.s32.totalorder %s2139, 0
  %p2141 = pneg %p2140
  %2143 = shalt.err (%p2141)
  %s2144 = scalar_lea.sflag [#allocation4], 29
  %2145 = vsyncmov %s2144
  %s2146 = vpop.sfrf %2145
  %p2147 = scmp.eq.s32.totalorder %s2146, 0
  %p2148 = pneg %p2147
  %2150 = shalt.err (%p2148)
  %s2151 = scalar_lea.sflag [#allocation4], 30
  %2152 = vsyncmov %s2151
  %s2153 = vpop.sfrf %2152
  %p2154 = scmp.eq.s32.totalorder %s2153, 0
  %p2155 = pneg %p2154
  %2157 = shalt.err (%p2155)
  %s2158 = scalar_lea.sflag [#allocation4], 31
  %2159 = vsyncmov %s2158
  %s2160 = vpop.sfrf %2159
  %p2161 = scmp.eq.s32.totalorder %s2160, 0
  %p2162 = pneg %p2161
  %2164 = shalt.err (%p2162)

</llo_original>
